<compile_context>
chip_gen: v7x
topology: tpu7x:2x2x1
jax: 0.10.0
libtpu: 0.0.40
codegen_flags: <defaults>
</compile_context>

<pallas_src>
import numpy as np
from functools import partial

import jax
import jax.numpy as jnp
from jax import lax
from jax.experimental import pallas as pl
from jax.experimental.pallas import tpu as pltpu

LANES = 128  # vreg lane width: pad conv1-channel / class dims to 128


def make_simple_cnn_kernel(N, H, W, K, C1, C2, Cpad):
    Ho, Wo = H // 2, W // 2
    Ho2, Wo2 = Ho // 2, Wo // 2
    P = Ho2 * Wo2
    pad = (K - 1) // 2
    KKC1 = K * K * C1
    KKC1p = ((KKC1 + LANES - 1) // LANES) * LANES

    def kernel(p1_ref, w1_ref, b1_ref, w2_ref, b2_ref,
               wf1_ref, bf1_ref, wf2_ref, bf2_ref,
               o_ref,
               s1_ref, s2_ref, x2p_ref, im2_ref, s3_ref, s4_ref, flat_ref):
        # ---- conv1: one lane-dense im2col GEMM.  Raw MXU output goes straight into
        # the pool-1 scratch; bias+ReLU applied per-element on the two H-pool reads ----
        s1_ref[...] = jnp.dot(p1_ref[...], w1_ref[...],
                              preferred_element_type=jnp.float32
                              ).reshape(N * Ho, 2, W, Cpad)
        b1 = b1_ref[...]
        yh = (jnp.maximum(s1_ref[:, 0, :, :] + b1, 0.0) +
              jnp.maximum(s1_ref[:, 1, :, :] + b1, 0.0))          # (N*Ho, W, Cpad)
        s2_ref[...] = yh.reshape(N * Ho * W, Cpad)
        # W direction: pairs are adjacent rows -> stride-2 sublane loads.
        p1 = 0.25 * (s2_ref[pl.ds(0, N * Ho * Wo, 2), :] +
                     s2_ref[pl.ds(1, N * Ho * Wo, 2), :])          # (N*Ho*Wo, Cpad)

        # ---- stage pool1 output for conv2: zero only the halo ring, write interior ----
        zh = jnp.zeros((N, pad, Wo + 2 * pad, Cpad), jnp.float32)
        x2p_ref[:, :pad, :, :] = zh
        x2p_ref[:, pad + Ho:, :, :] = zh
        zw = jnp.zeros((N, Ho, pad, Cpad), jnp.float32)
        x2p_ref[:, pad:pad + Ho, :pad, :] = zw
        x2p_ref[:, pad:pad + Ho, pad + Wo:, :] = zw
        x2p_ref[:, pad:pad + Ho, pad:pad + Wo, :] = p1.reshape(N, Ho, Wo, Cpad)

        # ---- conv2: dense in-kernel im2col (K*K*C1 = 800 real -> 896) and ONE GEMM ----
        if KKC1p > KKC1:
            im2_ref[:, KKC1:] = jnp.zeros((N * Ho * Wo, KKC1p - KKC1), jnp.float32)
        for kh in range(K):
            for kw in range(K):
                t = kh * K + kw
                tap = x2p_ref[:, kh:kh + Ho, kw:kw + Wo, :C1]      # (N, Ho, Wo, C1)
                im2_ref[:, t * C1:(t + 1) * C1] = tap.reshape(N * Ho * Wo, C1)
        s3_ref[...] = jnp.dot(im2_ref[...], w2_ref[...],
                              preferred_element_type=jnp.float32
                              ).reshape(N * Ho2, 2, Wo, C2)
        # ---- pool2: same fused bias+ReLU + VPU 2x2 average ----
        b2 = b2_ref[...]
        yh2 = (jnp.maximum(s3_ref[:, 0, :, :] + b2, 0.0) +
               jnp.maximum(s3_ref[:, 1, :, :] + b2, 0.0))          # (N*Ho2, Wo, C2)
        s4_ref[...] = yh2.reshape(N * Ho2 * Wo, C2)
        p2 = 0.25 * (s4_ref[pl.ds(0, N * Ho2 * Wo2, 2), :] +
                     s4_ref[pl.ds(1, N * Ho2 * Wo2, 2), :])        # (N*P, C2)

        # ---- flatten to (N, P*C2); torch's NCHW flatten permutation is folded into
        # the packed fc1 weights, so NHWC order here is exact ----
        p2r = p2.reshape(N, P, C2)
        for p in range(P):
            flat_ref[:, p * C2:(p + 1) * C2] = p2r[:, p, :]

        # ---- fc1 ('none') as ONE dense GEMM, then fc2 ('none'); classes lane-padded ----
        h1 = jnp.dot(flat_ref[...], wf1_ref[...],
                     preferred_element_type=jnp.float32) + bf1_ref[...]
        out = jnp.dot(h1, wf2_ref[...], preferred_element_type=jnp.float32)
        o_ref[...] = (out + bf2_ref[...]).astype(o_ref.dtype)

    return kernel


def _im2col(x_nhwc, K):
    N, H, W, Cin = x_nhwc.shape
    pad = (K - 1) // 2
    xp = jnp.pad(x_nhwc, ((0, 0), (pad, pad), (pad, pad), (0, 0)))
    cols = [xp[:, kh:kh + H, kw:kw + W, :]
            for kh in range(K) for kw in range(K)]
    return jnp.concatenate(cols, axis=-1).reshape(N * H * W, K * K * Cin)


def pack_params(params):
    """Pack / pad weights ONCE, outside the jitted forward (hoisted per review)."""
    (cw1, cb1, cw2, cb2, fw1, fb1, fw2, fb2) = params
    K, _, Cin, C1 = cw1.shape
    C2 = cw2.shape[3]
    F = fw1.shape[1]
    NC = fw2.shape[1]
    KKCin = K * K * Cin
    assert KKCin <= LANES and C1 <= LANES and NC <= LANES
    KKC1 = K * K * C1
    KKC1p = ((KKC1 + LANES - 1) // LANES) * LANES
    P = fw1.shape[0] // C2

    w1p = jnp.pad(cw1.reshape(KKCin, C1),
                  ((0, LANES - KKCin), (0, LANES - C1)))           # (128, 128)
    b1p = jnp.pad(cb1, (0, LANES - C1))[None, :]                   # (1, 128)
    # conv2 weights packed densely for the single 896-deep im2col GEMM (no C1 padding).
    w2p = jnp.pad(cw2.reshape(KKC1, C2), ((0, KKC1p - KKC1), (0, 0)))   # (896, 64)
    b2p = cb2[None, :]                                             # (1, 64)
    # fc1: torch NCHW flatten (flat = c*P + p) permuted to the kernel's (p, c) order.
    wf1p = jnp.transpose(fw1.reshape(C2, P, F), (1, 0, 2)).reshape(P * C2, F)  # (1024, 128)
    bf1p = fb1[None, :]                                            # (1, 128)
    wf2p = jnp.pad(fw2, ((0, 0), (0, LANES - NC)))                 # (128, 128)
    bf2p = jnp.pad(fb2, (0, LANES - NC))[None, :]                  # (1, 128)
    return (w1p, b1p, w2p, b2p, wf1p, bf1p, wf2p, bf2p)


def simple_cnn_forward(x_nchw, packed, *, K, C1, C2, num_classes):
    (w1p, b1p, w2p, b2p, wf1p, bf1p, wf2p, bf2p) = packed
    N, Cin, H, W = x_nchw.shape
    assert H % 4 == 0 and W % 4 == 0 and K % 2 == 1
    Ho, Wo = H // 2, W // 2
    Ho2, Wo2 = Ho // 2, Wo // 2
    P = Ho2 * Wo2
    pad = (K - 1) // 2
    KKC1 = K * K * C1
    KKC1p = ((KKC1 + LANES - 1) // LANES) * LANES

    # conv1 im2col patches (x-dependent, so it stays inside the jitted forward).
    # TODO(synk): for v5e, build these taps inside the kernel (as done for conv2) to
    # avoid the ~256 KiB HBM intermediate; the raw input itself is only a few KiB.
    x_nhwc = jnp.transpose(x_nchw, (0, 2, 3, 1)).astype(jnp.float32)
    patches = _im2col(x_nhwc, K)                                   # (N*H*W, K*K*Cin)
    patches = jnp.pad(patches, ((0, 0), (0, LANES - patches.shape[1])))  # (N*H*W, 128)

    kernel = make_simple_cnn_kernel(N, H, W, K, C1, C2, LANES)

    flops = 2 * (N * H * W * LANES * LANES          # conv1 GEMM
                 + N * Ho * Wo * KKC1p * C2         # conv2 GEMM
                 + N * P * C2 * wf1p.shape[1]       # fc1 GEMM
                 + N * wf1p.shape[1] * LANES)       # fc2 GEMM
    operands = (patches, w1p, b1p, w2p, b2p, wf1p, bf1p, wf2p, bf2p)
    bytes_accessed = sum(int(np.prod(a.shape)) * 4 for a in operands) + N * LANES * 4

    out = pl.pallas_call(
        kernel,
        out_shape=jax.ShapeDtypeStruct((N, LANES), jnp.float32),
        scratch_shapes=[
            pltpu.VMEM((N * Ho, 2, W, LANES), jnp.float32),                   # pool1 H
            pltpu.VMEM((N * Ho * W, LANES), jnp.float32),                     # pool1 W
            pltpu.VMEM((N, Ho + 2 * pad, Wo + 2 * pad, LANES), jnp.float32),  # conv2 in
            pltpu.VMEM((N * Ho * Wo, KKC1p), jnp.float32),                    # conv2 im2col
            pltpu.VMEM((N * Ho2, 2, Wo, C2), jnp.float32),                    # pool2 H
            pltpu.VMEM((N * Ho2 * Wo, C2), jnp.float32),                      # pool2 W
            pltpu.VMEM((N, P * C2), jnp.float32),                             # fc1 input
        ],
        cost_estimate=pl.CostEstimate(flops=flops, transcendentals=0,
                                      bytes_accessed=bytes_accessed),
    )(*operands)
    # TODO(synk): once N grows past toy size, add a leading "parallel" batch grid axis
    # (weight index_maps constant so weights stay VMEM-resident) to use the 2nd
    # TensorCore on v7x and keep per-step scratch within its 64 MiB (32 MiB scoped) VMEM.
    return out[:, :num_classes]


def reference_forward(x_nchw, params):
    """Pure-JAX reference with identical semantics, for the correctness check."""
    (cw1, cb1, cw2, cb2, fw1, fb1, fw2, fb2) = params
    N = x_nchw.shape[0]
    x = jnp.transpose(x_nchw, (0, 2, 3, 1))
    dn = ("NHWC", "HWIO", "NHWC")

    def block(y, w, b):
        y = lax.conv_general_dilated(y, w, (1, 1), "SAME",
                                     dimension_numbers=dn) + b
        y = jnp.maximum(y, 0.0)
        n, h, wd, c = y.shape
        return y.reshape(n, h // 2, 2, wd // 2, 2, c).mean(axis=(2, 4))

    x = block(x, cw1, cb1)
    x = block(x, cw2, cb2)
    flat = jnp.transpose(x, (0, 3, 1, 2)).reshape(N, -1)
    h = flat @ fw1 + fb1
    return h @ fw2 + fb2


def init_params(key, c_dim, inp_size, num_classes):
    # Deterministic synthetic init (shapes per SimpleCNN.__init__); not a checkpoint.
    ks = jax.random.split(key, 8)
    cw1 = jax.random.uniform(ks[0], (5, 5, c_dim, 32), jnp.float32, -0.1, 0.1)
    cb1 = jax.random.uniform(ks[1], (32,), jnp.float32, -0.1, 0.1)
    cw2 = jax.random.uniform(ks[2], (5, 5, 32, 64), jnp.float32, -0.05, 0.05)
    cb2 = jax.random.uniform(ks[3], (64,), jnp.float32, -0.05, 0.05)
    flat_dim = (inp_size // 4) * (inp_size // 4) * 64
    fw1 = jax.random.uniform(ks[4], (flat_dim, 128), jnp.float32, -0.03, 0.03)
    fb1 = jax.random.uniform(ks[5], (128,), jnp.float32, -0.03, 0.03)
    fw2 = jax.random.uniform(ks[6], (128, num_classes), jnp.float32, -0.09, 0.09)
    fb2 = jax.random.uniform(ks[7], (num_classes,), jnp.float32, -0.09, 0.09)
    return (cw1, cb1, cw2, cb2, fw1, fb1, fw2, fb2)


if __name__ == "__main__":
    N, C, HW = 2, 3, 16            # small shapes: batch=2, c_dim=3, inp_size=16
    num_classes = 20
    key = jax.random.PRNGKey(0)
    kx, kp = jax.random.split(key)
    x = jax.random.normal(kx, (N, C, HW, HW), jnp.float32)   # NCHW, like torch
    params = init_params(kp, C, HW, num_classes)

    # Weight packing hoisted out of the jitted forward path (done once).
    packed = jax.block_until_ready(pack_params(params))

    forward = jax.jit(partial(simple_cnn_forward,
                              K=5, C1=32, C2=64, num_classes=num_classes))
    out = jax.block_until_ready(forward(x, packed))
    ref = jax.block_until_ready(reference_forward(x, params))

    assert out.shape == (N, num_classes)
    np.testing.assert_allclose(np.asarray(out), np.asarray(ref),
                               rtol=2e-4, atol=2e-4)
    print("KERNEL_OK")
</pallas_src>

<mosaic_0001>
module attributes {stable_mosaic.version = 11 : i64} {
  func.func @kernel(%arg0: memref<512x128xf32, #tpu.memory_space<vmem>>, %arg1: memref<128x128xf32, #tpu.memory_space<vmem>>, %arg2: memref<1x128xf32, #tpu.memory_space<vmem>>, %arg3: memref<896x64xf32, #tpu.memory_space<vmem>>, %arg4: memref<1x64xf32, #tpu.memory_space<vmem>>, %arg5: memref<1024x128xf32, #tpu.memory_space<vmem>>, %arg6: memref<1x128xf32, #tpu.memory_space<vmem>>, %arg7: memref<128x128xf32, #tpu.memory_space<vmem>>, %arg8: memref<1x128xf32, #tpu.memory_space<vmem>>, %arg9: memref<2x128xf32, #tpu.memory_space<vmem>>, %arg10: memref<16x2x16x128xf32, #tpu.memory_space<vmem>>, %arg11: memref<256x128xf32, #tpu.memory_space<vmem>>, %arg12: memref<2x12x12x128xf32, #tpu.memory_space<vmem>>, %arg13: memref<128x896xf32, #tpu.memory_space<vmem>>, %arg14: memref<8x2x8x64xf32, #tpu.memory_space<vmem>>, %arg15: memref<64x64xf32, #tpu.memory_space<vmem>>, %arg16: memref<2x1024xf32, #tpu.memory_space<vmem>>) attributes {dimension_semantics = [], scalar_prefetch = 0 : i64, scratch_operands = 7 : i64, tpu.core_type = #tpu.core_type<tc>} {
    %c0 = arith.constant 0 : index
    %c0_0 = arith.constant 0 : index
    %0 = vector.load %arg0[%c0, %c0_0] : memref<512x128xf32, #tpu.memory_space<vmem>>, vector<512x128xf32>
    %c0_1 = arith.constant 0 : index
    %c0_2 = arith.constant 0 : index
    %1 = vector.load %arg1[%c0_1, %c0_2] : memref<128x128xf32, #tpu.memory_space<vmem>>, vector<128x128xf32>
    %cst = arith.constant dense<0.000000e+00> : vector<512x128xf32>
    %2 = tpu.matmul %0, %1, %cst {dimension_numbers = #tpu.dot_dimension_numbers<[1], [0], [0], [1], [0, 0, 1, 1], [], []>} : vector<512x128xf32>, vector<128x128xf32>, vector<512x128xf32> -> vector<512x128xf32>
    %3 = vector.shape_cast %2 : vector<512x128xf32> to vector<16x2x16x128xf32>
    %c0_3 = arith.constant 0 : index
    %c0_4 = arith.constant 0 : index
    %c0_5 = arith.constant 0 : index
    %c0_6 = arith.constant 0 : index
    %4 = vector.load %arg10[%c0_3, %c0_4, %c0_5, %c0_6] : memref<16x2x16x128xf32, #tpu.memory_space<vmem>>, vector<16x2x16x128xf32>
    tpu.vector_store %arg10[%c0_3, %c0_4, %c0_5, %c0_6], %3 {strides = array<i32>} : memref<16x2x16x128xf32, #tpu.memory_space<vmem>>, vector<16x2x16x128xf32>,
    %c0_7 = arith.constant 0 : index
    %c0_8 = arith.constant 0 : index
    %5 = vector.load %arg2[%c0_7, %c0_8] : memref<1x128xf32, #tpu.memory_space<vmem>>, vector<1x128xf32>
    %c0_9 = arith.constant 0 : index
    %c0_10 = arith.constant 0 : index
    %c0_11 = arith.constant 0 : index
    %c0_12 = arith.constant 0 : index
    %6 = vector.load %arg10[%c0_9, %c0_10, %c0_11, %c0_12] : memref<16x2x16x128xf32, #tpu.memory_space<vmem>>, vector<16x1x16x128xf32>
    %7 = vector.shape_cast %6 : vector<16x1x16x128xf32> to vector<16x16x128xf32>
    %8 = vector.shape_cast %5 : vector<1x128xf32> to vector<1x1x128xf32>
    %9 = vector.broadcast %8 : vector<1x1x128xf32> to vector<16x16x128xf32>
    %10 = arith.addf %7, %9 : vector<16x16x128xf32>
    %cst_13 = arith.constant 0.000000e+00 : f32
    %11 = vector.broadcast %cst_13 : f32 to vector<16x16x128xf32>
    %12 = arith.maximumf %10, %11 : vector<16x16x128xf32>
    %c0_14 = arith.constant 0 : index
    %c1 = arith.constant 1 : index
    %c0_15 = arith.constant 0 : index
    %c0_16 = arith.constant 0 : index
    %13 = vector.load %arg10[%c0_14, %c1, %c0_15, %c0_16] : memref<16x2x16x128xf32, #tpu.memory_space<vmem>>, vector<16x1x16x128xf32>
    %14 = vector.shape_cast %13 : vector<16x1x16x128xf32> to vector<16x16x128xf32>
    %15 = vector.shape_cast %5 : vector<1x128xf32> to vector<1x1x128xf32>
    %16 = vector.broadcast %15 : vector<1x1x128xf32> to vector<16x16x128xf32>
    %17 = arith.addf %14, %16 : vector<16x16x128xf32>
    %cst_17 = arith.constant 0.000000e+00 : f32
    %18 = vector.broadcast %cst_17 : f32 to vector<16x16x128xf32>
    %19 = arith.maximumf %17, %18 : vector<16x16x128xf32>
    %20 = arith.addf %12, %19 : vector<16x16x128xf32>
    %21 = vector.shape_cast %20 : vector<16x16x128xf32> to vector<256x128xf32>
    %c0_18 = arith.constant 0 : index
    %c0_19 = arith.constant 0 : index
    %22 = vector.load %arg11[%c0_18, %c0_19] : memref<256x128xf32, #tpu.memory_space<vmem>>, vector<256x128xf32>
    tpu.vector_store %arg11[%c0_18, %c0_19], %21 {strides = array<i32>} : memref<256x128xf32, #tpu.memory_space<vmem>>, vector<256x128xf32>,
    %c0_20 = arith.constant 0 : index
    %c0_21 = arith.constant 0 : index
    %23 = tpu.strided_load %arg11[%c0_20, %c0_21] {strides = array<i32: 2, 1>} : memref<256x128xf32, #tpu.memory_space<vmem>>, vector<128x128xf32>
    %c1_22 = arith.constant 1 : index
    %c0_23 = arith.constant 0 : index
    %24 = tpu.strided_load %arg11[%c1_22, %c0_23] {strides = array<i32: 2, 1>} : memref<256x128xf32, #tpu.memory_space<vmem>>, vector<128x128xf32>
    %25 = arith.addf %23, %24 : vector<128x128xf32>
    %cst_24 = arith.constant 2.500000e-01 : f32
    %26 = vector.broadcast %cst_24 : f32 to vector<128x128xf32>
    %27 = arith.mulf %26, %25 : vector<128x128xf32>
    %cst_25 = arith.constant 0.000000e+00 : f32
    %28 = vector.broadcast %cst_25 : f32 to vector<2x2x12x128xf32>
    %c0_26 = arith.constant 0 : index
    %c0_27 = arith.constant 0 : index
    %c0_28 = arith.constant 0 : index
    %c0_29 = arith.constant 0 : index
    %29 = vector.load %arg12[%c0_26, %c0_27, %c0_28, %c0_29] : memref<2x12x12x128xf32, #tpu.memory_space<vmem>>, vector<2x2x12x128xf32>
    tpu.vector_store %arg12[%c0_26, %c0_27, %c0_28, %c0_29], %28 {strides = array<i32>} : memref<2x12x12x128xf32, #tpu.memory_space<vmem>>, vector<2x2x12x128xf32>,
    %c0_30 = arith.constant 0 : index
    %c10 = arith.constant 10 : index
    %c0_31 = arith.constant 0 : index
    %c0_32 = arith.constant 0 : index
    %30 = vector.load %arg12[%c0_30, %c10, %c0_31, %c0_32] : memref<2x12x12x128xf32, #tpu.memory_space<vmem>>, vector<2x2x12x128xf32>
    tpu.vector_store %arg12[%c0_30, %c10, %c0_31, %c0_32], %28 {strides = array<i32>} : memref<2x12x12x128xf32, #tpu.memory_space<vmem>>, vector<2x2x12x128xf32>,
    %cst_33 = arith.constant 0.000000e+00 : f32
    %31 = vector.broadcast %cst_33 : f32 to vector<2x8x2x128xf32>
    %c0_34 = arith.constant 0 : index
    %c2 = arith.constant 2 : index
    %c0_35 = arith.constant 0 : index
    %c0_36 = arith.constant 0 : index
    %32 = vector.load %arg12[%c0_34, %c2, %c0_35, %c0_36] : memref<2x12x12x128xf32, #tpu.memory_space<vmem>>, vector<2x8x2x128xf32>
    tpu.vector_store %arg12[%c0_34, %c2, %c0_35, %c0_36], %31 {strides = array<i32>} : memref<2x12x12x128xf32, #tpu.memory_space<vmem>>, vector<2x8x2x128xf32>,
    %c0_37 = arith.constant 0 : index
    %c2_38 = arith.constant 2 : index
    %c10_39 = arith.constant 10 : index
    %c0_40 = arith.constant 0 : index
    %33 = vector.load %arg12[%c0_37, %c2_38, %c10_39, %c0_40] : memref<2x12x12x128xf32, #tpu.memory_space<vmem>>, vector<2x8x2x128xf32>
    tpu.vector_store %arg12[%c0_37, %c2_38, %c10_39, %c0_40], %31 {strides = array<i32>} : memref<2x12x12x128xf32, #tpu.memory_space<vmem>>, vector<2x8x2x128xf32>,
    %34 = vector.shape_cast %27 : vector<128x128xf32> to vector<2x8x8x128xf32>
    %c0_41 = arith.constant 0 : index
    %c2_42 = arith.constant 2 : index
    %c2_43 = arith.constant 2 : index
    %c0_44 = arith.constant 0 : index
    %35 = vector.load %arg12[%c0_41, %c2_42, %c2_43, %c0_44] : memref<2x12x12x128xf32, #tpu.memory_space<vmem>>, vector<2x8x8x128xf32>
    tpu.vector_store %arg12[%c0_41, %c2_42, %c2_43, %c0_44], %34 {strides = array<i32>} : memref<2x12x12x128xf32, #tpu.memory_space<vmem>>, vector<2x8x8x128xf32>,
    %cst_45 = arith.constant 0.000000e+00 : f32
    %36 = vector.broadcast %cst_45 : f32 to vector<128x96xf32>
    %c0_46 = arith.constant 0 : index
    %c800 = arith.constant 800 : index
    %37 = vector.load %arg13[%c0_46, %c800] : memref<128x896xf32, #tpu.memory_space<vmem>>, vector<128x96xf32>
    tpu.vector_store %arg13[%c0_46, %c800], %36 {strides = array<i32>} : memref<128x896xf32, #tpu.memory_space<vmem>>, vector<128x96xf32>,
    %c0_47 = arith.constant 0 : index
    %c0_48 = arith.constant 0 : index
    %c0_49 = arith.constant 0 : index
    %c0_50 = arith.constant 0 : index
    %38 = vector.load %arg12[%c0_47, %c0_48, %c0_49, %c0_50] : memref<2x12x12x128xf32, #tpu.memory_space<vmem>>, vector<2x8x8x32xf32>
    %39 = vector.shape_cast %38 : vector<2x8x8x32xf32> to vector<128x32xf32>
    %c0_51 = arith.constant 0 : index
    %c0_52 = arith.constant 0 : index
    %40 = vector.load %arg13[%c0_51, %c0_52] : memref<128x896xf32, #tpu.memory_space<vmem>>, vector<128x32xf32>
    tpu.vector_store %arg13[%c0_51, %c0_52], %39 {strides = array<i32>} : memref<128x896xf32, #tpu.memory_space<vmem>>, vector<128x32xf32>,
    %c0_53 = arith.constant 0 : index
    %c0_54 = arith.constant 0 : index
    %c1_55 = arith.constant 1 : index
    %c0_56 = arith.constant 0 : index
    %41 = vector.load %arg12[%c0_53, %c0_54, %c1_55, %c0_56] : memref<2x12x12x128xf32, #tpu.memory_space<vmem>>, vector<2x8x8x32xf32>
    %42 = vector.shape_cast %41 : vector<2x8x8x32xf32> to vector<128x32xf32>
    %c0_57 = arith.constant 0 : index
    %c32 = arith.constant 32 : index
    %43 = vector.load %arg13[%c0_57, %c32] : memref<128x896xf32, #tpu.memory_space<vmem>>, vector<128x32xf32>
    tpu.vector_store %arg13[%c0_57, %c32], %42 {strides = array<i32>} : memref<128x896xf32, #tpu.memory_space<vmem>>, vector<128x32xf32>,
    %c0_58 = arith.constant 0 : index
    %c0_59 = arith.constant 0 : index
    %c2_60 = arith.constant 2 : index
    %c0_61 = arith.constant 0 : index
    %44 = vector.load %arg12[%c0_58, %c0_59, %c2_60, %c0_61] : memref<2x12x12x128xf32, #tpu.memory_space<vmem>>, vector<2x8x8x32xf32>
    %45 = vector.shape_cast %44 : vector<2x8x8x32xf32> to vector<128x32xf32>
    %c0_62 = arith.constant 0 : index
    %c64 = arith.constant 64 : index
    %46 = vector.load %arg13[%c0_62, %c64] : memref<128x896xf32, #tpu.memory_space<vmem>>, vector<128x32xf32>
    tpu.vector_store %arg13[%c0_62, %c64], %45 {strides = array<i32>} : memref<128x896xf32, #tpu.memory_space<vmem>>, vector<128x32xf32>,
    %c0_63 = arith.constant 0 : index
    %c0_64 = arith.constant 0 : index
    %c3 = arith.constant 3 : index
    %c0_65 = arith.constant 0 : index
    %47 = vector.load %arg12[%c0_63, %c0_64, %c3, %c0_65] : memref<2x12x12x128xf32, #tpu.memory_space<vmem>>, vector<2x8x8x32xf32>
    %48 = vector.shape_cast %47 : vector<2x8x8x32xf32> to vector<128x32xf32>
    %c0_66 = arith.constant 0 : index
    %c96 = arith.constant 96 : index
    %49 = vector.load %arg13[%c0_66, %c96] : memref<128x896xf32, #tpu.memory_space<vmem>>, vector<128x32xf32>
    tpu.vector_store %arg13[%c0_66, %c96], %48 {strides = array<i32>} : memref<128x896xf32, #tpu.memory_space<vmem>>, vector<128x32xf32>,
    %c0_67 = arith.constant 0 : index
    %c0_68 = arith.constant 0 : index
    %c4 = arith.constant 4 : index
    %c0_69 = arith.constant 0 : index
    %50 = vector.load %arg12[%c0_67, %c0_68, %c4, %c0_69] : memref<2x12x12x128xf32, #tpu.memory_space<vmem>>, vector<2x8x8x32xf32>
    %51 = vector.shape_cast %50 : vector<2x8x8x32xf32> to vector<128x32xf32>
    %c0_70 = arith.constant 0 : index
    %c128 = arith.constant 128 : index
    %52 = vector.load %arg13[%c0_70, %c128] : memref<128x896xf32, #tpu.memory_space<vmem>>, vector<128x32xf32>
    tpu.vector_store %arg13[%c0_70, %c128], %51 {strides = array<i32>} : memref<128x896xf32, #tpu.memory_space<vmem>>, vector<128x32xf32>,
    %c0_71 = arith.constant 0 : index
    %c1_72 = arith.constant 1 : index
    %c0_73 = arith.constant 0 : index
    %c0_74 = arith.constant 0 : index
    %53 = vector.load %arg12[%c0_71, %c1_72, %c0_73, %c0_74] : memref<2x12x12x128xf32, #tpu.memory_space<vmem>>, vector<2x8x8x32xf32>
    %54 = vector.shape_cast %53 : vector<2x8x8x32xf32> to vector<128x32xf32>
    %c0_75 = arith.constant 0 : index
    %c160 = arith.constant 160 : index
    %55 = vector.load %arg13[%c0_75, %c160] : memref<128x896xf32, #tpu.memory_space<vmem>>, vector<128x32xf32>
    tpu.vector_store %arg13[%c0_75, %c160], %54 {strides = array<i32>} : memref<128x896xf32, #tpu.memory_space<vmem>>, vector<128x32xf32>,
    %c0_76 = arith.constant 0 : index
    %c1_77 = arith.constant 1 : index
    %c1_78 = arith.constant 1 : index
    %c0_79 = arith.constant 0 : index
    %56 = vector.load %arg12[%c0_76, %c1_77, %c1_78, %c0_79] : memref<2x12x12x128xf32, #tpu.memory_space<vmem>>, vector<2x8x8x32xf32>
    %57 = vector.shape_cast %56 : vector<2x8x8x32xf32> to vector<128x32xf32>
    %c0_80 = arith.constant 0 : index
    %c192 = arith.constant 192 : index
    %58 = vector.load %arg13[%c0_80, %c192] : memref<128x896xf32, #tpu.memory_space<vmem>>, vector<128x32xf32>
    tpu.vector_store %arg13[%c0_80, %c192], %57 {strides = array<i32>} : memref<128x896xf32, #tpu.memory_space<vmem>>, vector<128x32xf32>,
    %c0_81 = arith.constant 0 : index
    %c1_82 = arith.constant 1 : index
    %c2_83 = arith.constant 2 : index
    %c0_84 = arith.constant 0 : index
    %59 = vector.load %arg12[%c0_81, %c1_82, %c2_83, %c0_84] : memref<2x12x12x128xf32, #tpu.memory_space<vmem>>, vector<2x8x8x32xf32>
    %60 = vector.shape_cast %59 : vector<2x8x8x32xf32> to vector<128x32xf32>
    %c0_85 = arith.constant 0 : index
    %c224 = arith.constant 224 : index
    %61 = vector.load %arg13[%c0_85, %c224] : memref<128x896xf32, #tpu.memory_space<vmem>>, vector<128x32xf32>
    tpu.vector_store %arg13[%c0_85, %c224], %60 {strides = array<i32>} : memref<128x896xf32, #tpu.memory_space<vmem>>, vector<128x32xf32>,
    %c0_86 = arith.constant 0 : index
    %c1_87 = arith.constant 1 : index
    %c3_88 = arith.constant 3 : index
    %c0_89 = arith.constant 0 : index
    %62 = vector.load %arg12[%c0_86, %c1_87, %c3_88, %c0_89] : memref<2x12x12x128xf32, #tpu.memory_space<vmem>>, vector<2x8x8x32xf32>
    %63 = vector.shape_cast %62 : vector<2x8x8x32xf32> to vector<128x32xf32>
    %c0_90 = arith.constant 0 : index
    %c256 = arith.constant 256 : index
    %64 = vector.load %arg13[%c0_90, %c256] : memref<128x896xf32, #tpu.memory_space<vmem>>, vector<128x32xf32>
    tpu.vector_store %arg13[%c0_90, %c256], %63 {strides = array<i32>} : memref<128x896xf32, #tpu.memory_space<vmem>>, vector<128x32xf32>,
    %c0_91 = arith.constant 0 : index
    %c1_92 = arith.constant 1 : index
    %c4_93 = arith.constant 4 : index
    %c0_94 = arith.constant 0 : index
    %65 = vector.load %arg12[%c0_91, %c1_92, %c4_93, %c0_94] : memref<2x12x12x128xf32, #tpu.memory_space<vmem>>, vector<2x8x8x32xf32>
    %66 = vector.shape_cast %65 : vector<2x8x8x32xf32> to vector<128x32xf32>
    %c0_95 = arith.constant 0 : index
    %c288 = arith.constant 288 : index
    %67 = vector.load %arg13[%c0_95, %c288] : memref<128x896xf32, #tpu.memory_space<vmem>>, vector<128x32xf32>
    tpu.vector_store %arg13[%c0_95, %c288], %66 {strides = array<i32>} : memref<128x896xf32, #tpu.memory_space<vmem>>, vector<128x32xf32>,
    %c0_96 = arith.constant 0 : index
    %c2_97 = arith.constant 2 : index
    %c0_98 = arith.constant 0 : index
    %c0_99 = arith.constant 0 : index
    %68 = vector.load %arg12[%c0_96, %c2_97, %c0_98, %c0_99] : memref<2x12x12x128xf32, #tpu.memory_space<vmem>>, vector<2x8x8x32xf32>
    %69 = vector.shape_cast %68 : vector<2x8x8x32xf32> to vector<128x32xf32>
    %c0_100 = arith.constant 0 : index
    %c320 = arith.constant 320 : index
    %70 = vector.load %arg13[%c0_100, %c320] : memref<128x896xf32, #tpu.memory_space<vmem>>, vector<128x32xf32>
    tpu.vector_store %arg13[%c0_100, %c320], %69 {strides = array<i32>} : memref<128x896xf32, #tpu.memory_space<vmem>>, vector<128x32xf32>,
    %c0_101 = arith.constant 0 : index
    %c2_102 = arith.constant 2 : index
    %c1_103 = arith.constant 1 : index
    %c0_104 = arith.constant 0 : index
    %71 = vector.load %arg12[%c0_101, %c2_102, %c1_103, %c0_104] : memref<2x12x12x128xf32, #tpu.memory_space<vmem>>, vector<2x8x8x32xf32>
    %72 = vector.shape_cast %71 : vector<2x8x8x32xf32> to vector<128x32xf32>
    %c0_105 = arith.constant 0 : index
    %c352 = arith.constant 352 : index
    %73 = vector.load %arg13[%c0_105, %c352] : memref<128x896xf32, #tpu.memory_space<vmem>>, vector<128x32xf32>
    tpu.vector_store %arg13[%c0_105, %c352], %72 {strides = array<i32>} : memref<128x896xf32, #tpu.memory_space<vmem>>, vector<128x32xf32>,
    %c0_106 = arith.constant 0 : index
    %c2_107 = arith.constant 2 : index
    %c2_108 = arith.constant 2 : index
    %c0_109 = arith.constant 0 : index
    %74 = vector.load %arg12[%c0_106, %c2_107, %c2_108, %c0_109] : memref<2x12x12x128xf32, #tpu.memory_space<vmem>>, vector<2x8x8x32xf32>
    %75 = vector.shape_cast %74 : vector<2x8x8x32xf32> to vector<128x32xf32>
    %c0_110 = arith.constant 0 : index
    %c384 = arith.constant 384 : index
    %76 = vector.load %arg13[%c0_110, %c384] : memref<128x896xf32, #tpu.memory_space<vmem>>, vector<128x32xf32>
    tpu.vector_store %arg13[%c0_110, %c384], %75 {strides = array<i32>} : memref<128x896xf32, #tpu.memory_space<vmem>>, vector<128x32xf32>,
    %c0_111 = arith.constant 0 : index
    %c2_112 = arith.constant 2 : index
    %c3_113 = arith.constant 3 : index
    %c0_114 = arith.constant 0 : index
    %77 = vector.load %arg12[%c0_111, %c2_112, %c3_113, %c0_114] : memref<2x12x12x128xf32, #tpu.memory_space<vmem>>, vector<2x8x8x32xf32>
    %78 = vector.shape_cast %77 : vector<2x8x8x32xf32> to vector<128x32xf32>
    %c0_115 = arith.constant 0 : index
    %c416 = arith.constant 416 : index
    %79 = vector.load %arg13[%c0_115, %c416] : memref<128x896xf32, #tpu.memory_space<vmem>>, vector<128x32xf32>
    tpu.vector_store %arg13[%c0_115, %c416], %78 {strides = array<i32>} : memref<128x896xf32, #tpu.memory_space<vmem>>, vector<128x32xf32>,
    %c0_116 = arith.constant 0 : index
    %c2_117 = arith.constant 2 : index
    %c4_118 = arith.constant 4 : index
    %c0_119 = arith.constant 0 : index
    %80 = vector.load %arg12[%c0_116, %c2_117, %c4_118, %c0_119] : memref<2x12x12x128xf32, #tpu.memory_space<vmem>>, vector<2x8x8x32xf32>
    %81 = vector.shape_cast %80 : vector<2x8x8x32xf32> to vector<128x32xf32>
    %c0_120 = arith.constant 0 : index
    %c448 = arith.constant 448 : index
    %82 = vector.load %arg13[%c0_120, %c448] : memref<128x896xf32, #tpu.memory_space<vmem>>, vector<128x32xf32>
    tpu.vector_store %arg13[%c0_120, %c448], %81 {strides = array<i32>} : memref<128x896xf32, #tpu.memory_space<vmem>>, vector<128x32xf32>,
    %c0_121 = arith.constant 0 : index
    %c3_122 = arith.constant 3 : index
    %c0_123 = arith.constant 0 : index
    %c0_124 = arith.constant 0 : index
    %83 = vector.load %arg12[%c0_121, %c3_122, %c0_123, %c0_124] : memref<2x12x12x128xf32, #tpu.memory_space<vmem>>, vector<2x8x8x32xf32>
    %84 = vector.shape_cast %83 : vector<2x8x8x32xf32> to vector<128x32xf32>
    %c0_125 = arith.constant 0 : index
    %c480 = arith.constant 480 : index
    %85 = vector.load %arg13[%c0_125, %c480] : memref<128x896xf32, #tpu.memory_space<vmem>>, vector<128x32xf32>
    tpu.vector_store %arg13[%c0_125, %c480], %84 {strides = array<i32>} : memref<128x896xf32, #tpu.memory_space<vmem>>, vector<128x32xf32>,
    %c0_126 = arith.constant 0 : index
    %c3_127 = arith.constant 3 : index
    %c1_128 = arith.constant 1 : index
    %c0_129 = arith.constant 0 : index
    %86 = vector.load %arg12[%c0_126, %c3_127, %c1_128, %c0_129] : memref<2x12x12x128xf32, #tpu.memory_space<vmem>>, vector<2x8x8x32xf32>
    %87 = vector.shape_cast %86 : vector<2x8x8x32xf32> to vector<128x32xf32>
    %c0_130 = arith.constant 0 : index
    %c512 = arith.constant 512 : index
    %88 = vector.load %arg13[%c0_130, %c512] : memref<128x896xf32, #tpu.memory_space<vmem>>, vector<128x32xf32>
    tpu.vector_store %arg13[%c0_130, %c512], %87 {strides = array<i32>} : memref<128x896xf32, #tpu.memory_space<vmem>>, vector<128x32xf32>,
    %c0_131 = arith.constant 0 : index
    %c3_132 = arith.constant 3 : index
    %c2_133 = arith.constant 2 : index
    %c0_134 = arith.constant 0 : index
    %89 = vector.load %arg12[%c0_131, %c3_132, %c2_133, %c0_134] : memref<2x12x12x128xf32, #tpu.memory_space<vmem>>, vector<2x8x8x32xf32>
    %90 = vector.shape_cast %89 : vector<2x8x8x32xf32> to vector<128x32xf32>
    %c0_135 = arith.constant 0 : index
    %c544 = arith.constant 544 : index
    %91 = vector.load %arg13[%c0_135, %c544] : memref<128x896xf32, #tpu.memory_space<vmem>>, vector<128x32xf32>
    tpu.vector_store %arg13[%c0_135, %c544], %90 {strides = array<i32>} : memref<128x896xf32, #tpu.memory_space<vmem>>, vector<128x32xf32>,
    %c0_136 = arith.constant 0 : index
    %c3_137 = arith.constant 3 : index
    %c3_138 = arith.constant 3 : index
    %c0_139 = arith.constant 0 : index
    %92 = vector.load %arg12[%c0_136, %c3_137, %c3_138, %c0_139] : memref<2x12x12x128xf32, #tpu.memory_space<vmem>>, vector<2x8x8x32xf32>
    %93 = vector.shape_cast %92 : vector<2x8x8x32xf32> to vector<128x32xf32>
    %c0_140 = arith.constant 0 : index
    %c576 = arith.constant 576 : index
    %94 = vector.load %arg13[%c0_140, %c576] : memref<128x896xf32, #tpu.memory_space<vmem>>, vector<128x32xf32>
    tpu.vector_store %arg13[%c0_140, %c576], %93 {strides = array<i32>} : memref<128x896xf32, #tpu.memory_space<vmem>>, vector<128x32xf32>,
    %c0_141 = arith.constant 0 : index
    %c3_142 = arith.constant 3 : index
    %c4_143 = arith.constant 4 : index
    %c0_144 = arith.constant 0 : index
    %95 = vector.load %arg12[%c0_141, %c3_142, %c4_143, %c0_144] : memref<2x12x12x128xf32, #tpu.memory_space<vmem>>, vector<2x8x8x32xf32>
    %96 = vector.shape_cast %95 : vector<2x8x8x32xf32> to vector<128x32xf32>
    %c0_145 = arith.constant 0 : index
    %c608 = arith.constant 608 : index
    %97 = vector.load %arg13[%c0_145, %c608] : memref<128x896xf32, #tpu.memory_space<vmem>>, vector<128x32xf32>
    tpu.vector_store %arg13[%c0_145, %c608], %96 {strides = array<i32>} : memref<128x896xf32, #tpu.memory_space<vmem>>, vector<128x32xf32>,
    %c0_146 = arith.constant 0 : index
    %c4_147 = arith.constant 4 : index
    %c0_148 = arith.constant 0 : index
    %c0_149 = arith.constant 0 : index
    %98 = vector.load %arg12[%c0_146, %c4_147, %c0_148, %c0_149] : memref<2x12x12x128xf32, #tpu.memory_space<vmem>>, vector<2x8x8x32xf32>
    %99 = vector.shape_cast %98 : vector<2x8x8x32xf32> to vector<128x32xf32>
    %c0_150 = arith.constant 0 : index
    %c640 = arith.constant 640 : index
    %100 = vector.load %arg13[%c0_150, %c640] : memref<128x896xf32, #tpu.memory_space<vmem>>, vector<128x32xf32>
    tpu.vector_store %arg13[%c0_150, %c640], %99 {strides = array<i32>} : memref<128x896xf32, #tpu.memory_space<vmem>>, vector<128x32xf32>,
    %c0_151 = arith.constant 0 : index
    %c4_152 = arith.constant 4 : index
    %c1_153 = arith.constant 1 : index
    %c0_154 = arith.constant 0 : index
    %101 = vector.load %arg12[%c0_151, %c4_152, %c1_153, %c0_154] : memref<2x12x12x128xf32, #tpu.memory_space<vmem>>, vector<2x8x8x32xf32>
    %102 = vector.shape_cast %101 : vector<2x8x8x32xf32> to vector<128x32xf32>
    %c0_155 = arith.constant 0 : index
    %c672 = arith.constant 672 : index
    %103 = vector.load %arg13[%c0_155, %c672] : memref<128x896xf32, #tpu.memory_space<vmem>>, vector<128x32xf32>
    tpu.vector_store %arg13[%c0_155, %c672], %102 {strides = array<i32>} : memref<128x896xf32, #tpu.memory_space<vmem>>, vector<128x32xf32>,
    %c0_156 = arith.constant 0 : index
    %c4_157 = arith.constant 4 : index
    %c2_158 = arith.constant 2 : index
    %c0_159 = arith.constant 0 : index
    %104 = vector.load %arg12[%c0_156, %c4_157, %c2_158, %c0_159] : memref<2x12x12x128xf32, #tpu.memory_space<vmem>>, vector<2x8x8x32xf32>
    %105 = vector.shape_cast %104 : vector<2x8x8x32xf32> to vector<128x32xf32>
    %c0_160 = arith.constant 0 : index
    %c704 = arith.constant 704 : index
    %106 = vector.load %arg13[%c0_160, %c704] : memref<128x896xf32, #tpu.memory_space<vmem>>, vector<128x32xf32>
    tpu.vector_store %arg13[%c0_160, %c704], %105 {strides = array<i32>} : memref<128x896xf32, #tpu.memory_space<vmem>>, vector<128x32xf32>,
    %c0_161 = arith.constant 0 : index
    %c4_162 = arith.constant 4 : index
    %c3_163 = arith.constant 3 : index
    %c0_164 = arith.constant 0 : index
    %107 = vector.load %arg12[%c0_161, %c4_162, %c3_163, %c0_164] : memref<2x12x12x128xf32, #tpu.memory_space<vmem>>, vector<2x8x8x32xf32>
    %108 = vector.shape_cast %107 : vector<2x8x8x32xf32> to vector<128x32xf32>
    %c0_165 = arith.constant 0 : index
    %c736 = arith.constant 736 : index
    %109 = vector.load %arg13[%c0_165, %c736] : memref<128x896xf32, #tpu.memory_space<vmem>>, vector<128x32xf32>
    tpu.vector_store %arg13[%c0_165, %c736], %108 {strides = array<i32>} : memref<128x896xf32, #tpu.memory_space<vmem>>, vector<128x32xf32>,
    %c0_166 = arith.constant 0 : index
    %c4_167 = arith.constant 4 : index
    %c4_168 = arith.constant 4 : index
    %c0_169 = arith.constant 0 : index
    %110 = vector.load %arg12[%c0_166, %c4_167, %c4_168, %c0_169] : memref<2x12x12x128xf32, #tpu.memory_space<vmem>>, vector<2x8x8x32xf32>
    %111 = vector.shape_cast %110 : vector<2x8x8x32xf32> to vector<128x32xf32>
    %c0_170 = arith.constant 0 : index
    %c768 = arith.constant 768 : index
    %112 = vector.load %arg13[%c0_170, %c768] : memref<128x896xf32, #tpu.memory_space<vmem>>, vector<128x32xf32>
    tpu.vector_store %arg13[%c0_170, %c768], %111 {strides = array<i32>} : memref<128x896xf32, #tpu.memory_space<vmem>>, vector<128x32xf32>,
    %c0_171 = arith.constant 0 : index
    %c0_172 = arith.constant 0 : index
    %113 = vector.load %arg13[%c0_171, %c0_172] : memref<128x896xf32, #tpu.memory_space<vmem>>, vector<128x896xf32>
    %c0_173 = arith.constant 0 : index
    %c0_174 = arith.constant 0 : index
    %114 = vector.load %arg3[%c0_173, %c0_174] : memref<896x64xf32, #tpu.memory_space<vmem>>, vector<896x64xf32>
    %cst_175 = arith.constant dense<0.000000e+00> : vector<128x64xf32>
    %115 = tpu.matmul %113, %114, %cst_175 {dimension_numbers = #tpu.dot_dimension_numbers<[1], [0], [0], [1], [0, 0, 1, 1], [], []>} : vector<128x896xf32>, vector<896x64xf32>, vector<128x64xf32> -> vector<128x64xf32>
    %116 = vector.shape_cast %115 : vector<128x64xf32> to vector<8x2x8x64xf32>
    %c0_176 = arith.constant 0 : index
    %c0_177 = arith.constant 0 : index
    %c0_178 = arith.constant 0 : index
    %c0_179 = arith.constant 0 : index
    %117 = vector.load %arg14[%c0_176, %c0_177, %c0_178, %c0_179] : memref<8x2x8x64xf32, #tpu.memory_space<vmem>>, vector<8x2x8x64xf32>
    tpu.vector_store %arg14[%c0_176, %c0_177, %c0_178, %c0_179], %116 {strides = array<i32>} : memref<8x2x8x64xf32, #tpu.memory_space<vmem>>, vector<8x2x8x64xf32>,
    %c0_180 = arith.constant 0 : index
    %c0_181 = arith.constant 0 : index
    %118 = vector.load %arg4[%c0_180, %c0_181] : memref<1x64xf32, #tpu.memory_space<vmem>>, vector<1x64xf32>
    %c0_182 = arith.constant 0 : index
    %c0_183 = arith.constant 0 : index
    %c0_184 = arith.constant 0 : index
    %c0_185 = arith.constant 0 : index
    %119 = vector.load %arg14[%c0_182, %c0_183, %c0_184, %c0_185] : memref<8x2x8x64xf32, #tpu.memory_space<vmem>>, vector<8x1x8x64xf32>
    %120 = vector.shape_cast %119 : vector<8x1x8x64xf32> to vector<8x8x64xf32>
    %121 = vector.shape_cast %118 : vector<1x64xf32> to vector<1x1x64xf32>
    %122 = vector.broadcast %121 : vector<1x1x64xf32> to vector<8x8x64xf32>
    %123 = arith.addf %120, %122 : vector<8x8x64xf32>
    %cst_186 = arith.constant 0.000000e+00 : f32
    %124 = vector.broadcast %cst_186 : f32 to vector<8x8x64xf32>
    %125 = arith.maximumf %123, %124 : vector<8x8x64xf32>
    %c0_187 = arith.constant 0 : index
    %c1_188 = arith.constant 1 : index
    %c0_189 = arith.constant 0 : index
    %c0_190 = arith.constant 0 : index
    %126 = vector.load %arg14[%c0_187, %c1_188, %c0_189, %c0_190] : memref<8x2x8x64xf32, #tpu.memory_space<vmem>>, vector<8x1x8x64xf32>
    %127 = vector.shape_cast %126 : vector<8x1x8x64xf32> to vector<8x8x64xf32>
    %128 = vector.shape_cast %118 : vector<1x64xf32> to vector<1x1x64xf32>
    %129 = vector.broadcast %128 : vector<1x1x64xf32> to vector<8x8x64xf32>
    %130 = arith.addf %127, %129 : vector<8x8x64xf32>
    %cst_191 = arith.constant 0.000000e+00 : f32
    %131 = vector.broadcast %cst_191 : f32 to vector<8x8x64xf32>
    %132 = arith.maximumf %130, %131 : vector<8x8x64xf32>
    %133 = arith.addf %125, %132 : vector<8x8x64xf32>
    %134 = vector.shape_cast %133 : vector<8x8x64xf32> to vector<64x64xf32>
    %c0_192 = arith.constant 0 : index
    %c0_193 = arith.constant 0 : index
    %135 = vector.load %arg15[%c0_192, %c0_193] : memref<64x64xf32, #tpu.memory_space<vmem>>, vector<64x64xf32>
    tpu.vector_store %arg15[%c0_192, %c0_193], %134 {strides = array<i32>} : memref<64x64xf32, #tpu.memory_space<vmem>>, vector<64x64xf32>,
    %c0_194 = arith.constant 0 : index
    %c0_195 = arith.constant 0 : index
    %136 = tpu.strided_load %arg15[%c0_194, %c0_195] {strides = array<i32: 2, 1>} : memref<64x64xf32, #tpu.memory_space<vmem>>, vector<32x64xf32>
    %c1_196 = arith.constant 1 : index
    %c0_197 = arith.constant 0 : index
    %137 = tpu.strided_load %arg15[%c1_196, %c0_197] {strides = array<i32: 2, 1>} : memref<64x64xf32, #tpu.memory_space<vmem>>, vector<32x64xf32>
    %138 = arith.addf %136, %137 : vector<32x64xf32>
    %cst_198 = arith.constant 2.500000e-01 : f32
    %139 = vector.broadcast %cst_198 : f32 to vector<32x64xf32>
    %140 = arith.mulf %139, %138 : vector<32x64xf32>
    %141 = vector.shape_cast %140 : vector<32x64xf32> to vector<2x16x64xf32>
    %142 = vector.extract_strided_slice %141 {offsets = [0, 0, 0], sizes = [2, 1, 64], strides = [1, 1, 1]} : vector<2x16x64xf32> to vector<2x1x64xf32>
    %143 = vector.shape_cast %142 : vector<2x1x64xf32> to vector<2x64xf32>
    %c0_199 = arith.constant 0 : index
    %c0_200 = arith.constant 0 : index
    %144 = vector.load %arg16[%c0_199, %c0_200] : memref<2x1024xf32, #tpu.memory_space<vmem>>, vector<2x64xf32>
    tpu.vector_store %arg16[%c0_199, %c0_200], %143 {strides = array<i32>} : memref<2x1024xf32, #tpu.memory_space<vmem>>, vector<2x64xf32>,
    %145 = vector.extract_strided_slice %141 {offsets = [0, 1, 0], sizes = [2, 1, 64], strides = [1, 1, 1]} : vector<2x16x64xf32> to vector<2x1x64xf32>
    %146 = vector.shape_cast %145 : vector<2x1x64xf32> to vector<2x64xf32>
    %c0_201 = arith.constant 0 : index
    %c64_202 = arith.constant 64 : index
    %147 = vector.load %arg16[%c0_201, %c64_202] : memref<2x1024xf32, #tpu.memory_space<vmem>>, vector<2x64xf32>
    tpu.vector_store %arg16[%c0_201, %c64_202], %146 {strides = array<i32>} : memref<2x1024xf32, #tpu.memory_space<vmem>>, vector<2x64xf32>,
    %148 = vector.extract_strided_slice %141 {offsets = [0, 2, 0], sizes = [2, 1, 64], strides = [1, 1, 1]} : vector<2x16x64xf32> to vector<2x1x64xf32>
    %149 = vector.shape_cast %148 : vector<2x1x64xf32> to vector<2x64xf32>
    %c0_203 = arith.constant 0 : index
    %c128_204 = arith.constant 128 : index
    %150 = vector.load %arg16[%c0_203, %c128_204] : memref<2x1024xf32, #tpu.memory_space<vmem>>, vector<2x64xf32>
    tpu.vector_store %arg16[%c0_203, %c128_204], %149 {strides = array<i32>} : memref<2x1024xf32, #tpu.memory_space<vmem>>, vector<2x64xf32>,
    %151 = vector.extract_strided_slice %141 {offsets = [0, 3, 0], sizes = [2, 1, 64], strides = [1, 1, 1]} : vector<2x16x64xf32> to vector<2x1x64xf32>
    %152 = vector.shape_cast %151 : vector<2x1x64xf32> to vector<2x64xf32>
    %c0_205 = arith.constant 0 : index
    %c192_206 = arith.constant 192 : index
    %153 = vector.load %arg16[%c0_205, %c192_206] : memref<2x1024xf32, #tpu.memory_space<vmem>>, vector<2x64xf32>
    tpu.vector_store %arg16[%c0_205, %c192_206], %152 {strides = array<i32>} : memref<2x1024xf32, #tpu.memory_space<vmem>>, vector<2x64xf32>,
    %154 = vector.extract_strided_slice %141 {offsets = [0, 4, 0], sizes = [2, 1, 64], strides = [1, 1, 1]} : vector<2x16x64xf32> to vector<2x1x64xf32>
    %155 = vector.shape_cast %154 : vector<2x1x64xf32> to vector<2x64xf32>
    %c0_207 = arith.constant 0 : index
    %c256_208 = arith.constant 256 : index
    %156 = vector.load %arg16[%c0_207, %c256_208] : memref<2x1024xf32, #tpu.memory_space<vmem>>, vector<2x64xf32>
    tpu.vector_store %arg16[%c0_207, %c256_208], %155 {strides = array<i32>} : memref<2x1024xf32, #tpu.memory_space<vmem>>, vector<2x64xf32>,
    %157 = vector.extract_strided_slice %141 {offsets = [0, 5, 0], sizes = [2, 1, 64], strides = [1, 1, 1]} : vector<2x16x64xf32> to vector<2x1x64xf32>
    %158 = vector.shape_cast %157 : vector<2x1x64xf32> to vector<2x64xf32>
    %c0_209 = arith.constant 0 : index
    %c320_210 = arith.constant 320 : index
    %159 = vector.load %arg16[%c0_209, %c320_210] : memref<2x1024xf32, #tpu.memory_space<vmem>>, vector<2x64xf32>
    tpu.vector_store %arg16[%c0_209, %c320_210], %158 {strides = array<i32>} : memref<2x1024xf32, #tpu.memory_space<vmem>>, vector<2x64xf32>,
    %160 = vector.extract_strided_slice %141 {offsets = [0, 6, 0], sizes = [2, 1, 64], strides = [1, 1, 1]} : vector<2x16x64xf32> to vector<2x1x64xf32>
    %161 = vector.shape_cast %160 : vector<2x1x64xf32> to vector<2x64xf32>
    %c0_211 = arith.constant 0 : index
    %c384_212 = arith.constant 384 : index
    %162 = vector.load %arg16[%c0_211, %c384_212] : memref<2x1024xf32, #tpu.memory_space<vmem>>, vector<2x64xf32>
    tpu.vector_store %arg16[%c0_211, %c384_212], %161 {strides = array<i32>} : memref<2x1024xf32, #tpu.memory_space<vmem>>, vector<2x64xf32>,
    %163 = vector.extract_strided_slice %141 {offsets = [0, 7, 0], sizes = [2, 1, 64], strides = [1, 1, 1]} : vector<2x16x64xf32> to vector<2x1x64xf32>
    %164 = vector.shape_cast %163 : vector<2x1x64xf32> to vector<2x64xf32>
    %c0_213 = arith.constant 0 : index
    %c448_214 = arith.constant 448 : index
    %165 = vector.load %arg16[%c0_213, %c448_214] : memref<2x1024xf32, #tpu.memory_space<vmem>>, vector<2x64xf32>
    tpu.vector_store %arg16[%c0_213, %c448_214], %164 {strides = array<i32>} : memref<2x1024xf32, #tpu.memory_space<vmem>>, vector<2x64xf32>,
    %166 = vector.extract_strided_slice %141 {offsets = [0, 8, 0], sizes = [2, 1, 64], strides = [1, 1, 1]} : vector<2x16x64xf32> to vector<2x1x64xf32>
    %167 = vector.shape_cast %166 : vector<2x1x64xf32> to vector<2x64xf32>
    %c0_215 = arith.constant 0 : index
    %c512_216 = arith.constant 512 : index
    %168 = vector.load %arg16[%c0_215, %c512_216] : memref<2x1024xf32, #tpu.memory_space<vmem>>, vector<2x64xf32>
    tpu.vector_store %arg16[%c0_215, %c512_216], %167 {strides = array<i32>} : memref<2x1024xf32, #tpu.memory_space<vmem>>, vector<2x64xf32>,
    %169 = vector.extract_strided_slice %141 {offsets = [0, 9, 0], sizes = [2, 1, 64], strides = [1, 1, 1]} : vector<2x16x64xf32> to vector<2x1x64xf32>
    %170 = vector.shape_cast %169 : vector<2x1x64xf32> to vector<2x64xf32>
    %c0_217 = arith.constant 0 : index
    %c576_218 = arith.constant 576 : index
    %171 = vector.load %arg16[%c0_217, %c576_218] : memref<2x1024xf32, #tpu.memory_space<vmem>>, vector<2x64xf32>
    tpu.vector_store %arg16[%c0_217, %c576_218], %170 {strides = array<i32>} : memref<2x1024xf32, #tpu.memory_space<vmem>>, vector<2x64xf32>,
    %172 = vector.extract_strided_slice %141 {offsets = [0, 10, 0], sizes = [2, 1, 64], strides = [1, 1, 1]} : vector<2x16x64xf32> to vector<2x1x64xf32>
    %173 = vector.shape_cast %172 : vector<2x1x64xf32> to vector<2x64xf32>
    %c0_219 = arith.constant 0 : index
    %c640_220 = arith.constant 640 : index
    %174 = vector.load %arg16[%c0_219, %c640_220] : memref<2x1024xf32, #tpu.memory_space<vmem>>, vector<2x64xf32>
    tpu.vector_store %arg16[%c0_219, %c640_220], %173 {strides = array<i32>} : memref<2x1024xf32, #tpu.memory_space<vmem>>, vector<2x64xf32>,
    %175 = vector.extract_strided_slice %141 {offsets = [0, 11, 0], sizes = [2, 1, 64], strides = [1, 1, 1]} : vector<2x16x64xf32> to vector<2x1x64xf32>
    %176 = vector.shape_cast %175 : vector<2x1x64xf32> to vector<2x64xf32>
    %c0_221 = arith.constant 0 : index
    %c704_222 = arith.constant 704 : index
    %177 = vector.load %arg16[%c0_221, %c704_222] : memref<2x1024xf32, #tpu.memory_space<vmem>>, vector<2x64xf32>
    tpu.vector_store %arg16[%c0_221, %c704_222], %176 {strides = array<i32>} : memref<2x1024xf32, #tpu.memory_space<vmem>>, vector<2x64xf32>,
    %178 = vector.extract_strided_slice %141 {offsets = [0, 12, 0], sizes = [2, 1, 64], strides = [1, 1, 1]} : vector<2x16x64xf32> to vector<2x1x64xf32>
    %179 = vector.shape_cast %178 : vector<2x1x64xf32> to vector<2x64xf32>
    %c0_223 = arith.constant 0 : index
    %c768_224 = arith.constant 768 : index
    %180 = vector.load %arg16[%c0_223, %c768_224] : memref<2x1024xf32, #tpu.memory_space<vmem>>, vector<2x64xf32>
    tpu.vector_store %arg16[%c0_223, %c768_224], %179 {strides = array<i32>} : memref<2x1024xf32, #tpu.memory_space<vmem>>, vector<2x64xf32>,
    %181 = vector.extract_strided_slice %141 {offsets = [0, 13, 0], sizes = [2, 1, 64], strides = [1, 1, 1]} : vector<2x16x64xf32> to vector<2x1x64xf32>
    %182 = vector.shape_cast %181 : vector<2x1x64xf32> to vector<2x64xf32>
    %c0_225 = arith.constant 0 : index
    %c832 = arith.constant 832 : index
    %183 = vector.load %arg16[%c0_225, %c832] : memref<2x1024xf32, #tpu.memory_space<vmem>>, vector<2x64xf32>
    tpu.vector_store %arg16[%c0_225, %c832], %182 {strides = array<i32>} : memref<2x1024xf32, #tpu.memory_space<vmem>>, vector<2x64xf32>,
    %184 = vector.extract_strided_slice %141 {offsets = [0, 14, 0], sizes = [2, 1, 64], strides = [1, 1, 1]} : vector<2x16x64xf32> to vector<2x1x64xf32>
    %185 = vector.shape_cast %184 : vector<2x1x64xf32> to vector<2x64xf32>
    %c0_226 = arith.constant 0 : index
    %c896 = arith.constant 896 : index
    %186 = vector.load %arg16[%c0_226, %c896] : memref<2x1024xf32, #tpu.memory_space<vmem>>, vector<2x64xf32>
    tpu.vector_store %arg16[%c0_226, %c896], %185 {strides = array<i32>} : memref<2x1024xf32, #tpu.memory_space<vmem>>, vector<2x64xf32>,
    %187 = vector.extract_strided_slice %141 {offsets = [0, 15, 0], sizes = [2, 1, 64], strides = [1, 1, 1]} : vector<2x16x64xf32> to vector<2x1x64xf32>
    %188 = vector.shape_cast %187 : vector<2x1x64xf32> to vector<2x64xf32>
    %c0_227 = arith.constant 0 : index
    %c960 = arith.constant 960 : index
    %189 = vector.load %arg16[%c0_227, %c960] : memref<2x1024xf32, #tpu.memory_space<vmem>>, vector<2x64xf32>
    tpu.vector_store %arg16[%c0_227, %c960], %188 {strides = array<i32>} : memref<2x1024xf32, #tpu.memory_space<vmem>>, vector<2x64xf32>,
    %c0_228 = arith.constant 0 : index
    %c0_229 = arith.constant 0 : index
    %190 = vector.load %arg16[%c0_228, %c0_229] : memref<2x1024xf32, #tpu.memory_space<vmem>>, vector<2x1024xf32>
    %c0_230 = arith.constant 0 : index
    %c0_231 = arith.constant 0 : index
    %191 = vector.load %arg5[%c0_230, %c0_231] : memref<1024x128xf32, #tpu.memory_space<vmem>>, vector<1024x128xf32>
    %cst_232 = arith.constant dense<0.000000e+00> : vector<2x128xf32>
    %192 = tpu.matmul %190, %191, %cst_232 {dimension_numbers = #tpu.dot_dimension_numbers<[1], [0], [0], [1], [0, 0, 1, 1], [], []>} : vector<2x1024xf32>, vector<1024x128xf32>, vector<2x128xf32> -> vector<2x128xf32>
    %c0_233 = arith.constant 0 : index
    %c0_234 = arith.constant 0 : index
    %193 = vector.load %arg6[%c0_233, %c0_234] : memref<1x128xf32, #tpu.memory_space<vmem>>, vector<1x128xf32>
    %194 = vector.broadcast %193 : vector<1x128xf32> to vector<2x128xf32>
    %195 = arith.addf %192, %194 : vector<2x128xf32>
    %c0_235 = arith.constant 0 : index
    %c0_236 = arith.constant 0 : index
    %196 = vector.load %arg7[%c0_235, %c0_236] : memref<128x128xf32, #tpu.memory_space<vmem>>, vector<128x128xf32>
    %cst_237 = arith.constant dense<0.000000e+00> : vector<2x128xf32>
    %197 = tpu.matmul %195, %196, %cst_237 {dimension_numbers = #tpu.dot_dimension_numbers<[1], [0], [0], [1], [0, 0, 1, 1], [], []>} : vector<2x128xf32>, vector<128x128xf32>, vector<2x128xf32> -> vector<2x128xf32>
    %c0_238 = arith.constant 0 : index
    %c0_239 = arith.constant 0 : index
    %198 = vector.load %arg8[%c0_238, %c0_239] : memref<1x128xf32, #tpu.memory_space<vmem>>, vector<1x128xf32>
    %199 = vector.broadcast %198 : vector<1x128xf32> to vector<2x128xf32>
    %200 = arith.addf %197, %199 : vector<2x128xf32>
    %c0_240 = arith.constant 0 : index
    %c0_241 = arith.constant 0 : index
    %201 = vector.load %arg9[%c0_240, %c0_241] : memref<2x128xf32, #tpu.memory_space<vmem>>, vector<2x128xf32>
    tpu.vector_store %arg9[%c0_240, %c0_241], %200 {strides = array<i32>} : memref<2x128xf32, #tpu.memory_space<vmem>>, vector<2x128xf32>,
    return
  }
}

</mosaic_0001>

<llo_original>
// kernel: simple_cnn_forward.1
$region0: #{simple_cnn_forward.1}
  #allocation0 [shape = 'u32[]', space=smem, size = 0x4, offset = 0x4, fixed_abs, tag = 'smem constant byte address 0x4 - core index']
  #allocation1 [shape = 'u32[144,128]{1,0:T(1,128)}', space=vmem, size = 0x12000, scoped, tag = 'internal scratch']
  #allocation2 [shape = 'f32[16,2,16,128]{3,2,1,0:T(8,128)}', space=vmem, size = 0x40000, scoped, tag = 'scratch operand']
  #allocation3 [shape = 'f32[256,128]{1,0:T(8,128)}', space=vmem, size = 0x20000, scoped, tag = 'scratch operand']
  #allocation4 [shape = 'f32[2,12,12,128]{3,2,1,0:T(8,128)}', space=vmem, size = 0x30000, scoped, tag = 'scratch operand']
  #allocation5 [shape = 'f32[128,896]{1,0:T(8,128)}', space=vmem, size = 0x70000, scoped, tag = 'scratch operand']
  #allocation6 [shape = 'f32[8,2,8,64]{3,2,1,0:T(8,128)}', space=vmem, size = 0x10000, scoped, tag = 'scratch operand']
  #allocation7 [shape = 'f32[64,64]{1,0:T(8,128)}', space=vmem, size = 0x8000, scoped, tag = 'scratch operand']
  #allocation8 [shape = 'f32[2,1024]{1,0:T(2,128)}', space=vmem, size = 0x2000, scoped, tag = 'scratch operand']
  %s0 = inlined_call_operand.vmem [shape: f32[512,128], index: 0, kind: input, shape index: {}]
  %s1 = inlined_call_operand.vmem [shape: f32[128,128], index: 1, kind: input, shape index: {}]
  %s2 = inlined_call_operand.vmem [shape: f32[1,128], index: 2, kind: input, shape index: {}]
  %s3 = inlined_call_operand.vmem [shape: f32[896,64], index: 3, kind: input, shape index: {}]
  %s4 = inlined_call_operand.vmem [shape: f32[1,64], index: 4, kind: input, shape index: {}]
  %s5 = inlined_call_operand.vmem [shape: f32[1024,128], index: 5, kind: input, shape index: {}]
  %s6 = inlined_call_operand.vmem [shape: f32[1,128], index: 6, kind: input, shape index: {}]
  %s7 = inlined_call_operand.vmem [shape: f32[128,128], index: 7, kind: input, shape index: {}]
  %s8 = inlined_call_operand.vmem [shape: f32[1,128], index: 8, kind: input, shape index: {}]
  %s9 = inlined_call_operand.hbm [shape: f32[2,128], index: 9, kind: output, shape index: {}]
  %s10 = sld [smem:[#allocation0]]
  $region46: #{simple_cnn_forward.1} parent=0
    _
  %s12 = ssub.s32 1, %s10
  %s13 = scalar_select 0, %s12, %s10
  $region1: #{simple_cnn_forward.1} parent=0
    #allocation9 [shape = 'u8[1024]{0}', space=vmem, size = 0x400, scoped, tag = 'output window, operand 0, single buffered']
    #allocation10 [shape = 's32[1]{0}', space=sflag, size = 0x4, scoped, tag = 'scoped memory for simple_cnn_forward.1']
    %14 = vsyncpa [#allocation10], 0
    // Predicated region
    $region2: #{simple_cnn_forward.1} parent=1 // pred_check
      _
    $region3: #{simple_cnn_forward.1} parent=1 // pred_check_branch
      %16 = sbr.rel (0) target = $region5
    $region4: #{simple_cnn_forward.1} parent=1 // pred_region
      _
    $region5: #{simple_cnn_forward.1} parent=1 // pred_fallthru
      _
    // Predicated region
    $region6: #{simple_cnn_forward.1} parent=1 // pred_check
      _
    $region7: #{simple_cnn_forward.1} parent=1 // pred_check_branch
      %18 = sbr.rel (0) target = $region9
    $region8: #{simple_cnn_forward.1} parent=1 // pred_region
      _
    $region9: #{simple_cnn_forward.1} parent=1 // pred_fallthru
      _
    // Predicated region
    $region10: #{simple_cnn_forward.1} parent=1 // pred_check
      _
    $region11: #{simple_cnn_forward.1} parent=1 // pred_check_branch
      %20 = sbr.rel (0) target = $region13
    $region12: #{simple_cnn_forward.1} parent=1 // pred_region
      _
    $region13: #{simple_cnn_forward.1} parent=1 // pred_fallthru
      _
    // Predicated region
    $region14: #{simple_cnn_forward.1} parent=1 // pred_check
      _
    $region15: #{simple_cnn_forward.1} parent=1 // pred_check_branch
      %22 = sbr.rel (0) target = $region17
    $region16: #{simple_cnn_forward.1} parent=1 // pred_region
      _
    $region17: #{simple_cnn_forward.1} parent=1 // pred_fallthru
      _
    // Predicated region
    $region18: #{simple_cnn_forward.1} parent=1 // pred_check
      _
    $region19: #{simple_cnn_forward.1} parent=1 // pred_check_branch
      %24 = sbr.rel (0) target = $region21
    $region20: #{simple_cnn_forward.1} parent=1 // pred_region
      _
    $region21: #{simple_cnn_forward.1} parent=1 // pred_fallthru
      _
    // Predicated region
    $region22: #{simple_cnn_forward.1} parent=1 // pred_check
      _
    $region23: #{simple_cnn_forward.1} parent=1 // pred_check_branch
      %26 = sbr.rel (0) target = $region25
    $region24: #{simple_cnn_forward.1} parent=1 // pred_region
      _
    $region25: #{simple_cnn_forward.1} parent=1 // pred_fallthru
      _
    // Predicated region
    $region26: #{simple_cnn_forward.1} parent=1 // pred_check
      _
    $region27: #{simple_cnn_forward.1} parent=1 // pred_check_branch
      %28 = sbr.rel (0) target = $region29
    $region28: #{simple_cnn_forward.1} parent=1 // pred_region
      _
    $region29: #{simple_cnn_forward.1} parent=1 // pred_fallthru
      _
    // Predicated region
    $region30: #{simple_cnn_forward.1} parent=1 // pred_check
      _
    $region31: #{simple_cnn_forward.1} parent=1 // pred_check_branch
      %30 = sbr.rel (0) target = $region33
    $region32: #{simple_cnn_forward.1} parent=1 // pred_region
      _
    $region33: #{simple_cnn_forward.1} parent=1 // pred_fallthru
      _
    // Predicated region
    $region34: #{simple_cnn_forward.1} parent=1 // pred_check
      _
    $region35: #{simple_cnn_forward.1} parent=1 // pred_check_branch
      %32 = sbr.rel (0) target = $region37
    $region36: #{simple_cnn_forward.1} parent=1 // pred_region
      _
    $region37: #{simple_cnn_forward.1} parent=1 // pred_fallthru
      _
    %v33 = vld [vmem:[%s0] sm:$0xff]
    %v34 = vld [vmem:[%s0 + $0x8] sm:$0xff]
    %v35 = vld [vmem:[%s0 + $0x10] sm:$0xff]
    %v36 = vld [vmem:[%s0 + $0x18] sm:$0xff]
    %v37 = vld [vmem:[%s0 + $0x20] sm:$0xff]
    %v38 = vld [vmem:[%s0 + $0x28] sm:$0xff]
    %v39 = vld [vmem:[%s0 + $0x30] sm:$0xff]
    %v40 = vld [vmem:[%s0 + $0x38] sm:$0xff]
    %v41 = vld [vmem:[%s0 + $0x40] sm:$0xff]
    %v42 = vld [vmem:[%s0 + $0x48] sm:$0xff]
    %v43 = vld [vmem:[%s0 + $0x50] sm:$0xff]
    %v44 = vld [vmem:[%s0 + $0x58] sm:$0xff]
    %v45 = vld [vmem:[%s0 + $0x60] sm:$0xff]
    %v46 = vld [vmem:[%s0 + $0x68] sm:$0xff]
    %v47 = vld [vmem:[%s0 + $0x70] sm:$0xff]
    %v48 = vld [vmem:[%s0 + $0x78] sm:$0xff]
    %v49 = vld [vmem:[%s0 + $0x80] sm:$0xff]
    %v50 = vld [vmem:[%s0 + $0x88] sm:$0xff]
    %v51 = vld [vmem:[%s0 + $0x90] sm:$0xff]
    %v52 = vld [vmem:[%s0 + $0x98] sm:$0xff]
    %v53 = vld [vmem:[%s0 + $0xa0] sm:$0xff]
    %v54 = vld [vmem:[%s0 + $0xa8] sm:$0xff]
    %v55 = vld [vmem:[%s0 + $0xb0] sm:$0xff]
    %v56 = vld [vmem:[%s0 + $0xb8] sm:$0xff]
    %v57 = vld [vmem:[%s0 + $0xc0] sm:$0xff]
    %v58 = vld [vmem:[%s0 + $0xc8] sm:$0xff]
    %v59 = vld [vmem:[%s0 + $0xd0] sm:$0xff]
    %v60 = vld [vmem:[%s0 + $0xd8] sm:$0xff]
    %v61 = vld [vmem:[%s0 + $0xe0] sm:$0xff]
    %v62 = vld [vmem:[%s0 + $0xe8] sm:$0xff]
    %v63 = vld [vmem:[%s0 + $0xf0] sm:$0xff]
    %v64 = vld [vmem:[%s0 + $0xf8] sm:$0xff]
    %v65 = vld [vmem:[%s0 + $0x100] sm:$0xff]
    %v66 = vld [vmem:[%s0 + $0x108] sm:$0xff]
    %v67 = vld [vmem:[%s0 + $0x110] sm:$0xff]
    %v68 = vld [vmem:[%s0 + $0x118] sm:$0xff]
    %v69 = vld [vmem:[%s0 + $0x120] sm:$0xff]
    %v70 = vld [vmem:[%s0 + $0x128] sm:$0xff]
    %v71 = vld [vmem:[%s0 + $0x130] sm:$0xff]
    %v72 = vld [vmem:[%s0 + $0x138] sm:$0xff]
    %v73 = vld [vmem:[%s0 + $0x140] sm:$0xff]
    %v74 = vld [vmem:[%s0 + $0x148] sm:$0xff]
    %v75 = vld [vmem:[%s0 + $0x150] sm:$0xff]
    %v76 = vld [vmem:[%s0 + $0x158] sm:$0xff]
    %v77 = vld [vmem:[%s0 + $0x160] sm:$0xff]
    %v78 = vld [vmem:[%s0 + $0x168] sm:$0xff]
    %v79 = vld [vmem:[%s0 + $0x170] sm:$0xff]
    %v80 = vld [vmem:[%s0 + $0x178] sm:$0xff]
    %v81 = vld [vmem:[%s0 + $0x180] sm:$0xff]
    %v82 = vld [vmem:[%s0 + $0x188] sm:$0xff]
    %v83 = vld [vmem:[%s0 + $0x190] sm:$0xff]
    %v84 = vld [vmem:[%s0 + $0x198] sm:$0xff]
    %v85 = vld [vmem:[%s0 + $0x1a0] sm:$0xff]
    %v86 = vld [vmem:[%s0 + $0x1a8] sm:$0xff]
    %v87 = vld [vmem:[%s0 + $0x1b0] sm:$0xff]
    %v88 = vld [vmem:[%s0 + $0x1b8] sm:$0xff]
    %v89 = vld [vmem:[%s0 + $0x1c0] sm:$0xff]
    %v90 = vld [vmem:[%s0 + $0x1c8] sm:$0xff]
    %v91 = vld [vmem:[%s0 + $0x1d0] sm:$0xff]
    %v92 = vld [vmem:[%s0 + $0x1d8] sm:$0xff]
    %v93 = vld [vmem:[%s0 + $0x1e0] sm:$0xff]
    %v94 = vld [vmem:[%s0 + $0x1e8] sm:$0xff]
    %v95 = vld [vmem:[%s0 + $0x1f0] sm:$0xff]
    %v96 = vld [vmem:[%s0 + $0x1f8] sm:$0xff]
    %v97 = vld [vmem:[%s1] sm:$0xff]
    %v98 = vld [vmem:[%s1 + $0x8] sm:$0xff]
    %v99 = vld [vmem:[%s1 + $0x10] sm:$0xff]
    %v100 = vld [vmem:[%s1 + $0x18] sm:$0xff]
    %v101 = vld [vmem:[%s1 + $0x20] sm:$0xff]
    %v102 = vld [vmem:[%s1 + $0x28] sm:$0xff]
    %v103 = vld [vmem:[%s1 + $0x30] sm:$0xff]
    %v104 = vld [vmem:[%s1 + $0x38] sm:$0xff]
    %v105 = vld [vmem:[%s1 + $0x40] sm:$0xff]
    %v106 = vld [vmem:[%s1 + $0x48] sm:$0xff]
    %v107 = vld [vmem:[%s1 + $0x50] sm:$0xff]
    %v108 = vld [vmem:[%s1 + $0x58] sm:$0xff]
    %v109 = vld [vmem:[%s1 + $0x60] sm:$0xff]
    %v110 = vld [vmem:[%s1 + $0x68] sm:$0xff]
    %v111 = vld [vmem:[%s1 + $0x70] sm:$0xff]
    %v112 = vld [vmem:[%s1 + $0x78] sm:$0xff]
    %113 = vmatprep.subr.mxu0 0.0
    %114 = vmatpush1.msra.mxu0 %v97
    %115 = vmatprep.subr.mxu0 0.0
    %116 = vmatpush1.msra.mxu0 %v98
    %117 = vmatprep.subr.mxu0 0.0
    %118 = vmatpush1.msra.mxu0 %v99
    %119 = vmatprep.subr.mxu0 0.0
    %120 = vmatpush1.msra.mxu0 %v100
    %121 = vmatprep.subr.mxu0 0.0
    %122 = vmatpush1.msra.mxu0 %v101
    %123 = vmatprep.subr.mxu0 0.0
    %124 = vmatpush1.msra.mxu0 %v102
    %125 = vmatprep.subr.mxu0 0.0
    %126 = vmatpush1.msra.mxu0 %v103
    %127 = vmatprep.subr.mxu0 0.0
    %128 = vmatpush1.msra.mxu0 %v104
    %129 = vmatprep.subr.mxu0 0.0
    %130 = vmatpush1.msra.mxu0 %v105
    %131 = vmatprep.subr.mxu0 0.0
    %132 = vmatpush1.msra.mxu0 %v106
    %133 = vmatprep.subr.mxu0 0.0
    %134 = vmatpush1.msra.mxu0 %v107
    %135 = vmatprep.subr.mxu0 0.0
    %136 = vmatpush1.msra.mxu0 %v108
    %137 = vmatprep.subr.mxu0 0.0
    %138 = vmatpush1.msra.mxu0 %v109
    %139 = vmatprep.subr.mxu0 0.0
    %140 = vmatpush1.msra.mxu0 %v110
    %141 = vmatprep.subr.mxu0 0.0
    %142 = vmatpush1.msra.mxu0 %v111
    %143 = vmatprep.subr.mxu0 0.0
    %144 = vmatpush1.msra.mxu0 %v112
    %145 = vmatprep.subr.mxu0 0.0
    %146 = vmatpush1.msra.mxu0 0.0
    %147 = vmatprep.subr.mxu0 0.0
    %148 = vmatpush1.msra.mxu0 0.0
    %149 = vmatprep.subr.mxu0 0.0
    %150 = vmatpush1.msra.mxu0 0.0
    %151 = vmatprep.subr.mxu0 0.0
    %152 = vmatpush1.msra.mxu0 0.0
    %153 = vmatprep.subr.mxu0 0.0
    %154 = vmatpush1.msra.mxu0 0.0
    %155 = vmatprep.subr.mxu0 0.0
    %156 = vmatpush1.msra.mxu0 0.0
    %157 = vmatprep.subr.mxu0 0.0
    %158 = vmatpush1.msra.mxu0 0.0
    %159 = vmatprep.subr.mxu0 0.0
    %160 = vmatpush1.msra.mxu0 0.0
    %161 = vmatprep.subr.mxu0 0.0
    %162 = vmatpush1.msra.mxu0 0.0
    %163 = vmatprep.subr.mxu0 0.0
    %164 = vmatpush1.msra.mxu0 0.0
    %165 = vmatprep.subr.mxu0 0.0
    %166 = vmatpush1.msra.mxu0 0.0
    %167 = vmatprep.subr.mxu0 0.0
    %168 = vmatpush1.msra.mxu0 0.0
    %169 = vmatprep.subr.mxu0 0.0
    %170 = vmatpush1.msra.mxu0 0.0
    %171 = vmatprep.subr.mxu0 0.0
    %172 = vmatpush1.msra.mxu0 0.0
    %173 = vmatprep.subr.mxu0 0.0
    %174 = vmatpush1.msra.mxu0 0.0
    %175 = vmatprep.subr.mxu0 0.0
    %176 = vmatpush1.msra.mxu0 0.0
    %177 = vmatprep.mubr.f32.mxu0 0.0
    %178 = vmatmul.mubr.f32.gmra.mrb[0].mxu0 %v33
    %v179 = vpop.f32.mrb[0].mxu0
    %v180 = vadd.f32 0.0, %v179
    %v181 = vpop.f32.mrb[0].mxu0
    %182 = vmatprep.mubr.f32.mxu0 0.0
    %183 = vmatmul.mubr.f32.gmra.mrb[0].mxu0 %v34
    %v184 = vpop.f32.mrb[0].mxu0
    %v185 = vadd.f32 0.0, %v184
    %v186 = vpop.f32.mrb[0].mxu0
    %187 = vmatprep.mubr.f32.mxu0 0.0
    %188 = vmatmul.mubr.f32.gmra.mrb[0].mxu0 %v35
    %v189 = vpop.f32.mrb[0].mxu0
    %v190 = vadd.f32 0.0, %v189
    %v191 = vpop.f32.mrb[0].mxu0
    %192 = vmatprep.mubr.f32.mxu0 0.0
    %193 = vmatmul.mubr.f32.gmra.mrb[0].mxu0 %v36
    %v194 = vpop.f32.mrb[0].mxu0
    %v195 = vadd.f32 0.0, %v194
    %v196 = vpop.f32.mrb[0].mxu0
    %197 = vmatprep.mubr.f32.mxu0 0.0
    %198 = vmatmul.mubr.f32.gmra.mrb[0].mxu0 %v37
    %v199 = vpop.f32.mrb[0].mxu0
    %v200 = vadd.f32 0.0, %v199
    %v201 = vpop.f32.mrb[0].mxu0
    %202 = vmatprep.mubr.f32.mxu0 0.0
    %203 = vmatmul.mubr.f32.gmra.mrb[0].mxu0 %v38
    %v204 = vpop.f32.mrb[0].mxu0
    %v205 = vadd.f32 0.0, %v204
    %v206 = vpop.f32.mrb[0].mxu0
    %207 = vmatprep.mubr.f32.mxu0 0.0
    %208 = vmatmul.mubr.f32.gmra.mrb[0].mxu0 %v39
    %v209 = vpop.f32.mrb[0].mxu0
    %v210 = vadd.f32 0.0, %v209
    %v211 = vpop.f32.mrb[0].mxu0
    %212 = vmatprep.mubr.f32.mxu0 0.0
    %213 = vmatmul.mubr.f32.gmra.mrb[0].mxu0 %v40
    %v214 = vpop.f32.mrb[0].mxu0
    %v215 = vadd.f32 0.0, %v214
    %v216 = vpop.f32.mrb[0].mxu0
    %217 = vmatprep.mubr.f32.mxu0 0.0
    %218 = vmatmul.mubr.f32.gmra.mrb[0].mxu0 %v41
    %v219 = vpop.f32.mrb[0].mxu0
    %v220 = vadd.f32 0.0, %v219
    %v221 = vpop.f32.mrb[0].mxu0
    %222 = vmatprep.mubr.f32.mxu0 0.0
    %223 = vmatmul.mubr.f32.gmra.mrb[0].mxu0 %v42
    %v224 = vpop.f32.mrb[0].mxu0
    %v225 = vadd.f32 0.0, %v224
    %v226 = vpop.f32.mrb[0].mxu0
    %227 = vmatprep.mubr.f32.mxu0 0.0
    %228 = vmatmul.mubr.f32.gmra.mrb[0].mxu0 %v43
    %v229 = vpop.f32.mrb[0].mxu0
    %v230 = vadd.f32 0.0, %v229
    %v231 = vpop.f32.mrb[0].mxu0
    %232 = vmatprep.mubr.f32.mxu0 0.0
    %233 = vmatmul.mubr.f32.gmra.mrb[0].mxu0 %v44
    %v234 = vpop.f32.mrb[0].mxu0
    %v235 = vadd.f32 0.0, %v234
    %v236 = vpop.f32.mrb[0].mxu0
    %237 = vmatprep.mubr.f32.mxu0 0.0
    %238 = vmatmul.mubr.f32.gmra.mrb[0].mxu0 %v45
    %v239 = vpop.f32.mrb[0].mxu0
    %v240 = vadd.f32 0.0, %v239
    %v241 = vpop.f32.mrb[0].mxu0
    %242 = vmatprep.mubr.f32.mxu0 0.0
    %243 = vmatmul.mubr.f32.gmra.mrb[0].mxu0 %v46
    %v244 = vpop.f32.mrb[0].mxu0
    %v245 = vadd.f32 0.0, %v244
    %v246 = vpop.f32.mrb[0].mxu0
    %247 = vmatprep.mubr.f32.mxu0 0.0
    %248 = vmatmul.mubr.f32.gmra.mrb[0].mxu0 %v47
    %v249 = vpop.f32.mrb[0].mxu0
    %v250 = vadd.f32 0.0, %v249
    %v251 = vpop.f32.mrb[0].mxu0
    %252 = vmatprep.mubr.f32.mxu0 0.0
    %253 = vmatmul.mubr.f32.gmra.mrb[0].mxu0 %v48
    %v254 = vpop.f32.mrb[0].mxu0
    %v255 = vadd.f32 0.0, %v254
    %v256 = vpop.f32.mrb[0].mxu0
    %257 = vmatprep.mubr.f32.mxu0 0.0
    %258 = vmatmul.mubr.f32.gmra.mrb[0].mxu0 %v49
    %v259 = vpop.f32.mrb[0].mxu0
    %v260 = vadd.f32 0.0, %v259
    %v261 = vpop.f32.mrb[0].mxu0
    %262 = vmatprep.mubr.f32.mxu0 0.0
    %263 = vmatmul.mubr.f32.gmra.mrb[0].mxu0 %v50
    %v264 = vpop.f32.mrb[0].mxu0
    %v265 = vadd.f32 0.0, %v264
    %v266 = vpop.f32.mrb[0].mxu0
    %267 = vmatprep.mubr.f32.mxu0 0.0
    %268 = vmatmul.mubr.f32.gmra.mrb[0].mxu0 %v51
    %v269 = vpop.f32.mrb[0].mxu0
    %v270 = vadd.f32 0.0, %v269
    %v271 = vpop.f32.mrb[0].mxu0
    %272 = vmatprep.mubr.f32.mxu0 0.0
    %273 = vmatmul.mubr.f32.gmra.mrb[0].mxu0 %v52
    %v274 = vpop.f32.mrb[0].mxu0
    %v275 = vadd.f32 0.0, %v274
    %v276 = vpop.f32.mrb[0].mxu0
    %277 = vmatprep.mubr.f32.mxu0 0.0
    %278 = vmatmul.mubr.f32.gmra.mrb[0].mxu0 %v53
    %v279 = vpop.f32.mrb[0].mxu0
    %v280 = vadd.f32 0.0, %v279
    %v281 = vpop.f32.mrb[0].mxu0
    %282 = vmatprep.mubr.f32.mxu0 0.0
    %283 = vmatmul.mubr.f32.gmra.mrb[0].mxu0 %v54
    %v284 = vpop.f32.mrb[0].mxu0
    %v285 = vadd.f32 0.0, %v284
    %v286 = vpop.f32.mrb[0].mxu0
    %287 = vmatprep.mubr.f32.mxu0 0.0
    %288 = vmatmul.mubr.f32.gmra.mrb[0].mxu0 %v55
    %v289 = vpop.f32.mrb[0].mxu0
    %v290 = vadd.f32 0.0, %v289
    %v291 = vpop.f32.mrb[0].mxu0
    %292 = vmatprep.mubr.f32.mxu0 0.0
    %293 = vmatmul.mubr.f32.gmra.mrb[0].mxu0 %v56
    %v294 = vpop.f32.mrb[0].mxu0
    %v295 = vadd.f32 0.0, %v294
    %v296 = vpop.f32.mrb[0].mxu0
    %297 = vmatprep.mubr.f32.mxu0 0.0
    %298 = vmatmul.mubr.f32.gmra.mrb[0].mxu0 %v57
    %v299 = vpop.f32.mrb[0].mxu0
    %v300 = vadd.f32 0.0, %v299
    %v301 = vpop.f32.mrb[0].mxu0
    %302 = vmatprep.mubr.f32.mxu0 0.0
    %303 = vmatmul.mubr.f32.gmra.mrb[0].mxu0 %v58
    %v304 = vpop.f32.mrb[0].mxu0
    %v305 = vadd.f32 0.0, %v304
    %v306 = vpop.f32.mrb[0].mxu0
    %307 = vmatprep.mubr.f32.mxu0 0.0
    %308 = vmatmul.mubr.f32.gmra.mrb[0].mxu0 %v59
    %v309 = vpop.f32.mrb[0].mxu0
    %v310 = vadd.f32 0.0, %v309
    %v311 = vpop.f32.mrb[0].mxu0
    %312 = vmatprep.mubr.f32.mxu0 0.0
    %313 = vmatmul.mubr.f32.gmra.mrb[0].mxu0 %v60
    %v314 = vpop.f32.mrb[0].mxu0
    %v315 = vadd.f32 0.0, %v314
    %v316 = vpop.f32.mrb[0].mxu0
    %317 = vmatprep.mubr.f32.mxu0 0.0
    %318 = vmatmul.mubr.f32.gmra.mrb[0].mxu0 %v61
    %v319 = vpop.f32.mrb[0].mxu0
    %v320 = vadd.f32 0.0, %v319
    %v321 = vpop.f32.mrb[0].mxu0
    %322 = vmatprep.mubr.f32.mxu0 0.0
    %323 = vmatmul.mubr.f32.gmra.mrb[0].mxu0 %v62
    %v324 = vpop.f32.mrb[0].mxu0
    %v325 = vadd.f32 0.0, %v324
    %v326 = vpop.f32.mrb[0].mxu0
    %327 = vmatprep.mubr.f32.mxu0 0.0
    %328 = vmatmul.mubr.f32.gmra.mrb[0].mxu0 %v63
    %v329 = vpop.f32.mrb[0].mxu0
    %v330 = vadd.f32 0.0, %v329
    %v331 = vpop.f32.mrb[0].mxu0
    %332 = vmatprep.mubr.f32.mxu0 0.0
    %333 = vmatmul.mubr.f32.gmra.mrb[0].mxu0 %v64
    %v334 = vpop.f32.mrb[0].mxu0
    %v335 = vadd.f32 0.0, %v334
    %v336 = vpop.f32.mrb[0].mxu0
    %337 = vmatprep.mubr.f32.mxu0 0.0
    %338 = vmatmul.mubr.f32.gmra.mrb[0].mxu0 %v65
    %v339 = vpop.f32.mrb[0].mxu0
    %v340 = vadd.f32 0.0, %v339
    %v341 = vpop.f32.mrb[0].mxu0
    %342 = vmatprep.mubr.f32.mxu0 0.0
    %343 = vmatmul.mubr.f32.gmra.mrb[0].mxu0 %v66
    %v344 = vpop.f32.mrb[0].mxu0
    %v345 = vadd.f32 0.0, %v344
    %v346 = vpop.f32.mrb[0].mxu0
    %347 = vmatprep.mubr.f32.mxu0 0.0
    %348 = vmatmul.mubr.f32.gmra.mrb[0].mxu0 %v67
    %v349 = vpop.f32.mrb[0].mxu0
    %v350 = vadd.f32 0.0, %v349
    %v351 = vpop.f32.mrb[0].mxu0
    %352 = vmatprep.mubr.f32.mxu0 0.0
    %353 = vmatmul.mubr.f32.gmra.mrb[0].mxu0 %v68
    %v354 = vpop.f32.mrb[0].mxu0
    %v355 = vadd.f32 0.0, %v354
    %v356 = vpop.f32.mrb[0].mxu0
    %357 = vmatprep.mubr.f32.mxu0 0.0
    %358 = vmatmul.mubr.f32.gmra.mrb[0].mxu0 %v69
    %v359 = vpop.f32.mrb[0].mxu0
    %v360 = vadd.f32 0.0, %v359
    %v361 = vpop.f32.mrb[0].mxu0
    %362 = vmatprep.mubr.f32.mxu0 0.0
    %363 = vmatmul.mubr.f32.gmra.mrb[0].mxu0 %v70
    %v364 = vpop.f32.mrb[0].mxu0
    %v365 = vadd.f32 0.0, %v364
    %v366 = vpop.f32.mrb[0].mxu0
    %367 = vmatprep.mubr.f32.mxu0 0.0
    %368 = vmatmul.mubr.f32.gmra.mrb[0].mxu0 %v71
    %v369 = vpop.f32.mrb[0].mxu0
    %v370 = vadd.f32 0.0, %v369
    %v371 = vpop.f32.mrb[0].mxu0
    %372 = vmatprep.mubr.f32.mxu0 0.0
    %373 = vmatmul.mubr.f32.gmra.mrb[0].mxu0 %v72
    %v374 = vpop.f32.mrb[0].mxu0
    %v375 = vadd.f32 0.0, %v374
    %v376 = vpop.f32.mrb[0].mxu0
    %377 = vmatprep.mubr.f32.mxu0 0.0
    %378 = vmatmul.mubr.f32.gmra.mrb[0].mxu0 %v73
    %v379 = vpop.f32.mrb[0].mxu0
    %v380 = vadd.f32 0.0, %v379
    %v381 = vpop.f32.mrb[0].mxu0
    %382 = vmatprep.mubr.f32.mxu0 0.0
    %383 = vmatmul.mubr.f32.gmra.mrb[0].mxu0 %v74
    %v384 = vpop.f32.mrb[0].mxu0
    %v385 = vadd.f32 0.0, %v384
    %v386 = vpop.f32.mrb[0].mxu0
    %387 = vmatprep.mubr.f32.mxu0 0.0
    %388 = vmatmul.mubr.f32.gmra.mrb[0].mxu0 %v75
    %v389 = vpop.f32.mrb[0].mxu0
    %v390 = vadd.f32 0.0, %v389
    %v391 = vpop.f32.mrb[0].mxu0
    %392 = vmatprep.mubr.f32.mxu0 0.0
    %393 = vmatmul.mubr.f32.gmra.mrb[0].mxu0 %v76
    %v394 = vpop.f32.mrb[0].mxu0
    %v395 = vadd.f32 0.0, %v394
    %v396 = vpop.f32.mrb[0].mxu0
    %397 = vmatprep.mubr.f32.mxu0 0.0
    %398 = vmatmul.mubr.f32.gmra.mrb[0].mxu0 %v77
    %v399 = vpop.f32.mrb[0].mxu0
    %v400 = vadd.f32 0.0, %v399
    %v401 = vpop.f32.mrb[0].mxu0
    %402 = vmatprep.mubr.f32.mxu0 0.0
    %403 = vmatmul.mubr.f32.gmra.mrb[0].mxu0 %v78
    %v404 = vpop.f32.mrb[0].mxu0
    %v405 = vadd.f32 0.0, %v404
    %v406 = vpop.f32.mrb[0].mxu0
    %407 = vmatprep.mubr.f32.mxu0 0.0
    %408 = vmatmul.mubr.f32.gmra.mrb[0].mxu0 %v79
    %v409 = vpop.f32.mrb[0].mxu0
    %v410 = vadd.f32 0.0, %v409
    %v411 = vpop.f32.mrb[0].mxu0
    %412 = vmatprep.mubr.f32.mxu0 0.0
    %413 = vmatmul.mubr.f32.gmra.mrb[0].mxu0 %v80
    %v414 = vpop.f32.mrb[0].mxu0
    %v415 = vadd.f32 0.0, %v414
    %v416 = vpop.f32.mrb[0].mxu0
    %417 = vmatprep.mubr.f32.mxu0 0.0
    %418 = vmatmul.mubr.f32.gmra.mrb[0].mxu0 %v81
    %v419 = vpop.f32.mrb[0].mxu0
    %v420 = vadd.f32 0.0, %v419
    %v421 = vpop.f32.mrb[0].mxu0
    %422 = vmatprep.mubr.f32.mxu0 0.0
    %423 = vmatmul.mubr.f32.gmra.mrb[0].mxu0 %v82
    %v424 = vpop.f32.mrb[0].mxu0
    %v425 = vadd.f32 0.0, %v424
    %v426 = vpop.f32.mrb[0].mxu0
    %427 = vmatprep.mubr.f32.mxu0 0.0
    %428 = vmatmul.mubr.f32.gmra.mrb[0].mxu0 %v83
    %v429 = vpop.f32.mrb[0].mxu0
    %v430 = vadd.f32 0.0, %v429
    %v431 = vpop.f32.mrb[0].mxu0
    %432 = vmatprep.mubr.f32.mxu0 0.0
    %433 = vmatmul.mubr.f32.gmra.mrb[0].mxu0 %v84
    %v434 = vpop.f32.mrb[0].mxu0
    %v435 = vadd.f32 0.0, %v434
    %v436 = vpop.f32.mrb[0].mxu0
    %437 = vmatprep.mubr.f32.mxu0 0.0
    %438 = vmatmul.mubr.f32.gmra.mrb[0].mxu0 %v85
    %v439 = vpop.f32.mrb[0].mxu0
    %v440 = vadd.f32 0.0, %v439
    %v441 = vpop.f32.mrb[0].mxu0
    %442 = vmatprep.mubr.f32.mxu0 0.0
    %443 = vmatmul.mubr.f32.gmra.mrb[0].mxu0 %v86
    %v444 = vpop.f32.mrb[0].mxu0
    %v445 = vadd.f32 0.0, %v444
    %v446 = vpop.f32.mrb[0].mxu0
    %447 = vmatprep.mubr.f32.mxu0 0.0
    %448 = vmatmul.mubr.f32.gmra.mrb[0].mxu0 %v87
    %v449 = vpop.f32.mrb[0].mxu0
    %v450 = vadd.f32 0.0, %v449
    %v451 = vpop.f32.mrb[0].mxu0
    %452 = vmatprep.mubr.f32.mxu0 0.0
    %453 = vmatmul.mubr.f32.gmra.mrb[0].mxu0 %v88
    %v454 = vpop.f32.mrb[0].mxu0
    %v455 = vadd.f32 0.0, %v454
    %v456 = vpop.f32.mrb[0].mxu0
    %457 = vmatprep.mubr.f32.mxu0 0.0
    %458 = vmatmul.mubr.f32.gmra.mrb[0].mxu0 %v89
    %v459 = vpop.f32.mrb[0].mxu0
    %v460 = vadd.f32 0.0, %v459
    %v461 = vpop.f32.mrb[0].mxu0
    %462 = vmatprep.mubr.f32.mxu0 0.0
    %463 = vmatmul.mubr.f32.gmra.mrb[0].mxu0 %v90
    %v464 = vpop.f32.mrb[0].mxu0
    %v465 = vadd.f32 0.0, %v464
    %v466 = vpop.f32.mrb[0].mxu0
    %467 = vmatprep.mubr.f32.mxu0 0.0
    %468 = vmatmul.mubr.f32.gmra.mrb[0].mxu0 %v91
    %v469 = vpop.f32.mrb[0].mxu0
    %v470 = vadd.f32 0.0, %v469
    %v471 = vpop.f32.mrb[0].mxu0
    %472 = vmatprep.mubr.f32.mxu0 0.0
    %473 = vmatmul.mubr.f32.gmra.mrb[0].mxu0 %v92
    %v474 = vpop.f32.mrb[0].mxu0
    %v475 = vadd.f32 0.0, %v474
    %v476 = vpop.f32.mrb[0].mxu0
    %477 = vmatprep.mubr.f32.mxu0 0.0
    %478 = vmatmul.mubr.f32.gmra.mrb[0].mxu0 %v93
    %v479 = vpop.f32.mrb[0].mxu0
    %v480 = vadd.f32 0.0, %v479
    %v481 = vpop.f32.mrb[0].mxu0
    %482 = vmatprep.mubr.f32.mxu0 0.0
    %483 = vmatmul.mubr.f32.gmra.mrb[0].mxu0 %v94
    %v484 = vpop.f32.mrb[0].mxu0
    %v485 = vadd.f32 0.0, %v484
    %v486 = vpop.f32.mrb[0].mxu0
    %487 = vmatprep.mubr.f32.mxu0 0.0
    %488 = vmatmul.mubr.f32.gmra.mrb[0].mxu0 %v95
    %v489 = vpop.f32.mrb[0].mxu0
    %v490 = vadd.f32 0.0, %v489
    %v491 = vpop.f32.mrb[0].mxu0
    %492 = vmatprep.mubr.f32.mxu0 0.0
    %493 = vmatmul.mubr.f32.gmra.mrb[0].mxu0 %v96
    %v494 = vpop.f32.mrb[0].mxu0
    %v495 = vadd.f32 0.0, %v494
    %v496 = vpop.f32.mrb[0].mxu0
    %497 = vdwg.mxu0
    %498 = vst [vmem:[#allocation2] sm:$0xff] %v180
    %499 = vst [vmem:[#allocation2 + $0x8] sm:$0xff] %v185
    %500 = vst [vmem:[#allocation2 + $0x10] sm:$0xff] %v190
    %501 = vst [vmem:[#allocation2 + $0x18] sm:$0xff] %v195
    %502 = vst [vmem:[#allocation2 + $0x20] sm:$0xff] %v200
    %503 = vst [vmem:[#allocation2 + $0x28] sm:$0xff] %v205
    %504 = vst [vmem:[#allocation2 + $0x30] sm:$0xff] %v210
    %505 = vst [vmem:[#allocation2 + $0x38] sm:$0xff] %v215
    %506 = vst [vmem:[#allocation2 + $0x40] sm:$0xff] %v220
    %507 = vst [vmem:[#allocation2 + $0x48] sm:$0xff] %v225
    %508 = vst [vmem:[#allocation2 + $0x50] sm:$0xff] %v230
    %509 = vst [vmem:[#allocation2 + $0x58] sm:$0xff] %v235
    %510 = vst [vmem:[#allocation2 + $0x60] sm:$0xff] %v240
    %511 = vst [vmem:[#allocation2 + $0x68] sm:$0xff] %v245
    %512 = vst [vmem:[#allocation2 + $0x70] sm:$0xff] %v250
    %513 = vst [vmem:[#allocation2 + $0x78] sm:$0xff] %v255
    %514 = vst [vmem:[#allocation2 + $0x80] sm:$0xff] %v260
    %515 = vst [vmem:[#allocation2 + $0x88] sm:$0xff] %v265
    %516 = vst [vmem:[#allocation2 + $0x90] sm:$0xff] %v270
    %517 = vst [vmem:[#allocation2 + $0x98] sm:$0xff] %v275
    %518 = vst [vmem:[#allocation2 + $0xa0] sm:$0xff] %v280
    %519 = vst [vmem:[#allocation2 + $0xa8] sm:$0xff] %v285
    %520 = vst [vmem:[#allocation2 + $0xb0] sm:$0xff] %v290
    %521 = vst [vmem:[#allocation2 + $0xb8] sm:$0xff] %v295
    %522 = vst [vmem:[#allocation2 + $0xc0] sm:$0xff] %v300
    %523 = vst [vmem:[#allocation2 + $0xc8] sm:$0xff] %v305
    %524 = vst [vmem:[#allocation2 + $0xd0] sm:$0xff] %v310
    %525 = vst [vmem:[#allocation2 + $0xd8] sm:$0xff] %v315
    %526 = vst [vmem:[#allocation2 + $0xe0] sm:$0xff] %v320
    %527 = vst [vmem:[#allocation2 + $0xe8] sm:$0xff] %v325
    %528 = vst [vmem:[#allocation2 + $0xf0] sm:$0xff] %v330
    %529 = vst [vmem:[#allocation2 + $0xf8] sm:$0xff] %v335
    %530 = vst [vmem:[#allocation2 + $0x100] sm:$0xff] %v340
    %531 = vst [vmem:[#allocation2 + $0x108] sm:$0xff] %v345
    %532 = vst [vmem:[#allocation2 + $0x110] sm:$0xff] %v350
    %533 = vst [vmem:[#allocation2 + $0x118] sm:$0xff] %v355
    %534 = vst [vmem:[#allocation2 + $0x120] sm:$0xff] %v360
    %535 = vst [vmem:[#allocation2 + $0x128] sm:$0xff] %v365
    %536 = vst [vmem:[#allocation2 + $0x130] sm:$0xff] %v370
    %537 = vst [vmem:[#allocation2 + $0x138] sm:$0xff] %v375
    %538 = vst [vmem:[#allocation2 + $0x140] sm:$0xff] %v380
    %539 = vst [vmem:[#allocation2 + $0x148] sm:$0xff] %v385
    %540 = vst [vmem:[#allocation2 + $0x150] sm:$0xff] %v390
    %541 = vst [vmem:[#allocation2 + $0x158] sm:$0xff] %v395
    %542 = vst [vmem:[#allocation2 + $0x160] sm:$0xff] %v400
    %543 = vst [vmem:[#allocation2 + $0x168] sm:$0xff] %v405
    %544 = vst [vmem:[#allocation2 + $0x170] sm:$0xff] %v410
    %545 = vst [vmem:[#allocation2 + $0x178] sm:$0xff] %v415
    %546 = vst [vmem:[#allocation2 + $0x180] sm:$0xff] %v420
    %547 = vst [vmem:[#allocation2 + $0x188] sm:$0xff] %v425
    %548 = vst [vmem:[#allocation2 + $0x190] sm:$0xff] %v430
    %549 = vst [vmem:[#allocation2 + $0x198] sm:$0xff] %v435
    %550 = vst [vmem:[#allocation2 + $0x1a0] sm:$0xff] %v440
    %551 = vst [vmem:[#allocation2 + $0x1a8] sm:$0xff] %v445
    %552 = vst [vmem:[#allocation2 + $0x1b0] sm:$0xff] %v450
    %553 = vst [vmem:[#allocation2 + $0x1b8] sm:$0xff] %v455
    %554 = vst [vmem:[#allocation2 + $0x1c0] sm:$0xff] %v460
    %555 = vst [vmem:[#allocation2 + $0x1c8] sm:$0xff] %v465
    %556 = vst [vmem:[#allocation2 + $0x1d0] sm:$0xff] %v470
    %557 = vst [vmem:[#allocation2 + $0x1d8] sm:$0xff] %v475
    %558 = vst [vmem:[#allocation2 + $0x1e0] sm:$0xff] %v480
    %559 = vst [vmem:[#allocation2 + $0x1e8] sm:$0xff] %v485
    %560 = vst [vmem:[#allocation2 + $0x1f0] sm:$0xff] %v490
    %561 = vst [vmem:[#allocation2 + $0x1f8] sm:$0xff] %v495
    %v562 = vld [vmem:[%s2] sm:$0x1]
    %v563 = vld [vmem:[#allocation2] sm:$0xff]
    %v564 = vld [vmem:[#allocation2 + $0x8] sm:$0xff]
    %v565 = vld [vmem:[#allocation2 + $0x20] sm:$0xff]
    %v566 = vld [vmem:[#allocation2 + $0x28] sm:$0xff]
    %v567 = vld [vmem:[#allocation2 + $0x40] sm:$0xff]
    %v568 = vld [vmem:[#allocation2 + $0x48] sm:$0xff]
    %v569 = vld [vmem:[#allocation2 + $0x60] sm:$0xff]
    %v570 = vld [vmem:[#allocation2 + $0x68] sm:$0xff]
    %v571 = vld [vmem:[#allocation2 + $0x80] sm:$0xff]
    %v572 = vld [vmem:[#allocation2 + $0x88] sm:$0xff]
    %v573 = vld [vmem:[#allocation2 + $0xa0] sm:$0xff]
    %v574 = vld [vmem:[#allocation2 + $0xa8] sm:$0xff]
    %v575 = vld [vmem:[#allocation2 + $0xc0] sm:$0xff]
    %v576 = vld [vmem:[#allocation2 + $0xc8] sm:$0xff]
    %v577 = vld [vmem:[#allocation2 + $0xe0] sm:$0xff]
    %v578 = vld [vmem:[#allocation2 + $0xe8] sm:$0xff]
    %v579 = vld [vmem:[#allocation2 + $0x100] sm:$0xff]
    %v580 = vld [vmem:[#allocation2 + $0x108] sm:$0xff]
    %v581 = vld [vmem:[#allocation2 + $0x120] sm:$0xff]
    %v582 = vld [vmem:[#allocation2 + $0x128] sm:$0xff]
    %v583 = vld [vmem:[#allocation2 + $0x140] sm:$0xff]
    %v584 = vld [vmem:[#allocation2 + $0x148] sm:$0xff]
    %v585 = vld [vmem:[#allocation2 + $0x160] sm:$0xff]
    %v586 = vld [vmem:[#allocation2 + $0x168] sm:$0xff]
    %v587 = vld [vmem:[#allocation2 + $0x180] sm:$0xff]
    %v588 = vld [vmem:[#allocation2 + $0x188] sm:$0xff]
    %v589 = vld [vmem:[#allocation2 + $0x1a0] sm:$0xff]
    %v590 = vld [vmem:[#allocation2 + $0x1a8] sm:$0xff]
    %v591 = vld [vmem:[#allocation2 + $0x1c0] sm:$0xff]
    %v592 = vld [vmem:[#allocation2 + $0x1c8] sm:$0xff]
    %v593 = vld [vmem:[#allocation2 + $0x1e0] sm:$0xff]
    %v594 = vld [vmem:[#allocation2 + $0x1e8] sm:$0xff]
    %v596 = vlaneseq
    %v597 = vshrl.u32 %v596, 7
    %v598 = vsub.s32 0, %v597
    %v599 = vrot.slane %v562, %v598
    %v601 = vadd.f32 %v563, %v599
    %v602 = vadd.f32 %v564, %v599
    %v603 = vadd.f32 %v565, %v599
    %v604 = vadd.f32 %v566, %v599
    %v605 = vadd.f32 %v567, %v599
    %v606 = vadd.f32 %v568, %v599
    %v607 = vadd.f32 %v569, %v599
    %v608 = vadd.f32 %v570, %v599
    %v609 = vadd.f32 %v571, %v599
    %v610 = vadd.f32 %v572, %v599
    %v611 = vadd.f32 %v573, %v599
    %v612 = vadd.f32 %v574, %v599
    %v613 = vadd.f32 %v575, %v599
    %v614 = vadd.f32 %v576, %v599
    %v615 = vadd.f32 %v577, %v599
    %v616 = vadd.f32 %v578, %v599
    %v617 = vadd.f32 %v579, %v599
    %v618 = vadd.f32 %v580, %v599
    %v619 = vadd.f32 %v581, %v599
    %v620 = vadd.f32 %v582, %v599
    %v621 = vadd.f32 %v583, %v599
    %v622 = vadd.f32 %v584, %v599
    %v623 = vadd.f32 %v585, %v599
    %v624 = vadd.f32 %v586, %v599
    %v625 = vadd.f32 %v587, %v599
    %v626 = vadd.f32 %v588, %v599
    %v627 = vadd.f32 %v589, %v599
    %v628 = vadd.f32 %v590, %v599
    %v629 = vadd.f32 %v591, %v599
    %v630 = vadd.f32 %v592, %v599
    %v631 = vadd.f32 %v593, %v599
    %v632 = vadd.f32 %v594, %v599
    %v633 = vmax.f32 %v601, 0.0
    %v634 = vmax.f32 %v602, 0.0
    %v635 = vmax.f32 %v603, 0.0
    %v636 = vmax.f32 %v604, 0.0
    %v637 = vmax.f32 %v605, 0.0
    %v638 = vmax.f32 %v606, 0.0
    %v639 = vmax.f32 %v607, 0.0
    %v640 = vmax.f32 %v608, 0.0
    %v641 = vmax.f32 %v609, 0.0
    %v642 = vmax.f32 %v610, 0.0
    %v643 = vmax.f32 %v611, 0.0
    %v644 = vmax.f32 %v612, 0.0
    %v645 = vmax.f32 %v613, 0.0
    %v646 = vmax.f32 %v614, 0.0
    %v647 = vmax.f32 %v615, 0.0
    %v648 = vmax.f32 %v616, 0.0
    %v649 = vmax.f32 %v617, 0.0
    %v650 = vmax.f32 %v618, 0.0
    %v651 = vmax.f32 %v619, 0.0
    %v652 = vmax.f32 %v620, 0.0
    %v653 = vmax.f32 %v621, 0.0
    %v654 = vmax.f32 %v622, 0.0
    %v655 = vmax.f32 %v623, 0.0
    %v656 = vmax.f32 %v624, 0.0
    %v657 = vmax.f32 %v625, 0.0
    %v658 = vmax.f32 %v626, 0.0
    %v659 = vmax.f32 %v627, 0.0
    %v660 = vmax.f32 %v628, 0.0
    %v661 = vmax.f32 %v629, 0.0
    %v662 = vmax.f32 %v630, 0.0
    %v663 = vmax.f32 %v631, 0.0
    %v664 = vmax.f32 %v632, 0.0
    %s665 = scalar_lea.vmem [#allocation2], 16
    %v666 = vld [vmem:[%s665] sm:$0xff]
    %v667 = vld [vmem:[%s665 + $0x8] sm:$0xff]
    %v668 = vld [vmem:[%s665 + $0x20] sm:$0xff]
    %v669 = vld [vmem:[%s665 + $0x28] sm:$0xff]
    %v670 = vld [vmem:[%s665 + $0x40] sm:$0xff]
    %v671 = vld [vmem:[%s665 + $0x48] sm:$0xff]
    %v672 = vld [vmem:[%s665 + $0x60] sm:$0xff]
    %v673 = vld [vmem:[%s665 + $0x68] sm:$0xff]
    %v674 = vld [vmem:[%s665 + $0x80] sm:$0xff]
    %v675 = vld [vmem:[%s665 + $0x88] sm:$0xff]
    %v676 = vld [vmem:[%s665 + $0xa0] sm:$0xff]
    %v677 = vld [vmem:[%s665 + $0xa8] sm:$0xff]
    %v678 = vld [vmem:[%s665 + $0xc0] sm:$0xff]
    %v679 = vld [vmem:[%s665 + $0xc8] sm:$0xff]
    %v680 = vld [vmem:[%s665 + $0xe0] sm:$0xff]
    %v681 = vld [vmem:[%s665 + $0xe8] sm:$0xff]
    %v682 = vld [vmem:[%s665 + $0x100] sm:$0xff]
    %v683 = vld [vmem:[%s665 + $0x108] sm:$0xff]
    %v684 = vld [vmem:[%s665 + $0x120] sm:$0xff]
    %v685 = vld [vmem:[%s665 + $0x128] sm:$0xff]
    %v686 = vld [vmem:[%s665 + $0x140] sm:$0xff]
    %v687 = vld [vmem:[%s665 + $0x148] sm:$0xff]
    %v688 = vld [vmem:[%s665 + $0x160] sm:$0xff]
    %v689 = vld [vmem:[%s665 + $0x168] sm:$0xff]
    %v690 = vld [vmem:[%s665 + $0x180] sm:$0xff]
    %v691 = vld [vmem:[%s665 + $0x188] sm:$0xff]
    %v692 = vld [vmem:[%s665 + $0x1a0] sm:$0xff]
    %v693 = vld [vmem:[%s665 + $0x1a8] sm:$0xff]
    %v694 = vld [vmem:[%s665 + $0x1c0] sm:$0xff]
    %v695 = vld [vmem:[%s665 + $0x1c8] sm:$0xff]
    %v696 = vld [vmem:[%s665 + $0x1e0] sm:$0xff]
    %v697 = vld [vmem:[%s665 + $0x1e8] sm:$0xff]
    %v698 = vadd.f32 %v666, %v599
    %v699 = vadd.f32 %v667, %v599
    %v700 = vadd.f32 %v668, %v599
    %v701 = vadd.f32 %v669, %v599
    %v702 = vadd.f32 %v670, %v599
    %v703 = vadd.f32 %v671, %v599
    %v704 = vadd.f32 %v672, %v599
    %v705 = vadd.f32 %v673, %v599
    %v706 = vadd.f32 %v674, %v599
    %v707 = vadd.f32 %v675, %v599
    %v708 = vadd.f32 %v676, %v599
    %v709 = vadd.f32 %v677, %v599
    %v710 = vadd.f32 %v678, %v599
    %v711 = vadd.f32 %v679, %v599
    %v712 = vadd.f32 %v680, %v599
    %v713 = vadd.f32 %v681, %v599
    %v714 = vadd.f32 %v682, %v599
    %v715 = vadd.f32 %v683, %v599
    %v716 = vadd.f32 %v684, %v599
    %v717 = vadd.f32 %v685, %v599
    %v718 = vadd.f32 %v686, %v599
    %v719 = vadd.f32 %v687, %v599
    %v720 = vadd.f32 %v688, %v599
    %v721 = vadd.f32 %v689, %v599
    %v722 = vadd.f32 %v690, %v599
    %v723 = vadd.f32 %v691, %v599
    %v724 = vadd.f32 %v692, %v599
    %v725 = vadd.f32 %v693, %v599
    %v726 = vadd.f32 %v694, %v599
    %v727 = vadd.f32 %v695, %v599
    %v728 = vadd.f32 %v696, %v599
    %v729 = vadd.f32 %v697, %v599
    %v730 = vmax.f32 %v698, 0.0
    %v731 = vmax.f32 %v699, 0.0
    %v732 = vmax.f32 %v700, 0.0
    %v733 = vmax.f32 %v701, 0.0
    %v734 = vmax.f32 %v702, 0.0
    %v735 = vmax.f32 %v703, 0.0
    %v736 = vmax.f32 %v704, 0.0
    %v737 = vmax.f32 %v705, 0.0
    %v738 = vmax.f32 %v706, 0.0
    %v739 = vmax.f32 %v707, 0.0
    %v740 = vmax.f32 %v708, 0.0
    %v741 = vmax.f32 %v709, 0.0
    %v742 = vmax.f32 %v710, 0.0
    %v743 = vmax.f32 %v711, 0.0
    %v744 = vmax.f32 %v712, 0.0
    %v745 = vmax.f32 %v713, 0.0
    %v746 = vmax.f32 %v714, 0.0
    %v747 = vmax.f32 %v715, 0.0
    %v748 = vmax.f32 %v716, 0.0
    %v749 = vmax.f32 %v717, 0.0
    %v750 = vmax.f32 %v718, 0.0
    %v751 = vmax.f32 %v719, 0.0
    %v752 = vmax.f32 %v720, 0.0
    %v753 = vmax.f32 %v721, 0.0
    %v754 = vmax.f32 %v722, 0.0
    %v755 = vmax.f32 %v723, 0.0
    %v756 = vmax.f32 %v724, 0.0
    %v757 = vmax.f32 %v725, 0.0
    %v758 = vmax.f32 %v726, 0.0
    %v759 = vmax.f32 %v727, 0.0
    %v760 = vmax.f32 %v728, 0.0
    %v761 = vmax.f32 %v729, 0.0
    %v762 = vadd.f32 %v633, %v730
    %v763 = vadd.f32 %v634, %v731
    %v764 = vadd.f32 %v635, %v732
    %v765 = vadd.f32 %v636, %v733
    %v766 = vadd.f32 %v637, %v734
    %v767 = vadd.f32 %v638, %v735
    %v768 = vadd.f32 %v639, %v736
    %v769 = vadd.f32 %v640, %v737
    %v770 = vadd.f32 %v641, %v738
    %v771 = vadd.f32 %v642, %v739
    %v772 = vadd.f32 %v643, %v740
    %v773 = vadd.f32 %v644, %v741
    %v774 = vadd.f32 %v645, %v742
    %v775 = vadd.f32 %v646, %v743
    %v776 = vadd.f32 %v647, %v744
    %v777 = vadd.f32 %v648, %v745
    %v778 = vadd.f32 %v649, %v746
    %v779 = vadd.f32 %v650, %v747
    %v780 = vadd.f32 %v651, %v748
    %v781 = vadd.f32 %v652, %v749
    %v782 = vadd.f32 %v653, %v750
    %v783 = vadd.f32 %v654, %v751
    %v784 = vadd.f32 %v655, %v752
    %v785 = vadd.f32 %v656, %v753
    %v786 = vadd.f32 %v657, %v754
    %v787 = vadd.f32 %v658, %v755
    %v788 = vadd.f32 %v659, %v756
    %v789 = vadd.f32 %v660, %v757
    %v790 = vadd.f32 %v661, %v758
    %v791 = vadd.f32 %v662, %v759
    %v792 = vadd.f32 %v663, %v760
    %v793 = vadd.f32 %v664, %v761
    %794 = vst [vmem:[#allocation3] sm:$0xff] %v762
    %795 = vst [vmem:[#allocation3 + $0x8] sm:$0xff] %v763
    %796 = vst [vmem:[#allocation3 + $0x10] sm:$0xff] %v764
    %797 = vst [vmem:[#allocation3 + $0x18] sm:$0xff] %v765
    %798 = vst [vmem:[#allocation3 + $0x20] sm:$0xff] %v766
    %799 = vst [vmem:[#allocation3 + $0x28] sm:$0xff] %v767
    %800 = vst [vmem:[#allocation3 + $0x30] sm:$0xff] %v768
    %801 = vst [vmem:[#allocation3 + $0x38] sm:$0xff] %v769
    %802 = vst [vmem:[#allocation3 + $0x40] sm:$0xff] %v770
    %803 = vst [vmem:[#allocation3 + $0x48] sm:$0xff] %v771
    %804 = vst [vmem:[#allocation3 + $0x50] sm:$0xff] %v772
    %805 = vst [vmem:[#allocation3 + $0x58] sm:$0xff] %v773
    %806 = vst [vmem:[#allocation3 + $0x60] sm:$0xff] %v774
    %807 = vst [vmem:[#allocation3 + $0x68] sm:$0xff] %v775
    %808 = vst [vmem:[#allocation3 + $0x70] sm:$0xff] %v776
    %809 = vst [vmem:[#allocation3 + $0x78] sm:$0xff] %v777
    %810 = vst [vmem:[#allocation3 + $0x80] sm:$0xff] %v778
    %811 = vst [vmem:[#allocation3 + $0x88] sm:$0xff] %v779
    %812 = vst [vmem:[#allocation3 + $0x90] sm:$0xff] %v780
    %813 = vst [vmem:[#allocation3 + $0x98] sm:$0xff] %v781
    %814 = vst [vmem:[#allocation3 + $0xa0] sm:$0xff] %v782
    %815 = vst [vmem:[#allocation3 + $0xa8] sm:$0xff] %v783
    %816 = vst [vmem:[#allocation3 + $0xb0] sm:$0xff] %v784
    %817 = vst [vmem:[#allocation3 + $0xb8] sm:$0xff] %v785
    %818 = vst [vmem:[#allocation3 + $0xc0] sm:$0xff] %v786
    %819 = vst [vmem:[#allocation3 + $0xc8] sm:$0xff] %v787
    %820 = vst [vmem:[#allocation3 + $0xd0] sm:$0xff] %v788
    %821 = vst [vmem:[#allocation3 + $0xd8] sm:$0xff] %v789
    %822 = vst [vmem:[#allocation3 + $0xe0] sm:$0xff] %v790
    %823 = vst [vmem:[#allocation3 + $0xe8] sm:$0xff] %v791
    %824 = vst [vmem:[#allocation3 + $0xf0] sm:$0xff] %v792
    %825 = vst [vmem:[#allocation3 + $0xf8] sm:$0xff] %v793
    %v826 = vld [vmem:[#allocation3] ss:$2 sm:$0xff]
    %s827 = scalar_lea.vmem [#allocation3], 16
    %v828 = vld [vmem:[%s827] ss:$2 sm:$0xff]
    %s829 = scalar_lea.vmem [#allocation3], 32
    %v830 = vld [vmem:[%s829] ss:$2 sm:$0xff]
    %s831 = scalar_lea.vmem [#allocation3], 48
    %v832 = vld [vmem:[%s831] ss:$2 sm:$0xff]
    %s833 = scalar_lea.vmem [#allocation3], 64
    %v834 = vld [vmem:[%s833] ss:$2 sm:$0xff]
    %s835 = scalar_lea.vmem [#allocation3], 80
    %v836 = vld [vmem:[%s835] ss:$2 sm:$0xff]
    %s837 = scalar_lea.vmem [#allocation3], 96
    %v838 = vld [vmem:[%s837] ss:$2 sm:$0xff]
    %s839 = scalar_lea.vmem [#allocation3], 112
    %v840 = vld [vmem:[%s839] ss:$2 sm:$0xff]
    %s841 = scalar_lea.vmem [#allocation3], 128
    %v842 = vld [vmem:[%s841] ss:$2 sm:$0xff]
    %s843 = scalar_lea.vmem [#allocation3], 144
    %v844 = vld [vmem:[%s843] ss:$2 sm:$0xff]
    %s845 = scalar_lea.vmem [#allocation3], 160
    %v846 = vld [vmem:[%s845] ss:$2 sm:$0xff]
    %s847 = scalar_lea.vmem [#allocation3], 176
    %v848 = vld [vmem:[%s847] ss:$2 sm:$0xff]
    %s849 = scalar_lea.vmem [#allocation3], 192
    %v850 = vld [vmem:[%s849] ss:$2 sm:$0xff]
    %s851 = scalar_lea.vmem [#allocation3], 208
    %v852 = vld [vmem:[%s851] ss:$2 sm:$0xff]
    %s853 = scalar_lea.vmem [#allocation3], 224
    %v854 = vld [vmem:[%s853] ss:$2 sm:$0xff]
    %s855 = scalar_lea.vmem [#allocation3], 240
    %v856 = vld [vmem:[%s855] ss:$2 sm:$0xff]
    %s857 = scalar_lea.vmem [#allocation3], 1
    %v858 = vld [vmem:[%s857] ss:$2 sm:$0xff]
    %s859 = scalar_lea.vmem [#allocation3], 17
    %v860 = vld [vmem:[%s859] ss:$2 sm:$0xff]
    %s861 = scalar_lea.vmem [#allocation3], 33
    %v862 = vld [vmem:[%s861] ss:$2 sm:$0xff]
    %s863 = scalar_lea.vmem [#allocation3], 49
    %v864 = vld [vmem:[%s863] ss:$2 sm:$0xff]
    %s865 = scalar_lea.vmem [#allocation3], 65
    %v866 = vld [vmem:[%s865] ss:$2 sm:$0xff]
    %s867 = scalar_lea.vmem [#allocation3], 81
    %v868 = vld [vmem:[%s867] ss:$2 sm:$0xff]
    %s869 = scalar_lea.vmem [#allocation3], 97
    %v870 = vld [vmem:[%s869] ss:$2 sm:$0xff]
    %s871 = scalar_lea.vmem [#allocation3], 113
    %v872 = vld [vmem:[%s871] ss:$2 sm:$0xff]
    %s873 = scalar_lea.vmem [#allocation3], 129
    %v874 = vld [vmem:[%s873] ss:$2 sm:$0xff]
    %s875 = scalar_lea.vmem [#allocation3], 145
    %v876 = vld [vmem:[%s875] ss:$2 sm:$0xff]
    %s877 = scalar_lea.vmem [#allocation3], 161
    %v878 = vld [vmem:[%s877] ss:$2 sm:$0xff]
    %s879 = scalar_lea.vmem [#allocation3], 177
    %v880 = vld [vmem:[%s879] ss:$2 sm:$0xff]
    %s881 = scalar_lea.vmem [#allocation3], 193
    %v882 = vld [vmem:[%s881] ss:$2 sm:$0xff]
    %s883 = scalar_lea.vmem [#allocation3], 209
    %v884 = vld [vmem:[%s883] ss:$2 sm:$0xff]
    %s885 = scalar_lea.vmem [#allocation3], 225
    %v886 = vld [vmem:[%s885] ss:$2 sm:$0xff]
    %s887 = scalar_lea.vmem [#allocation3], 241
    %v888 = vld [vmem:[%s887] ss:$2 sm:$0xff]
    %v889 = vadd.f32 %v826, %v858
    %v890 = vadd.f32 %v828, %v860
    %v891 = vadd.f32 %v830, %v862
    %v892 = vadd.f32 %v832, %v864
    %v893 = vadd.f32 %v834, %v866
    %v894 = vadd.f32 %v836, %v868
    %v895 = vadd.f32 %v838, %v870
    %v896 = vadd.f32 %v840, %v872
    %v897 = vadd.f32 %v842, %v874
    %v898 = vadd.f32 %v844, %v876
    %v899 = vadd.f32 %v846, %v878
    %v900 = vadd.f32 %v848, %v880
    %v901 = vadd.f32 %v850, %v882
    %v902 = vadd.f32 %v852, %v884
    %v903 = vadd.f32 %v854, %v886
    %v904 = vadd.f32 %v856, %v888
    %v905 = vmul.f32 %v889, 0.25
    %v906 = vmul.f32 %v890, 0.25
    %v907 = vmul.f32 %v891, 0.25
    %v908 = vmul.f32 %v892, 0.25
    %v909 = vmul.f32 %v893, 0.25
    %v910 = vmul.f32 %v894, 0.25
    %v911 = vmul.f32 %v895, 0.25
    %v912 = vmul.f32 %v896, 0.25
    %v913 = vmul.f32 %v897, 0.25
    %v914 = vmul.f32 %v898, 0.25
    %v915 = vmul.f32 %v899, 0.25
    %v916 = vmul.f32 %v900, 0.25
    %v917 = vmul.f32 %v901, 0.25
    %v918 = vmul.f32 %v902, 0.25
    %v919 = vmul.f32 %v903, 0.25
    %v920 = vmul.f32 %v904, 0.25
    %921 = vst [vmem:[#allocation4] sm:$0xff] 0.0
    %922 = vst [vmem:[#allocation4 + $0x8] sm:$0xf] 0.0
    %923 = vst [vmem:[#allocation4 + $0x10] sm:$0xff] 0.0
    %924 = vst [vmem:[#allocation4 + $0x18] sm:$0xf] 0.0
    %925 = vst [vmem:[#allocation4 + $0xc0] sm:$0xff] 0.0
    %926 = vst [vmem:[#allocation4 + $0xc8] sm:$0xf] 0.0
    %927 = vst [vmem:[#allocation4 + $0xd0] sm:$0xff] 0.0
    %928 = vst [vmem:[#allocation4 + $0xd8] sm:$0xf] 0.0
    %s929 = scalar_lea.vmem [#allocation4], 160
    %930 = vst [vmem:[%s929] sm:$0xff] 0.0
    %931 = vst [vmem:[%s929 + $0x8] sm:$0xf] 0.0
    %932 = vst [vmem:[%s929 + $0x10] sm:$0xff] 0.0
    %933 = vst [vmem:[%s929 + $0x18] sm:$0xf] 0.0
    %934 = vst [vmem:[%s929 + $0xc0] sm:$0xff] 0.0
    %935 = vst [vmem:[%s929 + $0xc8] sm:$0xf] 0.0
    %936 = vst [vmem:[%s929 + $0xd0] sm:$0xff] 0.0
    %937 = vst [vmem:[%s929 + $0xd8] sm:$0xf] 0.0
    %s938 = scalar_lea.vmem [#allocation4], 32
    %939 = vst [vmem:[%s938] sm:$0x3] 0.0
    %940 = vst [vmem:[%s938 + $0x10] sm:$0x3] 0.0
    %941 = vst [vmem:[%s938 + $0x20] sm:$0x3] 0.0
    %942 = vst [vmem:[%s938 + $0x30] sm:$0x3] 0.0
    %943 = vst [vmem:[%s938 + $0x40] sm:$0x3] 0.0
    %944 = vst [vmem:[%s938 + $0x50] sm:$0x3] 0.0
    %945 = vst [vmem:[%s938 + $0x60] sm:$0x3] 0.0
    %946 = vst [vmem:[%s938 + $0x70] sm:$0x3] 0.0
    %947 = vst [vmem:[%s938 + $0xc0] sm:$0x3] 0.0
    %948 = vst [vmem:[%s938 + $0xd0] sm:$0x3] 0.0
    %949 = vst [vmem:[%s938 + $0xe0] sm:$0x3] 0.0
    %950 = vst [vmem:[%s938 + $0xf0] sm:$0x3] 0.0
    %951 = vst [vmem:[%s938 + $0x100] sm:$0x3] 0.0
    %952 = vst [vmem:[%s938 + $0x110] sm:$0x3] 0.0
    %953 = vst [vmem:[%s938 + $0x120] sm:$0x3] 0.0
    %954 = vst [vmem:[%s938 + $0x130] sm:$0x3] 0.0
    %955 = vst [vmem:[%s938 + $0xa] sm:$0x3] 0.0
    %956 = vst [vmem:[%s938 + $0x1a] sm:$0x3] 0.0
    %957 = vst [vmem:[%s938 + $0x2a] sm:$0x3] 0.0
    %958 = vst [vmem:[%s938 + $0x3a] sm:$0x3] 0.0
    %959 = vst [vmem:[%s938 + $0x4a] sm:$0x3] 0.0
    %960 = vst [vmem:[%s938 + $0x5a] sm:$0x3] 0.0
    %961 = vst [vmem:[%s938 + $0x6a] sm:$0x3] 0.0
    %962 = vst [vmem:[%s938 + $0x7a] sm:$0x3] 0.0
    %963 = vst [vmem:[%s938 + $0xca] sm:$0x3] 0.0
    %964 = vst [vmem:[%s938 + $0xda] sm:$0x3] 0.0
    %965 = vst [vmem:[%s938 + $0xea] sm:$0x3] 0.0
    %966 = vst [vmem:[%s938 + $0xfa] sm:$0x3] 0.0
    %967 = vst [vmem:[%s938 + $0x10a] sm:$0x3] 0.0
    %968 = vst [vmem:[%s938 + $0x11a] sm:$0x3] 0.0
    %969 = vst [vmem:[%s938 + $0x12a] sm:$0x3] 0.0
    %970 = vst [vmem:[%s938 + $0x13a] sm:$0x3] 0.0
    %971 = vst [vmem:[%s938 + $0x2] sm:$0xff] %v905
    %972 = vst [vmem:[%s938 + $0x12] sm:$0xff] %v906
    %973 = vst [vmem:[%s938 + $0x22] sm:$0xff] %v907
    %974 = vst [vmem:[%s938 + $0x32] sm:$0xff] %v908
    %975 = vst [vmem:[%s938 + $0x42] sm:$0xff] %v909
    %976 = vst [vmem:[%s938 + $0x52] sm:$0xff] %v910
    %977 = vst [vmem:[%s938 + $0x62] sm:$0xff] %v911
    %978 = vst [vmem:[%s938 + $0x72] sm:$0xff] %v912
    %979 = vst [vmem:[%s938 + $0xc2] sm:$0xff] %v913
    %980 = vst [vmem:[%s938 + $0xd2] sm:$0xff] %v914
    %981 = vst [vmem:[%s938 + $0xe2] sm:$0xff] %v915
    %982 = vst [vmem:[%s938 + $0xf2] sm:$0xff] %v916
    %983 = vst [vmem:[%s938 + $0x102] sm:$0xff] %v917
    %984 = vst [vmem:[%s938 + $0x112] sm:$0xff] %v918
    %985 = vst [vmem:[%s938 + $0x122] sm:$0xff] %v919
    %986 = vst [vmem:[%s938 + $0x132] sm:$0xff] %v920
    %vm987 = vcmask 1047808
    %988 = vst.msk [vmem:[#allocation5 + $0x30] sm:$0xff] %vm987, 0.0
    %989 = vst.msk [vmem:[#allocation5 + $0x68] sm:$0xff] %vm987, 0.0
    %990 = vst.msk [vmem:[#allocation5 + $0xa0] sm:$0xff] %vm987, 0.0
    %991 = vst.msk [vmem:[#allocation5 + $0xd8] sm:$0xff] %vm987, 0.0
    %992 = vst.msk [vmem:[#allocation5 + $0x110] sm:$0xff] %vm987, 0.0
    %993 = vst.msk [vmem:[#allocation5 + $0x148] sm:$0xff] %vm987, 0.0
    %994 = vst.msk [vmem:[#allocation5 + $0x180] sm:$0xff] %vm987, 0.0
    %995 = vst.msk [vmem:[#allocation5 + $0x1b8] sm:$0xff] %vm987, 0.0
    %996 = vst.msk [vmem:[#allocation5 + $0x1f0] sm:$0xff] %vm987, 0.0
    %997 = vst.msk [vmem:[#allocation5 + $0x228] sm:$0xff] %vm987, 0.0
    %998 = vst.msk [vmem:[#allocation5 + $0x260] sm:$0xff] %vm987, 0.0
    %999 = vst.msk [vmem:[#allocation5 + $0x298] sm:$0xff] %vm987, 0.0
    %1000 = vst.msk [vmem:[#allocation5 + $0x2d0] sm:$0xff] %vm987, 0.0
    %1001 = vst.msk [vmem:[#allocation5 + $0x308] sm:$0xff] %vm987, 0.0
    %1002 = vst.msk [vmem:[#allocation5 + $0x340] sm:$0xff] %vm987, 0.0
    %1003 = vst.msk [vmem:[#allocation5 + $0x378] sm:$0xff] %vm987, 0.0
    %v1004 = vld [vmem:[#allocation4] sm:$0xff]
    %v1005 = vld [vmem:[#allocation4 + $0x10] sm:$0xff]
    %v1006 = vld [vmem:[#allocation4 + $0x20] sm:$0xff]
    %v1007 = vld [vmem:[#allocation4 + $0x30] sm:$0xff]
    %v1008 = vld [vmem:[#allocation4 + $0x40] sm:$0xff]
    %v1009 = vld [vmem:[#allocation4 + $0x50] sm:$0xff]
    %v1010 = vld [vmem:[#allocation4 + $0x60] sm:$0xff]
    %v1011 = vld [vmem:[#allocation4 + $0x70] sm:$0xff]
    %v1012 = vld [vmem:[#allocation4 + $0xc0] sm:$0xff]
    %v1013 = vld [vmem:[#allocation4 + $0xd0] sm:$0xff]
    %v1014 = vld [vmem:[#allocation4 + $0xe0] sm:$0xff]
    %v1015 = vld [vmem:[#allocation4 + $0xf0] sm:$0xff]
    %v1016 = vld [vmem:[#allocation4 + $0x100] sm:$0xff]
    %v1017 = vld [vmem:[#allocation4 + $0x110] sm:$0xff]
    %v1018 = vld [vmem:[#allocation4 + $0x120] sm:$0xff]
    %v1019 = vld [vmem:[#allocation4 + $0x130] sm:$0xff]
    %vm1020 = vcmask 261120
    %1021 = vst.msk [vmem:[#allocation5] sm:$0xff] %vm1020, %v1004
    %1022 = vst.msk [vmem:[#allocation5 + $0x38] sm:$0xff] %vm1020, %v1005
    %1023 = vst.msk [vmem:[#allocation5 + $0x70] sm:$0xff] %vm1020, %v1006
    %1024 = vst.msk [vmem:[#allocation5 + $0xa8] sm:$0xff] %vm1020, %v1007
    %1025 = vst.msk [vmem:[#allocation5 + $0xe0] sm:$0xff] %vm1020, %v1008
    %1026 = vst.msk [vmem:[#allocation5 + $0x118] sm:$0xff] %vm1020, %v1009
    %1027 = vst.msk [vmem:[#allocation5 + $0x150] sm:$0xff] %vm1020, %v1010
    %1028 = vst.msk [vmem:[#allocation5 + $0x188] sm:$0xff] %vm1020, %v1011
    %1029 = vst.msk [vmem:[#allocation5 + $0x1c0] sm:$0xff] %vm1020, %v1012
    %1030 = vst.msk [vmem:[#allocation5 + $0x1f8] sm:$0xff] %vm1020, %v1013
    %1031 = vst.msk [vmem:[#allocation5 + $0x230] sm:$0xff] %vm1020, %v1014
    %1032 = vst.msk [vmem:[#allocation5 + $0x268] sm:$0xff] %vm1020, %v1015
    %1033 = vst.msk [vmem:[#allocation5 + $0x2a0] sm:$0xff] %vm1020, %v1016
    %1034 = vst.msk [vmem:[#allocation5 + $0x2d8] sm:$0xff] %vm1020, %v1017
    %1035 = vst.msk [vmem:[#allocation5 + $0x310] sm:$0xff] %vm1020, %v1018
    %1036 = vst.msk [vmem:[#allocation5 + $0x348] sm:$0xff] %vm1020, %v1019
    %v1037 = vld [vmem:[#allocation4 + $0x1] sm:$0xff]
    %v1038 = vld [vmem:[#allocation4 + $0x11] sm:$0xff]
    %v1039 = vld [vmem:[#allocation4 + $0x21] sm:$0xff]
    %v1040 = vld [vmem:[#allocation4 + $0x31] sm:$0xff]
    %v1041 = vld [vmem:[#allocation4 + $0x41] sm:$0xff]
    %v1042 = vld [vmem:[#allocation4 + $0x51] sm:$0xff]
    %v1043 = vld [vmem:[#allocation4 + $0x61] sm:$0xff]
    %v1044 = vld [vmem:[#allocation4 + $0x71] sm:$0xff]
    %v1045 = vld [vmem:[#allocation4 + $0xc1] sm:$0xff]
    %v1046 = vld [vmem:[#allocation4 + $0xd1] sm:$0xff]
    %v1047 = vld [vmem:[#allocation4 + $0xe1] sm:$0xff]
    %v1048 = vld [vmem:[#allocation4 + $0xf1] sm:$0xff]
    %v1049 = vld [vmem:[#allocation4 + $0x101] sm:$0xff]
    %v1050 = vld [vmem:[#allocation4 + $0x111] sm:$0xff]
    %v1051 = vld [vmem:[#allocation4 + $0x121] sm:$0xff]
    %v1052 = vld [vmem:[#allocation4 + $0x131] sm:$0xff]
    %1069 = vrot.lane.b32.xlu0 %v1037, 32
    %v1070 = vpop.permute.xlu0 %1069
    %1071 = vrot.lane.b32.xlu0 %v1038, 32
    %v1072 = vpop.permute.xlu0 %1071
    %1073 = vrot.lane.b32.xlu0 %v1039, 32
    %v1074 = vpop.permute.xlu0 %1073
    %1075 = vrot.lane.b32.xlu0 %v1040, 32
    %v1076 = vpop.permute.xlu0 %1075
    %1077 = vrot.lane.b32.xlu0 %v1041, 32
    %v1078 = vpop.permute.xlu0 %1077
    %1079 = vrot.lane.b32.xlu0 %v1042, 32
    %v1080 = vpop.permute.xlu0 %1079
    %1081 = vrot.lane.b32.xlu0 %v1043, 32
    %v1082 = vpop.permute.xlu0 %1081
    %1083 = vrot.lane.b32.xlu0 %v1044, 32
    %v1084 = vpop.permute.xlu0 %1083
    %1085 = vrot.lane.b32.xlu0 %v1045, 32
    %v1086 = vpop.permute.xlu0 %1085
    %1087 = vrot.lane.b32.xlu0 %v1046, 32
    %v1088 = vpop.permute.xlu0 %1087
    %1089 = vrot.lane.b32.xlu0 %v1047, 32
    %v1090 = vpop.permute.xlu0 %1089
    %1091 = vrot.lane.b32.xlu0 %v1048, 32
    %v1092 = vpop.permute.xlu0 %1091
    %1093 = vrot.lane.b32.xlu0 %v1049, 32
    %v1094 = vpop.permute.xlu0 %1093
    %1095 = vrot.lane.b32.xlu0 %v1050, 32
    %v1096 = vpop.permute.xlu0 %1095
    %1097 = vrot.lane.b32.xlu0 %v1051, 32
    %v1098 = vpop.permute.xlu0 %1097
    %1099 = vrot.lane.b32.xlu0 %v1052, 32
    %v1100 = vpop.permute.xlu0 %1099
    %vm1117 = vcmask 523520
    %1118 = vst.msk [vmem:[#allocation5] sm:$0xff] %vm1117, %v1070
    %1119 = vst.msk [vmem:[#allocation5 + $0x38] sm:$0xff] %vm1117, %v1072
    %1120 = vst.msk [vmem:[#allocation5 + $0x70] sm:$0xff] %vm1117, %v1074
    %1121 = vst.msk [vmem:[#allocation5 + $0xa8] sm:$0xff] %vm1117, %v1076
    %1122 = vst.msk [vmem:[#allocation5 + $0xe0] sm:$0xff] %vm1117, %v1078
    %1123 = vst.msk [vmem:[#allocation5 + $0x118] sm:$0xff] %vm1117, %v1080
    %1124 = vst.msk [vmem:[#allocation5 + $0x150] sm:$0xff] %vm1117, %v1082
    %1125 = vst.msk [vmem:[#allocation5 + $0x188] sm:$0xff] %vm1117, %v1084
    %1126 = vst.msk [vmem:[#allocation5 + $0x1c0] sm:$0xff] %vm1117, %v1086
    %1127 = vst.msk [vmem:[#allocation5 + $0x1f8] sm:$0xff] %vm1117, %v1088
    %1128 = vst.msk [vmem:[#allocation5 + $0x230] sm:$0xff] %vm1117, %v1090
    %1129 = vst.msk [vmem:[#allocation5 + $0x268] sm:$0xff] %vm1117, %v1092
    %1130 = vst.msk [vmem:[#allocation5 + $0x2a0] sm:$0xff] %vm1117, %v1094
    %1131 = vst.msk [vmem:[#allocation5 + $0x2d8] sm:$0xff] %vm1117, %v1096
    %1132 = vst.msk [vmem:[#allocation5 + $0x310] sm:$0xff] %vm1117, %v1098
    %1133 = vst.msk [vmem:[#allocation5 + $0x348] sm:$0xff] %vm1117, %v1100
    %v1134 = vld [vmem:[#allocation4 + $0x2] sm:$0xff]
    %v1135 = vld [vmem:[#allocation4 + $0x12] sm:$0xff]
    %v1136 = vld [vmem:[#allocation4 + $0x22] sm:$0xff]
    %v1137 = vld [vmem:[#allocation4 + $0x32] sm:$0xff]
    %v1138 = vld [vmem:[#allocation4 + $0x42] sm:$0xff]
    %v1139 = vld [vmem:[#allocation4 + $0x52] sm:$0xff]
    %v1140 = vld [vmem:[#allocation4 + $0x62] sm:$0xff]
    %v1141 = vld [vmem:[#allocation4 + $0x72] sm:$0xff]
    %v1142 = vld [vmem:[#allocation4 + $0xc2] sm:$0xff]
    %v1143 = vld [vmem:[#allocation4 + $0xd2] sm:$0xff]
    %v1144 = vld [vmem:[#allocation4 + $0xe2] sm:$0xff]
    %v1145 = vld [vmem:[#allocation4 + $0xf2] sm:$0xff]
    %v1146 = vld [vmem:[#allocation4 + $0x102] sm:$0xff]
    %v1147 = vld [vmem:[#allocation4 + $0x112] sm:$0xff]
    %v1148 = vld [vmem:[#allocation4 + $0x122] sm:$0xff]
    %v1149 = vld [vmem:[#allocation4 + $0x132] sm:$0xff]
    %1166 = vrot.lane.b32.xlu0 %v1134, 64
    %v1167 = vpop.permute.xlu0 %1166
    %1168 = vrot.lane.b32.xlu0 %v1135, 64
    %v1169 = vpop.permute.xlu0 %1168
    %1170 = vrot.lane.b32.xlu0 %v1136, 64
    %v1171 = vpop.permute.xlu0 %1170
    %1172 = vrot.lane.b32.xlu0 %v1137, 64
    %v1173 = vpop.permute.xlu0 %1172
    %1174 = vrot.lane.b32.xlu0 %v1138, 64
    %v1175 = vpop.permute.xlu0 %1174
    %1176 = vrot.lane.b32.xlu0 %v1139, 64
    %v1177 = vpop.permute.xlu0 %1176
    %1178 = vrot.lane.b32.xlu0 %v1140, 64
    %v1179 = vpop.permute.xlu0 %1178
    %1180 = vrot.lane.b32.xlu0 %v1141, 64
    %v1181 = vpop.permute.xlu0 %1180
    %1182 = vrot.lane.b32.xlu0 %v1142, 64
    %v1183 = vpop.permute.xlu0 %1182
    %1184 = vrot.lane.b32.xlu0 %v1143, 64
    %v1185 = vpop.permute.xlu0 %1184
    %1186 = vrot.lane.b32.xlu0 %v1144, 64
    %v1187 = vpop.permute.xlu0 %1186
    %1188 = vrot.lane.b32.xlu0 %v1145, 64
    %v1189 = vpop.permute.xlu0 %1188
    %1190 = vrot.lane.b32.xlu0 %v1146, 64
    %v1191 = vpop.permute.xlu0 %1190
    %1192 = vrot.lane.b32.xlu0 %v1147, 64
    %v1193 = vpop.permute.xlu0 %1192
    %1194 = vrot.lane.b32.xlu0 %v1148, 64
    %v1195 = vpop.permute.xlu0 %1194
    %1196 = vrot.lane.b32.xlu0 %v1149, 64
    %v1197 = vpop.permute.xlu0 %1196
    %vm1214 = vcmask 785920
    %1215 = vst.msk [vmem:[#allocation5] sm:$0xff] %vm1214, %v1167
    %1216 = vst.msk [vmem:[#allocation5 + $0x38] sm:$0xff] %vm1214, %v1169
    %1217 = vst.msk [vmem:[#allocation5 + $0x70] sm:$0xff] %vm1214, %v1171
    %1218 = vst.msk [vmem:[#allocation5 + $0xa8] sm:$0xff] %vm1214, %v1173
    %1219 = vst.msk [vmem:[#allocation5 + $0xe0] sm:$0xff] %vm1214, %v1175
    %1220 = vst.msk [vmem:[#allocation5 + $0x118] sm:$0xff] %vm1214, %v1177
    %1221 = vst.msk [vmem:[#allocation5 + $0x150] sm:$0xff] %vm1214, %v1179
    %1222 = vst.msk [vmem:[#allocation5 + $0x188] sm:$0xff] %vm1214, %v1181
    %1223 = vst.msk [vmem:[#allocation5 + $0x1c0] sm:$0xff] %vm1214, %v1183
    %1224 = vst.msk [vmem:[#allocation5 + $0x1f8] sm:$0xff] %vm1214, %v1185
    %1225 = vst.msk [vmem:[#allocation5 + $0x230] sm:$0xff] %vm1214, %v1187
    %1226 = vst.msk [vmem:[#allocation5 + $0x268] sm:$0xff] %vm1214, %v1189
    %1227 = vst.msk [vmem:[#allocation5 + $0x2a0] sm:$0xff] %vm1214, %v1191
    %1228 = vst.msk [vmem:[#allocation5 + $0x2d8] sm:$0xff] %vm1214, %v1193
    %1229 = vst.msk [vmem:[#allocation5 + $0x310] sm:$0xff] %vm1214, %v1195
    %1230 = vst.msk [vmem:[#allocation5 + $0x348] sm:$0xff] %vm1214, %v1197
    %v1231 = vld [vmem:[#allocation4 + $0x3] sm:$0xff]
    %v1232 = vld [vmem:[#allocation4 + $0x13] sm:$0xff]
    %v1233 = vld [vmem:[#allocation4 + $0x23] sm:$0xff]
    %v1234 = vld [vmem:[#allocation4 + $0x33] sm:$0xff]
    %v1235 = vld [vmem:[#allocation4 + $0x43] sm:$0xff]
    %v1236 = vld [vmem:[#allocation4 + $0x53] sm:$0xff]
    %v1237 = vld [vmem:[#allocation4 + $0x63] sm:$0xff]
    %v1238 = vld [vmem:[#allocation4 + $0x73] sm:$0xff]
    %v1239 = vld [vmem:[#allocation4 + $0xc3] sm:$0xff]
    %v1240 = vld [vmem:[#allocation4 + $0xd3] sm:$0xff]
    %v1241 = vld [vmem:[#allocation4 + $0xe3] sm:$0xff]
    %v1242 = vld [vmem:[#allocation4 + $0xf3] sm:$0xff]
    %v1243 = vld [vmem:[#allocation4 + $0x103] sm:$0xff]
    %v1244 = vld [vmem:[#allocation4 + $0x113] sm:$0xff]
    %v1245 = vld [vmem:[#allocation4 + $0x123] sm:$0xff]
    %v1246 = vld [vmem:[#allocation4 + $0x133] sm:$0xff]
    %1263 = vrot.lane.b32.xlu0 %v1231, 96
    %v1264 = vpop.permute.xlu0 %1263
    %1265 = vrot.lane.b32.xlu0 %v1232, 96
    %v1266 = vpop.permute.xlu0 %1265
    %1267 = vrot.lane.b32.xlu0 %v1233, 96
    %v1268 = vpop.permute.xlu0 %1267
    %1269 = vrot.lane.b32.xlu0 %v1234, 96
    %v1270 = vpop.permute.xlu0 %1269
    %1271 = vrot.lane.b32.xlu0 %v1235, 96
    %v1272 = vpop.permute.xlu0 %1271
    %1273 = vrot.lane.b32.xlu0 %v1236, 96
    %v1274 = vpop.permute.xlu0 %1273
    %1275 = vrot.lane.b32.xlu0 %v1237, 96
    %v1276 = vpop.permute.xlu0 %1275
    %1277 = vrot.lane.b32.xlu0 %v1238, 96
    %v1278 = vpop.permute.xlu0 %1277
    %1279 = vrot.lane.b32.xlu0 %v1239, 96
    %v1280 = vpop.permute.xlu0 %1279
    %1281 = vrot.lane.b32.xlu0 %v1240, 96
    %v1282 = vpop.permute.xlu0 %1281
    %1283 = vrot.lane.b32.xlu0 %v1241, 96
    %v1284 = vpop.permute.xlu0 %1283
    %1285 = vrot.lane.b32.xlu0 %v1242, 96
    %v1286 = vpop.permute.xlu0 %1285
    %1287 = vrot.lane.b32.xlu0 %v1243, 96
    %v1288 = vpop.permute.xlu0 %1287
    %1289 = vrot.lane.b32.xlu0 %v1244, 96
    %v1290 = vpop.permute.xlu0 %1289
    %1291 = vrot.lane.b32.xlu0 %v1245, 96
    %v1292 = vpop.permute.xlu0 %1291
    %1293 = vrot.lane.b32.xlu0 %v1246, 96
    %v1294 = vpop.permute.xlu0 %1293
    %vm1311 = vcmask 1048320
    %1312 = vst.msk [vmem:[#allocation5] sm:$0xff] %vm1311, %v1264
    %1313 = vst.msk [vmem:[#allocation5 + $0x38] sm:$0xff] %vm1311, %v1266
    %1314 = vst.msk [vmem:[#allocation5 + $0x70] sm:$0xff] %vm1311, %v1268
    %1315 = vst.msk [vmem:[#allocation5 + $0xa8] sm:$0xff] %vm1311, %v1270
    %1316 = vst.msk [vmem:[#allocation5 + $0xe0] sm:$0xff] %vm1311, %v1272
    %1317 = vst.msk [vmem:[#allocation5 + $0x118] sm:$0xff] %vm1311, %v1274
    %1318 = vst.msk [vmem:[#allocation5 + $0x150] sm:$0xff] %vm1311, %v1276
    %1319 = vst.msk [vmem:[#allocation5 + $0x188] sm:$0xff] %vm1311, %v1278
    %1320 = vst.msk [vmem:[#allocation5 + $0x1c0] sm:$0xff] %vm1311, %v1280
    %1321 = vst.msk [vmem:[#allocation5 + $0x1f8] sm:$0xff] %vm1311, %v1282
    %1322 = vst.msk [vmem:[#allocation5 + $0x230] sm:$0xff] %vm1311, %v1284
    %1323 = vst.msk [vmem:[#allocation5 + $0x268] sm:$0xff] %vm1311, %v1286
    %1324 = vst.msk [vmem:[#allocation5 + $0x2a0] sm:$0xff] %vm1311, %v1288
    %1325 = vst.msk [vmem:[#allocation5 + $0x2d8] sm:$0xff] %vm1311, %v1290
    %1326 = vst.msk [vmem:[#allocation5 + $0x310] sm:$0xff] %vm1311, %v1292
    %1327 = vst.msk [vmem:[#allocation5 + $0x348] sm:$0xff] %vm1311, %v1294
    %v1328 = vld [vmem:[#allocation4 + $0x4] sm:$0xff]
    %v1329 = vld [vmem:[#allocation4 + $0x14] sm:$0xff]
    %v1330 = vld [vmem:[#allocation4 + $0x24] sm:$0xff]
    %v1331 = vld [vmem:[#allocation4 + $0x34] sm:$0xff]
    %v1332 = vld [vmem:[#allocation4 + $0x44] sm:$0xff]
    %v1333 = vld [vmem:[#allocation4 + $0x54] sm:$0xff]
    %v1334 = vld [vmem:[#allocation4 + $0x64] sm:$0xff]
    %v1335 = vld [vmem:[#allocation4 + $0x74] sm:$0xff]
    %v1336 = vld [vmem:[#allocation4 + $0xc4] sm:$0xff]
    %v1337 = vld [vmem:[#allocation4 + $0xd4] sm:$0xff]
    %v1338 = vld [vmem:[#allocation4 + $0xe4] sm:$0xff]
    %v1339 = vld [vmem:[#allocation4 + $0xf4] sm:$0xff]
    %v1340 = vld [vmem:[#allocation4 + $0x104] sm:$0xff]
    %v1341 = vld [vmem:[#allocation4 + $0x114] sm:$0xff]
    %v1342 = vld [vmem:[#allocation4 + $0x124] sm:$0xff]
    %v1343 = vld [vmem:[#allocation4 + $0x134] sm:$0xff]
    %1344 = vst.msk [vmem:[#allocation5 + $0x8] sm:$0xff] %vm1020, %v1328
    %1345 = vst.msk [vmem:[#allocation5 + $0x40] sm:$0xff] %vm1020, %v1329
    %1346 = vst.msk [vmem:[#allocation5 + $0x78] sm:$0xff] %vm1020, %v1330
    %1347 = vst.msk [vmem:[#allocation5 + $0xb0] sm:$0xff] %vm1020, %v1331
    %1348 = vst.msk [vmem:[#allocation5 + $0xe8] sm:$0xff] %vm1020, %v1332
    %1349 = vst.msk [vmem:[#allocation5 + $0x120] sm:$0xff] %vm1020, %v1333
    %1350 = vst.msk [vmem:[#allocation5 + $0x158] sm:$0xff] %vm1020, %v1334
    %1351 = vst.msk [vmem:[#allocation5 + $0x190] sm:$0xff] %vm1020, %v1335
    %1352 = vst.msk [vmem:[#allocation5 + $0x1c8] sm:$0xff] %vm1020, %v1336
    %1353 = vst.msk [vmem:[#allocation5 + $0x200] sm:$0xff] %vm1020, %v1337
    %1354 = vst.msk [vmem:[#allocation5 + $0x238] sm:$0xff] %vm1020, %v1338
    %1355 = vst.msk [vmem:[#allocation5 + $0x270] sm:$0xff] %vm1020, %v1339
    %1356 = vst.msk [vmem:[#allocation5 + $0x2a8] sm:$0xff] %vm1020, %v1340
    %1357 = vst.msk [vmem:[#allocation5 + $0x2e0] sm:$0xff] %vm1020, %v1341
    %1358 = vst.msk [vmem:[#allocation5 + $0x318] sm:$0xff] %vm1020, %v1342
    %1359 = vst.msk [vmem:[#allocation5 + $0x350] sm:$0xff] %vm1020, %v1343
    %s1360 = scalar_lea.vmem [#allocation4], 16
    %v1361 = vld [vmem:[%s1360] sm:$0xff]
    %v1362 = vld [vmem:[%s1360 + $0x10] sm:$0xff]
    %v1363 = vld [vmem:[%s1360 + $0x20] sm:$0xff]
    %v1364 = vld [vmem:[%s1360 + $0x30] sm:$0xff]
    %v1365 = vld [vmem:[%s1360 + $0x40] sm:$0xff]
    %v1366 = vld [vmem:[%s1360 + $0x50] sm:$0xff]
    %v1367 = vld [vmem:[%s1360 + $0x60] sm:$0xff]
    %v1368 = vld [vmem:[%s1360 + $0x70] sm:$0xff]
    %v1369 = vld [vmem:[%s1360 + $0xc0] sm:$0xff]
    %v1370 = vld [vmem:[%s1360 + $0xd0] sm:$0xff]
    %v1371 = vld [vmem:[%s1360 + $0xe0] sm:$0xff]
    %v1372 = vld [vmem:[%s1360 + $0xf0] sm:$0xff]
    %v1373 = vld [vmem:[%s1360 + $0x100] sm:$0xff]
    %v1374 = vld [vmem:[%s1360 + $0x110] sm:$0xff]
    %v1375 = vld [vmem:[%s1360 + $0x120] sm:$0xff]
    %v1376 = vld [vmem:[%s1360 + $0x130] sm:$0xff]
    %1393 = vrot.lane.b32.xlu0 %v1361, 32
    %v1394 = vpop.permute.xlu0 %1393
    %1395 = vrot.lane.b32.xlu0 %v1362, 32
    %v1396 = vpop.permute.xlu0 %1395
    %1397 = vrot.lane.b32.xlu0 %v1363, 32
    %v1398 = vpop.permute.xlu0 %1397
    %1399 = vrot.lane.b32.xlu0 %v1364, 32
    %v1400 = vpop.permute.xlu0 %1399
    %1401 = vrot.lane.b32.xlu0 %v1365, 32
    %v1402 = vpop.permute.xlu0 %1401
    %1403 = vrot.lane.b32.xlu0 %v1366, 32
    %v1404 = vpop.permute.xlu0 %1403
    %1405 = vrot.lane.b32.xlu0 %v1367, 32
    %v1406 = vpop.permute.xlu0 %1405
    %1407 = vrot.lane.b32.xlu0 %v1368, 32
    %v1408 = vpop.permute.xlu0 %1407
    %1409 = vrot.lane.b32.xlu0 %v1369, 32
    %v1410 = vpop.permute.xlu0 %1409
    %1411 = vrot.lane.b32.xlu0 %v1370, 32
    %v1412 = vpop.permute.xlu0 %1411
    %1413 = vrot.lane.b32.xlu0 %v1371, 32
    %v1414 = vpop.permute.xlu0 %1413
    %1415 = vrot.lane.b32.xlu0 %v1372, 32
    %v1416 = vpop.permute.xlu0 %1415
    %1417 = vrot.lane.b32.xlu0 %v1373, 32
    %v1418 = vpop.permute.xlu0 %1417
    %1419 = vrot.lane.b32.xlu0 %v1374, 32
    %v1420 = vpop.permute.xlu0 %1419
    %1421 = vrot.lane.b32.xlu0 %v1375, 32
    %v1422 = vpop.permute.xlu0 %1421
    %1423 = vrot.lane.b32.xlu0 %v1376, 32
    %v1424 = vpop.permute.xlu0 %1423
    %1441 = vst.msk [vmem:[#allocation5 + $0x8] sm:$0xff] %vm1117, %v1394
    %1442 = vst.msk [vmem:[#allocation5 + $0x40] sm:$0xff] %vm1117, %v1396
    %1443 = vst.msk [vmem:[#allocation5 + $0x78] sm:$0xff] %vm1117, %v1398
    %1444 = vst.msk [vmem:[#allocation5 + $0xb0] sm:$0xff] %vm1117, %v1400
    %1445 = vst.msk [vmem:[#allocation5 + $0xe8] sm:$0xff] %vm1117, %v1402
    %1446 = vst.msk [vmem:[#allocation5 + $0x120] sm:$0xff] %vm1117, %v1404
    %1447 = vst.msk [vmem:[#allocation5 + $0x158] sm:$0xff] %vm1117, %v1406
    %1448 = vst.msk [vmem:[#allocation5 + $0x190] sm:$0xff] %vm1117, %v1408
    %1449 = vst.msk [vmem:[#allocation5 + $0x1c8] sm:$0xff] %vm1117, %v1410
    %1450 = vst.msk [vmem:[#allocation5 + $0x200] sm:$0xff] %vm1117, %v1412
    %1451 = vst.msk [vmem:[#allocation5 + $0x238] sm:$0xff] %vm1117, %v1414
    %1452 = vst.msk [vmem:[#allocation5 + $0x270] sm:$0xff] %vm1117, %v1416
    %1453 = vst.msk [vmem:[#allocation5 + $0x2a8] sm:$0xff] %vm1117, %v1418
    %1454 = vst.msk [vmem:[#allocation5 + $0x2e0] sm:$0xff] %vm1117, %v1420
    %1455 = vst.msk [vmem:[#allocation5 + $0x318] sm:$0xff] %vm1117, %v1422
    %1456 = vst.msk [vmem:[#allocation5 + $0x350] sm:$0xff] %vm1117, %v1424
    %v1457 = vld [vmem:[%s1360 + $0x1] sm:$0xff]
    %v1458 = vld [vmem:[%s1360 + $0x11] sm:$0xff]
    %v1459 = vld [vmem:[%s1360 + $0x21] sm:$0xff]
    %v1460 = vld [vmem:[%s1360 + $0x31] sm:$0xff]
    %v1461 = vld [vmem:[%s1360 + $0x41] sm:$0xff]
    %v1462 = vld [vmem:[%s1360 + $0x51] sm:$0xff]
    %v1463 = vld [vmem:[%s1360 + $0x61] sm:$0xff]
    %v1464 = vld [vmem:[%s1360 + $0x71] sm:$0xff]
    %v1465 = vld [vmem:[%s1360 + $0xc1] sm:$0xff]
    %v1466 = vld [vmem:[%s1360 + $0xd1] sm:$0xff]
    %v1467 = vld [vmem:[%s1360 + $0xe1] sm:$0xff]
    %v1468 = vld [vmem:[%s1360 + $0xf1] sm:$0xff]
    %v1469 = vld [vmem:[%s1360 + $0x101] sm:$0xff]
    %v1470 = vld [vmem:[%s1360 + $0x111] sm:$0xff]
    %v1471 = vld [vmem:[%s1360 + $0x121] sm:$0xff]
    %v1472 = vld [vmem:[%s1360 + $0x131] sm:$0xff]
    %1489 = vrot.lane.b32.xlu0 %v1457, 64
    %v1490 = vpop.permute.xlu0 %1489
    %1491 = vrot.lane.b32.xlu0 %v1458, 64
    %v1492 = vpop.permute.xlu0 %1491
    %1493 = vrot.lane.b32.xlu0 %v1459, 64
    %v1494 = vpop.permute.xlu0 %1493
    %1495 = vrot.lane.b32.xlu0 %v1460, 64
    %v1496 = vpop.permute.xlu0 %1495
    %1497 = vrot.lane.b32.xlu0 %v1461, 64
    %v1498 = vpop.permute.xlu0 %1497
    %1499 = vrot.lane.b32.xlu0 %v1462, 64
    %v1500 = vpop.permute.xlu0 %1499
    %1501 = vrot.lane.b32.xlu0 %v1463, 64
    %v1502 = vpop.permute.xlu0 %1501
    %1503 = vrot.lane.b32.xlu0 %v1464, 64
    %v1504 = vpop.permute.xlu0 %1503
    %1505 = vrot.lane.b32.xlu0 %v1465, 64
    %v1506 = vpop.permute.xlu0 %1505
    %1507 = vrot.lane.b32.xlu0 %v1466, 64
    %v1508 = vpop.permute.xlu0 %1507
    %1509 = vrot.lane.b32.xlu0 %v1467, 64
    %v1510 = vpop.permute.xlu0 %1509
    %1511 = vrot.lane.b32.xlu0 %v1468, 64
    %v1512 = vpop.permute.xlu0 %1511
    %1513 = vrot.lane.b32.xlu0 %v1469, 64
    %v1514 = vpop.permute.xlu0 %1513
    %1515 = vrot.lane.b32.xlu0 %v1470, 64
    %v1516 = vpop.permute.xlu0 %1515
    %1517 = vrot.lane.b32.xlu0 %v1471, 64
    %v1518 = vpop.permute.xlu0 %1517
    %1519 = vrot.lane.b32.xlu0 %v1472, 64
    %v1520 = vpop.permute.xlu0 %1519
    %1537 = vst.msk [vmem:[#allocation5 + $0x8] sm:$0xff] %vm1214, %v1490
    %1538 = vst.msk [vmem:[#allocation5 + $0x40] sm:$0xff] %vm1214, %v1492
    %1539 = vst.msk [vmem:[#allocation5 + $0x78] sm:$0xff] %vm1214, %v1494
    %1540 = vst.msk [vmem:[#allocation5 + $0xb0] sm:$0xff] %vm1214, %v1496
    %1541 = vst.msk [vmem:[#allocation5 + $0xe8] sm:$0xff] %vm1214, %v1498
    %1542 = vst.msk [vmem:[#allocation5 + $0x120] sm:$0xff] %vm1214, %v1500
    %1543 = vst.msk [vmem:[#allocation5 + $0x158] sm:$0xff] %vm1214, %v1502
    %1544 = vst.msk [vmem:[#allocation5 + $0x190] sm:$0xff] %vm1214, %v1504
    %1545 = vst.msk [vmem:[#allocation5 + $0x1c8] sm:$0xff] %vm1214, %v1506
    %1546 = vst.msk [vmem:[#allocation5 + $0x200] sm:$0xff] %vm1214, %v1508
    %1547 = vst.msk [vmem:[#allocation5 + $0x238] sm:$0xff] %vm1214, %v1510
    %1548 = vst.msk [vmem:[#allocation5 + $0x270] sm:$0xff] %vm1214, %v1512
    %1549 = vst.msk [vmem:[#allocation5 + $0x2a8] sm:$0xff] %vm1214, %v1514
    %1550 = vst.msk [vmem:[#allocation5 + $0x2e0] sm:$0xff] %vm1214, %v1516
    %1551 = vst.msk [vmem:[#allocation5 + $0x318] sm:$0xff] %vm1214, %v1518
    %1552 = vst.msk [vmem:[#allocation5 + $0x350] sm:$0xff] %vm1214, %v1520
    %v1553 = vld [vmem:[%s1360 + $0x2] sm:$0xff]
    %v1554 = vld [vmem:[%s1360 + $0x12] sm:$0xff]
    %v1555 = vld [vmem:[%s1360 + $0x22] sm:$0xff]
    %v1556 = vld [vmem:[%s1360 + $0x32] sm:$0xff]
    %v1557 = vld [vmem:[%s1360 + $0x42] sm:$0xff]
    %v1558 = vld [vmem:[%s1360 + $0x52] sm:$0xff]
    %v1559 = vld [vmem:[%s1360 + $0x62] sm:$0xff]
    %v1560 = vld [vmem:[%s1360 + $0x72] sm:$0xff]
    %v1561 = vld [vmem:[%s1360 + $0xc2] sm:$0xff]
    %v1562 = vld [vmem:[%s1360 + $0xd2] sm:$0xff]
    %v1563 = vld [vmem:[%s1360 + $0xe2] sm:$0xff]
    %v1564 = vld [vmem:[%s1360 + $0xf2] sm:$0xff]
    %v1565 = vld [vmem:[%s1360 + $0x102] sm:$0xff]
    %v1566 = vld [vmem:[%s1360 + $0x112] sm:$0xff]
    %v1567 = vld [vmem:[%s1360 + $0x122] sm:$0xff]
    %v1568 = vld [vmem:[%s1360 + $0x132] sm:$0xff]
    %1585 = vrot.lane.b32.xlu0 %v1553, 96
    %v1586 = vpop.permute.xlu0 %1585
    %1587 = vrot.lane.b32.xlu0 %v1554, 96
    %v1588 = vpop.permute.xlu0 %1587
    %1589 = vrot.lane.b32.xlu0 %v1555, 96
    %v1590 = vpop.permute.xlu0 %1589
    %1591 = vrot.lane.b32.xlu0 %v1556, 96
    %v1592 = vpop.permute.xlu0 %1591
    %1593 = vrot.lane.b32.xlu0 %v1557, 96
    %v1594 = vpop.permute.xlu0 %1593
    %1595 = vrot.lane.b32.xlu0 %v1558, 96
    %v1596 = vpop.permute.xlu0 %1595
    %1597 = vrot.lane.b32.xlu0 %v1559, 96
    %v1598 = vpop.permute.xlu0 %1597
    %1599 = vrot.lane.b32.xlu0 %v1560, 96
    %v1600 = vpop.permute.xlu0 %1599
    %1601 = vrot.lane.b32.xlu0 %v1561, 96
    %v1602 = vpop.permute.xlu0 %1601
    %1603 = vrot.lane.b32.xlu0 %v1562, 96
    %v1604 = vpop.permute.xlu0 %1603
    %1605 = vrot.lane.b32.xlu0 %v1563, 96
    %v1606 = vpop.permute.xlu0 %1605
    %1607 = vrot.lane.b32.xlu0 %v1564, 96
    %v1608 = vpop.permute.xlu0 %1607
    %1609 = vrot.lane.b32.xlu0 %v1565, 96
    %v1610 = vpop.permute.xlu0 %1609
    %1611 = vrot.lane.b32.xlu0 %v1566, 96
    %v1612 = vpop.permute.xlu0 %1611
    %1613 = vrot.lane.b32.xlu0 %v1567, 96
    %v1614 = vpop.permute.xlu0 %1613
    %1615 = vrot.lane.b32.xlu0 %v1568, 96
    %v1616 = vpop.permute.xlu0 %1615
    %1633 = vst.msk [vmem:[#allocation5 + $0x8] sm:$0xff] %vm1311, %v1586
    %1634 = vst.msk [vmem:[#allocation5 + $0x40] sm:$0xff] %vm1311, %v1588
    %1635 = vst.msk [vmem:[#allocation5 + $0x78] sm:$0xff] %vm1311, %v1590
    %1636 = vst.msk [vmem:[#allocation5 + $0xb0] sm:$0xff] %vm1311, %v1592
    %1637 = vst.msk [vmem:[#allocation5 + $0xe8] sm:$0xff] %vm1311, %v1594
    %1638 = vst.msk [vmem:[#allocation5 + $0x120] sm:$0xff] %vm1311, %v1596
    %1639 = vst.msk [vmem:[#allocation5 + $0x158] sm:$0xff] %vm1311, %v1598
    %1640 = vst.msk [vmem:[#allocation5 + $0x190] sm:$0xff] %vm1311, %v1600
    %1641 = vst.msk [vmem:[#allocation5 + $0x1c8] sm:$0xff] %vm1311, %v1602
    %1642 = vst.msk [vmem:[#allocation5 + $0x200] sm:$0xff] %vm1311, %v1604
    %1643 = vst.msk [vmem:[#allocation5 + $0x238] sm:$0xff] %vm1311, %v1606
    %1644 = vst.msk [vmem:[#allocation5 + $0x270] sm:$0xff] %vm1311, %v1608
    %1645 = vst.msk [vmem:[#allocation5 + $0x2a8] sm:$0xff] %vm1311, %v1610
    %1646 = vst.msk [vmem:[#allocation5 + $0x2e0] sm:$0xff] %vm1311, %v1612
    %1647 = vst.msk [vmem:[#allocation5 + $0x318] sm:$0xff] %vm1311, %v1614
    %1648 = vst.msk [vmem:[#allocation5 + $0x350] sm:$0xff] %vm1311, %v1616
    %v1649 = vld [vmem:[%s1360 + $0x3] sm:$0xff]
    %v1650 = vld [vmem:[%s1360 + $0x13] sm:$0xff]
    %v1651 = vld [vmem:[%s1360 + $0x23] sm:$0xff]
    %v1652 = vld [vmem:[%s1360 + $0x33] sm:$0xff]
    %v1653 = vld [vmem:[%s1360 + $0x43] sm:$0xff]
    %v1654 = vld [vmem:[%s1360 + $0x53] sm:$0xff]
    %v1655 = vld [vmem:[%s1360 + $0x63] sm:$0xff]
    %v1656 = vld [vmem:[%s1360 + $0x73] sm:$0xff]
    %v1657 = vld [vmem:[%s1360 + $0xc3] sm:$0xff]
    %v1658 = vld [vmem:[%s1360 + $0xd3] sm:$0xff]
    %v1659 = vld [vmem:[%s1360 + $0xe3] sm:$0xff]
    %v1660 = vld [vmem:[%s1360 + $0xf3] sm:$0xff]
    %v1661 = vld [vmem:[%s1360 + $0x103] sm:$0xff]
    %v1662 = vld [vmem:[%s1360 + $0x113] sm:$0xff]
    %v1663 = vld [vmem:[%s1360 + $0x123] sm:$0xff]
    %v1664 = vld [vmem:[%s1360 + $0x133] sm:$0xff]
    %1665 = vst.msk [vmem:[#allocation5 + $0x10] sm:$0xff] %vm1020, %v1649
    %1666 = vst.msk [vmem:[#allocation5 + $0x48] sm:$0xff] %vm1020, %v1650
    %1667 = vst.msk [vmem:[#allocation5 + $0x80] sm:$0xff] %vm1020, %v1651
    %1668 = vst.msk [vmem:[#allocation5 + $0xb8] sm:$0xff] %vm1020, %v1652
    %1669 = vst.msk [vmem:[#allocation5 + $0xf0] sm:$0xff] %vm1020, %v1653
    %1670 = vst.msk [vmem:[#allocation5 + $0x128] sm:$0xff] %vm1020, %v1654
    %1671 = vst.msk [vmem:[#allocation5 + $0x160] sm:$0xff] %vm1020, %v1655
    %1672 = vst.msk [vmem:[#allocation5 + $0x198] sm:$0xff] %vm1020, %v1656
    %1673 = vst.msk [vmem:[#allocation5 + $0x1d0] sm:$0xff] %vm1020, %v1657
    %1674 = vst.msk [vmem:[#allocation5 + $0x208] sm:$0xff] %vm1020, %v1658
    %1675 = vst.msk [vmem:[#allocation5 + $0x240] sm:$0xff] %vm1020, %v1659
    %1676 = vst.msk [vmem:[#allocation5 + $0x278] sm:$0xff] %vm1020, %v1660
    %1677 = vst.msk [vmem:[#allocation5 + $0x2b0] sm:$0xff] %vm1020, %v1661
    %1678 = vst.msk [vmem:[#allocation5 + $0x2e8] sm:$0xff] %vm1020, %v1662
    %1679 = vst.msk [vmem:[#allocation5 + $0x320] sm:$0xff] %vm1020, %v1663
    %1680 = vst.msk [vmem:[#allocation5 + $0x358] sm:$0xff] %vm1020, %v1664
    %v1681 = vld [vmem:[%s1360 + $0x4] sm:$0xff]
    %v1682 = vld [vmem:[%s1360 + $0x14] sm:$0xff]
    %v1683 = vld [vmem:[%s1360 + $0x24] sm:$0xff]
    %v1684 = vld [vmem:[%s1360 + $0x34] sm:$0xff]
    %v1685 = vld [vmem:[%s1360 + $0x44] sm:$0xff]
    %v1686 = vld [vmem:[%s1360 + $0x54] sm:$0xff]
    %v1687 = vld [vmem:[%s1360 + $0x64] sm:$0xff]
    %v1688 = vld [vmem:[%s1360 + $0x74] sm:$0xff]
    %v1689 = vld [vmem:[%s1360 + $0xc4] sm:$0xff]
    %v1690 = vld [vmem:[%s1360 + $0xd4] sm:$0xff]
    %v1691 = vld [vmem:[%s1360 + $0xe4] sm:$0xff]
    %v1692 = vld [vmem:[%s1360 + $0xf4] sm:$0xff]
    %v1693 = vld [vmem:[%s1360 + $0x104] sm:$0xff]
    %v1694 = vld [vmem:[%s1360 + $0x114] sm:$0xff]
    %v1695 = vld [vmem:[%s1360 + $0x124] sm:$0xff]
    %v1696 = vld [vmem:[%s1360 + $0x134] sm:$0xff]
    %1713 = vrot.lane.b32.xlu0 %v1681, 32
    %v1714 = vpop.permute.xlu0 %1713
    %1715 = vrot.lane.b32.xlu0 %v1682, 32
    %v1716 = vpop.permute.xlu0 %1715
    %1717 = vrot.lane.b32.xlu0 %v1683, 32
    %v1718 = vpop.permute.xlu0 %1717
    %1719 = vrot.lane.b32.xlu0 %v1684, 32
    %v1720 = vpop.permute.xlu0 %1719
    %1721 = vrot.lane.b32.xlu0 %v1685, 32
    %v1722 = vpop.permute.xlu0 %1721
    %1723 = vrot.lane.b32.xlu0 %v1686, 32
    %v1724 = vpop.permute.xlu0 %1723
    %1725 = vrot.lane.b32.xlu0 %v1687, 32
    %v1726 = vpop.permute.xlu0 %1725
    %1727 = vrot.lane.b32.xlu0 %v1688, 32
    %v1728 = vpop.permute.xlu0 %1727
    %1729 = vrot.lane.b32.xlu0 %v1689, 32
    %v1730 = vpop.permute.xlu0 %1729
    %1731 = vrot.lane.b32.xlu0 %v1690, 32
    %v1732 = vpop.permute.xlu0 %1731
    %1733 = vrot.lane.b32.xlu0 %v1691, 32
    %v1734 = vpop.permute.xlu0 %1733
    %1735 = vrot.lane.b32.xlu0 %v1692, 32
    %v1736 = vpop.permute.xlu0 %1735
    %1737 = vrot.lane.b32.xlu0 %v1693, 32
    %v1738 = vpop.permute.xlu0 %1737
    %1739 = vrot.lane.b32.xlu0 %v1694, 32
    %v1740 = vpop.permute.xlu0 %1739
    %1741 = vrot.lane.b32.xlu0 %v1695, 32
    %v1742 = vpop.permute.xlu0 %1741
    %1743 = vrot.lane.b32.xlu0 %v1696, 32
    %v1744 = vpop.permute.xlu0 %1743
    %1761 = vst.msk [vmem:[#allocation5 + $0x10] sm:$0xff] %vm1117, %v1714
    %1762 = vst.msk [vmem:[#allocation5 + $0x48] sm:$0xff] %vm1117, %v1716
    %1763 = vst.msk [vmem:[#allocation5 + $0x80] sm:$0xff] %vm1117, %v1718
    %1764 = vst.msk [vmem:[#allocation5 + $0xb8] sm:$0xff] %vm1117, %v1720
    %1765 = vst.msk [vmem:[#allocation5 + $0xf0] sm:$0xff] %vm1117, %v1722
    %1766 = vst.msk [vmem:[#allocation5 + $0x128] sm:$0xff] %vm1117, %v1724
    %1767 = vst.msk [vmem:[#allocation5 + $0x160] sm:$0xff] %vm1117, %v1726
    %1768 = vst.msk [vmem:[#allocation5 + $0x198] sm:$0xff] %vm1117, %v1728
    %1769 = vst.msk [vmem:[#allocation5 + $0x1d0] sm:$0xff] %vm1117, %v1730
    %1770 = vst.msk [vmem:[#allocation5 + $0x208] sm:$0xff] %vm1117, %v1732
    %1771 = vst.msk [vmem:[#allocation5 + $0x240] sm:$0xff] %vm1117, %v1734
    %1772 = vst.msk [vmem:[#allocation5 + $0x278] sm:$0xff] %vm1117, %v1736
    %1773 = vst.msk [vmem:[#allocation5 + $0x2b0] sm:$0xff] %vm1117, %v1738
    %1774 = vst.msk [vmem:[#allocation5 + $0x2e8] sm:$0xff] %vm1117, %v1740
    %1775 = vst.msk [vmem:[#allocation5 + $0x320] sm:$0xff] %vm1117, %v1742
    %1776 = vst.msk [vmem:[#allocation5 + $0x358] sm:$0xff] %vm1117, %v1744
    %v1777 = vld [vmem:[%s938] sm:$0xff]
    %v1778 = vld [vmem:[%s938 + $0x10] sm:$0xff]
    %v1779 = vld [vmem:[%s938 + $0x20] sm:$0xff]
    %v1780 = vld [vmem:[%s938 + $0x30] sm:$0xff]
    %v1781 = vld [vmem:[%s938 + $0x40] sm:$0xff]
    %v1782 = vld [vmem:[%s938 + $0x50] sm:$0xff]
    %v1783 = vld [vmem:[%s938 + $0x60] sm:$0xff]
    %v1784 = vld [vmem:[%s938 + $0x70] sm:$0xff]
    %v1785 = vld [vmem:[%s938 + $0xc0] sm:$0xff]
    %v1786 = vld [vmem:[%s938 + $0xd0] sm:$0xff]
    %v1787 = vld [vmem:[%s938 + $0xe0] sm:$0xff]
    %v1788 = vld [vmem:[%s938 + $0xf0] sm:$0xff]
    %v1789 = vld [vmem:[%s938 + $0x100] sm:$0xff]
    %v1790 = vld [vmem:[%s938 + $0x110] sm:$0xff]
    %v1791 = vld [vmem:[%s938 + $0x120] sm:$0xff]
    %v1792 = vld [vmem:[%s938 + $0x130] sm:$0xff]
    %1809 = vrot.lane.b32.xlu0 %v1777, 64
    %v1810 = vpop.permute.xlu0 %1809
    %1811 = vrot.lane.b32.xlu0 %v1778, 64
    %v1812 = vpop.permute.xlu0 %1811
    %1813 = vrot.lane.b32.xlu0 %v1779, 64
    %v1814 = vpop.permute.xlu0 %1813
    %1815 = vrot.lane.b32.xlu0 %v1780, 64
    %v1816 = vpop.permute.xlu0 %1815
    %1817 = vrot.lane.b32.xlu0 %v1781, 64
    %v1818 = vpop.permute.xlu0 %1817
    %1819 = vrot.lane.b32.xlu0 %v1782, 64
    %v1820 = vpop.permute.xlu0 %1819
    %1821 = vrot.lane.b32.xlu0 %v1783, 64
    %v1822 = vpop.permute.xlu0 %1821
    %1823 = vrot.lane.b32.xlu0 %v1784, 64
    %v1824 = vpop.permute.xlu0 %1823
    %1825 = vrot.lane.b32.xlu0 %v1785, 64
    %v1826 = vpop.permute.xlu0 %1825
    %1827 = vrot.lane.b32.xlu0 %v1786, 64
    %v1828 = vpop.permute.xlu0 %1827
    %1829 = vrot.lane.b32.xlu0 %v1787, 64
    %v1830 = vpop.permute.xlu0 %1829
    %1831 = vrot.lane.b32.xlu0 %v1788, 64
    %v1832 = vpop.permute.xlu0 %1831
    %1833 = vrot.lane.b32.xlu0 %v1789, 64
    %v1834 = vpop.permute.xlu0 %1833
    %1835 = vrot.lane.b32.xlu0 %v1790, 64
    %v1836 = vpop.permute.xlu0 %1835
    %1837 = vrot.lane.b32.xlu0 %v1791, 64
    %v1838 = vpop.permute.xlu0 %1837
    %1839 = vrot.lane.b32.xlu0 %v1792, 64
    %v1840 = vpop.permute.xlu0 %1839
    %1857 = vst.msk [vmem:[#allocation5 + $0x10] sm:$0xff] %vm1214, %v1810
    %1858 = vst.msk [vmem:[#allocation5 + $0x48] sm:$0xff] %vm1214, %v1812
    %1859 = vst.msk [vmem:[#allocation5 + $0x80] sm:$0xff] %vm1214, %v1814
    %1860 = vst.msk [vmem:[#allocation5 + $0xb8] sm:$0xff] %vm1214, %v1816
    %1861 = vst.msk [vmem:[#allocation5 + $0xf0] sm:$0xff] %vm1214, %v1818
    %1862 = vst.msk [vmem:[#allocation5 + $0x128] sm:$0xff] %vm1214, %v1820
    %1863 = vst.msk [vmem:[#allocation5 + $0x160] sm:$0xff] %vm1214, %v1822
    %1864 = vst.msk [vmem:[#allocation5 + $0x198] sm:$0xff] %vm1214, %v1824
    %1865 = vst.msk [vmem:[#allocation5 + $0x1d0] sm:$0xff] %vm1214, %v1826
    %1866 = vst.msk [vmem:[#allocation5 + $0x208] sm:$0xff] %vm1214, %v1828
    %1867 = vst.msk [vmem:[#allocation5 + $0x240] sm:$0xff] %vm1214, %v1830
    %1868 = vst.msk [vmem:[#allocation5 + $0x278] sm:$0xff] %vm1214, %v1832
    %1869 = vst.msk [vmem:[#allocation5 + $0x2b0] sm:$0xff] %vm1214, %v1834
    %1870 = vst.msk [vmem:[#allocation5 + $0x2e8] sm:$0xff] %vm1214, %v1836
    %1871 = vst.msk [vmem:[#allocation5 + $0x320] sm:$0xff] %vm1214, %v1838
    %1872 = vst.msk [vmem:[#allocation5 + $0x358] sm:$0xff] %vm1214, %v1840
    %v1873 = vld [vmem:[%s938 + $0x1] sm:$0xff]
    %v1874 = vld [vmem:[%s938 + $0x11] sm:$0xff]
    %v1875 = vld [vmem:[%s938 + $0x21] sm:$0xff]
    %v1876 = vld [vmem:[%s938 + $0x31] sm:$0xff]
    %v1877 = vld [vmem:[%s938 + $0x41] sm:$0xff]
    %v1878 = vld [vmem:[%s938 + $0x51] sm:$0xff]
    %v1879 = vld [vmem:[%s938 + $0x61] sm:$0xff]
    %v1880 = vld [vmem:[%s938 + $0x71] sm:$0xff]
    %v1881 = vld [vmem:[%s938 + $0xc1] sm:$0xff]
    %v1882 = vld [vmem:[%s938 + $0xd1] sm:$0xff]
    %v1883 = vld [vmem:[%s938 + $0xe1] sm:$0xff]
    %v1884 = vld [vmem:[%s938 + $0xf1] sm:$0xff]
    %v1885 = vld [vmem:[%s938 + $0x101] sm:$0xff]
    %v1886 = vld [vmem:[%s938 + $0x111] sm:$0xff]
    %v1887 = vld [vmem:[%s938 + $0x121] sm:$0xff]
    %v1888 = vld [vmem:[%s938 + $0x131] sm:$0xff]
    %1905 = vrot.lane.b32.xlu0 %v1873, 96
    %v1906 = vpop.permute.xlu0 %1905
    %1907 = vrot.lane.b32.xlu0 %v1874, 96
    %v1908 = vpop.permute.xlu0 %1907
    %1909 = vrot.lane.b32.xlu0 %v1875, 96
    %v1910 = vpop.permute.xlu0 %1909
    %1911 = vrot.lane.b32.xlu0 %v1876, 96
    %v1912 = vpop.permute.xlu0 %1911
    %1913 = vrot.lane.b32.xlu0 %v1877, 96
    %v1914 = vpop.permute.xlu0 %1913
    %1915 = vrot.lane.b32.xlu0 %v1878, 96
    %v1916 = vpop.permute.xlu0 %1915
    %1917 = vrot.lane.b32.xlu0 %v1879, 96
    %v1918 = vpop.permute.xlu0 %1917
    %1919 = vrot.lane.b32.xlu0 %v1880, 96
    %v1920 = vpop.permute.xlu0 %1919
    %1921 = vrot.lane.b32.xlu0 %v1881, 96
    %v1922 = vpop.permute.xlu0 %1921
    %1923 = vrot.lane.b32.xlu0 %v1882, 96
    %v1924 = vpop.permute.xlu0 %1923
    %1925 = vrot.lane.b32.xlu0 %v1883, 96
    %v1926 = vpop.permute.xlu0 %1925
    %1927 = vrot.lane.b32.xlu0 %v1884, 96
    %v1928 = vpop.permute.xlu0 %1927
    %1929 = vrot.lane.b32.xlu0 %v1885, 96
    %v1930 = vpop.permute.xlu0 %1929
    %1931 = vrot.lane.b32.xlu0 %v1886, 96
    %v1932 = vpop.permute.xlu0 %1931
    %1933 = vrot.lane.b32.xlu0 %v1887, 96
    %v1934 = vpop.permute.xlu0 %1933
    %1935 = vrot.lane.b32.xlu0 %v1888, 96
    %v1936 = vpop.permute.xlu0 %1935
    %1953 = vst.msk [vmem:[#allocation5 + $0x10] sm:$0xff] %vm1311, %v1906
    %1954 = vst.msk [vmem:[#allocation5 + $0x48] sm:$0xff] %vm1311, %v1908
    %1955 = vst.msk [vmem:[#allocation5 + $0x80] sm:$0xff] %vm1311, %v1910
    %1956 = vst.msk [vmem:[#allocation5 + $0xb8] sm:$0xff] %vm1311, %v1912
    %1957 = vst.msk [vmem:[#allocation5 + $0xf0] sm:$0xff] %vm1311, %v1914
    %1958 = vst.msk [vmem:[#allocation5 + $0x128] sm:$0xff] %vm1311, %v1916
    %1959 = vst.msk [vmem:[#allocation5 + $0x160] sm:$0xff] %vm1311, %v1918
    %1960 = vst.msk [vmem:[#allocation5 + $0x198] sm:$0xff] %vm1311, %v1920
    %1961 = vst.msk [vmem:[#allocation5 + $0x1d0] sm:$0xff] %vm1311, %v1922
    %1962 = vst.msk [vmem:[#allocation5 + $0x208] sm:$0xff] %vm1311, %v1924
    %1963 = vst.msk [vmem:[#allocation5 + $0x240] sm:$0xff] %vm1311, %v1926
    %1964 = vst.msk [vmem:[#allocation5 + $0x278] sm:$0xff] %vm1311, %v1928
    %1965 = vst.msk [vmem:[#allocation5 + $0x2b0] sm:$0xff] %vm1311, %v1930
    %1966 = vst.msk [vmem:[#allocation5 + $0x2e8] sm:$0xff] %vm1311, %v1932
    %1967 = vst.msk [vmem:[#allocation5 + $0x320] sm:$0xff] %vm1311, %v1934
    %1968 = vst.msk [vmem:[#allocation5 + $0x358] sm:$0xff] %vm1311, %v1936
    %v1969 = vld [vmem:[%s938 + $0x2] sm:$0xff]
    %v1970 = vld [vmem:[%s938 + $0x12] sm:$0xff]
    %v1971 = vld [vmem:[%s938 + $0x22] sm:$0xff]
    %v1972 = vld [vmem:[%s938 + $0x32] sm:$0xff]
    %v1973 = vld [vmem:[%s938 + $0x42] sm:$0xff]
    %v1974 = vld [vmem:[%s938 + $0x52] sm:$0xff]
    %v1975 = vld [vmem:[%s938 + $0x62] sm:$0xff]
    %v1976 = vld [vmem:[%s938 + $0x72] sm:$0xff]
    %v1977 = vld [vmem:[%s938 + $0xc2] sm:$0xff]
    %v1978 = vld [vmem:[%s938 + $0xd2] sm:$0xff]
    %v1979 = vld [vmem:[%s938 + $0xe2] sm:$0xff]
    %v1980 = vld [vmem:[%s938 + $0xf2] sm:$0xff]
    %v1981 = vld [vmem:[%s938 + $0x102] sm:$0xff]
    %v1982 = vld [vmem:[%s938 + $0x112] sm:$0xff]
    %v1983 = vld [vmem:[%s938 + $0x122] sm:$0xff]
    %v1984 = vld [vmem:[%s938 + $0x132] sm:$0xff]
    %1985 = vst.msk [vmem:[#allocation5 + $0x18] sm:$0xff] %vm1020, %v1969
    %1986 = vst.msk [vmem:[#allocation5 + $0x50] sm:$0xff] %vm1020, %v1970
    %1987 = vst.msk [vmem:[#allocation5 + $0x88] sm:$0xff] %vm1020, %v1971
    %1988 = vst.msk [vmem:[#allocation5 + $0xc0] sm:$0xff] %vm1020, %v1972
    %1989 = vst.msk [vmem:[#allocation5 + $0xf8] sm:$0xff] %vm1020, %v1973
    %1990 = vst.msk [vmem:[#allocation5 + $0x130] sm:$0xff] %vm1020, %v1974
    %1991 = vst.msk [vmem:[#allocation5 + $0x168] sm:$0xff] %vm1020, %v1975
    %1992 = vst.msk [vmem:[#allocation5 + $0x1a0] sm:$0xff] %vm1020, %v1976
    %1993 = vst.msk [vmem:[#allocation5 + $0x1d8] sm:$0xff] %vm1020, %v1977
    %1994 = vst.msk [vmem:[#allocation5 + $0x210] sm:$0xff] %vm1020, %v1978
    %1995 = vst.msk [vmem:[#allocation5 + $0x248] sm:$0xff] %vm1020, %v1979
    %1996 = vst.msk [vmem:[#allocation5 + $0x280] sm:$0xff] %vm1020, %v1980
    %1997 = vst.msk [vmem:[#allocation5 + $0x2b8] sm:$0xff] %vm1020, %v1981
    %1998 = vst.msk [vmem:[#allocation5 + $0x2f0] sm:$0xff] %vm1020, %v1982
    %1999 = vst.msk [vmem:[#allocation5 + $0x328] sm:$0xff] %vm1020, %v1983
    %2000 = vst.msk [vmem:[#allocation5 + $0x360] sm:$0xff] %vm1020, %v1984
    %v2001 = vld [vmem:[%s938 + $0x3] sm:$0xff]
    %v2002 = vld [vmem:[%s938 + $0x13] sm:$0xff]
    %v2003 = vld [vmem:[%s938 + $0x23] sm:$0xff]
    %v2004 = vld [vmem:[%s938 + $0x33] sm:$0xff]
    %v2005 = vld [vmem:[%s938 + $0x43] sm:$0xff]
    %v2006 = vld [vmem:[%s938 + $0x53] sm:$0xff]
    %v2007 = vld [vmem:[%s938 + $0x63] sm:$0xff]
    %v2008 = vld [vmem:[%s938 + $0x73] sm:$0xff]
    %v2009 = vld [vmem:[%s938 + $0xc3] sm:$0xff]
    %v2010 = vld [vmem:[%s938 + $0xd3] sm:$0xff]
    %v2011 = vld [vmem:[%s938 + $0xe3] sm:$0xff]
    %v2012 = vld [vmem:[%s938 + $0xf3] sm:$0xff]
    %v2013 = vld [vmem:[%s938 + $0x103] sm:$0xff]
    %v2014 = vld [vmem:[%s938 + $0x113] sm:$0xff]
    %v2015 = vld [vmem:[%s938 + $0x123] sm:$0xff]
    %v2016 = vld [vmem:[%s938 + $0x133] sm:$0xff]
    %2033 = vrot.lane.b32.xlu0 %v2001, 32
    %v2034 = vpop.permute.xlu0 %2033
    %2035 = vrot.lane.b32.xlu0 %v2002, 32
    %v2036 = vpop.permute.xlu0 %2035
    %2037 = vrot.lane.b32.xlu0 %v2003, 32
    %v2038 = vpop.permute.xlu0 %2037
    %2039 = vrot.lane.b32.xlu0 %v2004, 32
    %v2040 = vpop.permute.xlu0 %2039
    %2041 = vrot.lane.b32.xlu0 %v2005, 32
    %v2042 = vpop.permute.xlu0 %2041
    %2043 = vrot.lane.b32.xlu0 %v2006, 32
    %v2044 = vpop.permute.xlu0 %2043
    %2045 = vrot.lane.b32.xlu0 %v2007, 32
    %v2046 = vpop.permute.xlu0 %2045
    %2047 = vrot.lane.b32.xlu0 %v2008, 32
    %v2048 = vpop.permute.xlu0 %2047
    %2049 = vrot.lane.b32.xlu0 %v2009, 32
    %v2050 = vpop.permute.xlu0 %2049
    %2051 = vrot.lane.b32.xlu0 %v2010, 32
    %v2052 = vpop.permute.xlu0 %2051
    %2053 = vrot.lane.b32.xlu0 %v2011, 32
    %v2054 = vpop.permute.xlu0 %2053
    %2055 = vrot.lane.b32.xlu0 %v2012, 32
    %v2056 = vpop.permute.xlu0 %2055
    %2057 = vrot.lane.b32.xlu0 %v2013, 32
    %v2058 = vpop.permute.xlu0 %2057
    %2059 = vrot.lane.b32.xlu0 %v2014, 32
    %v2060 = vpop.permute.xlu0 %2059
    %2061 = vrot.lane.b32.xlu0 %v2015, 32
    %v2062 = vpop.permute.xlu0 %2061
    %2063 = vrot.lane.b32.xlu0 %v2016, 32
    %v2064 = vpop.permute.xlu0 %2063
    %2081 = vst.msk [vmem:[#allocation5 + $0x18] sm:$0xff] %vm1117, %v2034
    %2082 = vst.msk [vmem:[#allocation5 + $0x50] sm:$0xff] %vm1117, %v2036
    %2083 = vst.msk [vmem:[#allocation5 + $0x88] sm:$0xff] %vm1117, %v2038
    %2084 = vst.msk [vmem:[#allocation5 + $0xc0] sm:$0xff] %vm1117, %v2040
    %2085 = vst.msk [vmem:[#allocation5 + $0xf8] sm:$0xff] %vm1117, %v2042
    %2086 = vst.msk [vmem:[#allocation5 + $0x130] sm:$0xff] %vm1117, %v2044
    %2087 = vst.msk [vmem:[#allocation5 + $0x168] sm:$0xff] %vm1117, %v2046
    %2088 = vst.msk [vmem:[#allocation5 + $0x1a0] sm:$0xff] %vm1117, %v2048
    %2089 = vst.msk [vmem:[#allocation5 + $0x1d8] sm:$0xff] %vm1117, %v2050
    %2090 = vst.msk [vmem:[#allocation5 + $0x210] sm:$0xff] %vm1117, %v2052
    %2091 = vst.msk [vmem:[#allocation5 + $0x248] sm:$0xff] %vm1117, %v2054
    %2092 = vst.msk [vmem:[#allocation5 + $0x280] sm:$0xff] %vm1117, %v2056
    %2093 = vst.msk [vmem:[#allocation5 + $0x2b8] sm:$0xff] %vm1117, %v2058
    %2094 = vst.msk [vmem:[#allocation5 + $0x2f0] sm:$0xff] %vm1117, %v2060
    %2095 = vst.msk [vmem:[#allocation5 + $0x328] sm:$0xff] %vm1117, %v2062
    %2096 = vst.msk [vmem:[#allocation5 + $0x360] sm:$0xff] %vm1117, %v2064
    %v2097 = vld [vmem:[%s938 + $0x4] sm:$0xff]
    %v2098 = vld [vmem:[%s938 + $0x14] sm:$0xff]
    %v2099 = vld [vmem:[%s938 + $0x24] sm:$0xff]
    %v2100 = vld [vmem:[%s938 + $0x34] sm:$0xff]
    %v2101 = vld [vmem:[%s938 + $0x44] sm:$0xff]
    %v2102 = vld [vmem:[%s938 + $0x54] sm:$0xff]
    %v2103 = vld [vmem:[%s938 + $0x64] sm:$0xff]
    %v2104 = vld [vmem:[%s938 + $0x74] sm:$0xff]
    %v2105 = vld [vmem:[%s938 + $0xc4] sm:$0xff]
    %v2106 = vld [vmem:[%s938 + $0xd4] sm:$0xff]
    %v2107 = vld [vmem:[%s938 + $0xe4] sm:$0xff]
    %v2108 = vld [vmem:[%s938 + $0xf4] sm:$0xff]
    %v2109 = vld [vmem:[%s938 + $0x104] sm:$0xff]
    %v2110 = vld [vmem:[%s938 + $0x114] sm:$0xff]
    %v2111 = vld [vmem:[%s938 + $0x124] sm:$0xff]
    %v2112 = vld [vmem:[%s938 + $0x134] sm:$0xff]
    %2129 = vrot.lane.b32.xlu0 %v2097, 64
    %v2130 = vpop.permute.xlu0 %2129
    %2131 = vrot.lane.b32.xlu0 %v2098, 64
    %v2132 = vpop.permute.xlu0 %2131
    %2133 = vrot.lane.b32.xlu0 %v2099, 64
    %v2134 = vpop.permute.xlu0 %2133
    %2135 = vrot.lane.b32.xlu0 %v2100, 64
    %v2136 = vpop.permute.xlu0 %2135
    %2137 = vrot.lane.b32.xlu0 %v2101, 64
    %v2138 = vpop.permute.xlu0 %2137
    %2139 = vrot.lane.b32.xlu0 %v2102, 64
    %v2140 = vpop.permute.xlu0 %2139
    %2141 = vrot.lane.b32.xlu0 %v2103, 64
    %v2142 = vpop.permute.xlu0 %2141
    %2143 = vrot.lane.b32.xlu0 %v2104, 64
    %v2144 = vpop.permute.xlu0 %2143
    %2145 = vrot.lane.b32.xlu0 %v2105, 64
    %v2146 = vpop.permute.xlu0 %2145
    %2147 = vrot.lane.b32.xlu0 %v2106, 64
    %v2148 = vpop.permute.xlu0 %2147
    %2149 = vrot.lane.b32.xlu0 %v2107, 64
    %v2150 = vpop.permute.xlu0 %2149
    %2151 = vrot.lane.b32.xlu0 %v2108, 64
    %v2152 = vpop.permute.xlu0 %2151
    %2153 = vrot.lane.b32.xlu0 %v2109, 64
    %v2154 = vpop.permute.xlu0 %2153
    %2155 = vrot.lane.b32.xlu0 %v2110, 64
    %v2156 = vpop.permute.xlu0 %2155
    %2157 = vrot.lane.b32.xlu0 %v2111, 64
    %v2158 = vpop.permute.xlu0 %2157
    %2159 = vrot.lane.b32.xlu0 %v2112, 64
    %v2160 = vpop.permute.xlu0 %2159
    %2177 = vst.msk [vmem:[#allocation5 + $0x18] sm:$0xff] %vm1214, %v2130
    %2178 = vst.msk [vmem:[#allocation5 + $0x50] sm:$0xff] %vm1214, %v2132
    %2179 = vst.msk [vmem:[#allocation5 + $0x88] sm:$0xff] %vm1214, %v2134
    %2180 = vst.msk [vmem:[#allocation5 + $0xc0] sm:$0xff] %vm1214, %v2136
    %2181 = vst.msk [vmem:[#allocation5 + $0xf8] sm:$0xff] %vm1214, %v2138
    %2182 = vst.msk [vmem:[#allocation5 + $0x130] sm:$0xff] %vm1214, %v2140
    %2183 = vst.msk [vmem:[#allocation5 + $0x168] sm:$0xff] %vm1214, %v2142
    %2184 = vst.msk [vmem:[#allocation5 + $0x1a0] sm:$0xff] %vm1214, %v2144
    %2185 = vst.msk [vmem:[#allocation5 + $0x1d8] sm:$0xff] %vm1214, %v2146
    %2186 = vst.msk [vmem:[#allocation5 + $0x210] sm:$0xff] %vm1214, %v2148
    %2187 = vst.msk [vmem:[#allocation5 + $0x248] sm:$0xff] %vm1214, %v2150
    %2188 = vst.msk [vmem:[#allocation5 + $0x280] sm:$0xff] %vm1214, %v2152
    %2189 = vst.msk [vmem:[#allocation5 + $0x2b8] sm:$0xff] %vm1214, %v2154
    %2190 = vst.msk [vmem:[#allocation5 + $0x2f0] sm:$0xff] %vm1214, %v2156
    %2191 = vst.msk [vmem:[#allocation5 + $0x328] sm:$0xff] %vm1214, %v2158
    %2192 = vst.msk [vmem:[#allocation5 + $0x360] sm:$0xff] %vm1214, %v2160
    %s2193 = scalar_lea.vmem [#allocation4], 48
    %v2194 = vld [vmem:[%s2193] sm:$0xff]
    %v2195 = vld [vmem:[%s2193 + $0x10] sm:$0xff]
    %v2196 = vld [vmem:[%s2193 + $0x20] sm:$0xff]
    %v2197 = vld [vmem:[%s2193 + $0x30] sm:$0xff]
    %v2198 = vld [vmem:[%s2193 + $0x40] sm:$0xff]
    %v2199 = vld [vmem:[%s2193 + $0x50] sm:$0xff]
    %v2200 = vld [vmem:[%s2193 + $0x60] sm:$0xff]
    %v2201 = vld [vmem:[%s2193 + $0x70] sm:$0xff]
    %v2202 = vld [vmem:[%s2193 + $0xc0] sm:$0xff]
    %v2203 = vld [vmem:[%s2193 + $0xd0] sm:$0xff]
    %v2204 = vld [vmem:[%s2193 + $0xe0] sm:$0xff]
    %v2205 = vld [vmem:[%s2193 + $0xf0] sm:$0xff]
    %v2206 = vld [vmem:[%s2193 + $0x100] sm:$0xff]
    %v2207 = vld [vmem:[%s2193 + $0x110] sm:$0xff]
    %v2208 = vld [vmem:[%s2193 + $0x120] sm:$0xff]
    %v2209 = vld [vmem:[%s2193 + $0x130] sm:$0xff]
    %2226 = vrot.lane.b32.xlu0 %v2194, 96
    %v2227 = vpop.permute.xlu0 %2226
    %2228 = vrot.lane.b32.xlu0 %v2195, 96
    %v2229 = vpop.permute.xlu0 %2228
    %2230 = vrot.lane.b32.xlu0 %v2196, 96
    %v2231 = vpop.permute.xlu0 %2230
    %2232 = vrot.lane.b32.xlu0 %v2197, 96
    %v2233 = vpop.permute.xlu0 %2232
    %2234 = vrot.lane.b32.xlu0 %v2198, 96
    %v2235 = vpop.permute.xlu0 %2234
    %2236 = vrot.lane.b32.xlu0 %v2199, 96
    %v2237 = vpop.permute.xlu0 %2236
    %2238 = vrot.lane.b32.xlu0 %v2200, 96
    %v2239 = vpop.permute.xlu0 %2238
    %2240 = vrot.lane.b32.xlu0 %v2201, 96
    %v2241 = vpop.permute.xlu0 %2240
    %2242 = vrot.lane.b32.xlu0 %v2202, 96
    %v2243 = vpop.permute.xlu0 %2242
    %2244 = vrot.lane.b32.xlu0 %v2203, 96
    %v2245 = vpop.permute.xlu0 %2244
    %2246 = vrot.lane.b32.xlu0 %v2204, 96
    %v2247 = vpop.permute.xlu0 %2246
    %2248 = vrot.lane.b32.xlu0 %v2205, 96
    %v2249 = vpop.permute.xlu0 %2248
    %2250 = vrot.lane.b32.xlu0 %v2206, 96
    %v2251 = vpop.permute.xlu0 %2250
    %2252 = vrot.lane.b32.xlu0 %v2207, 96
    %v2253 = vpop.permute.xlu0 %2252
    %2254 = vrot.lane.b32.xlu0 %v2208, 96
    %v2255 = vpop.permute.xlu0 %2254
    %2256 = vrot.lane.b32.xlu0 %v2209, 96
    %v2257 = vpop.permute.xlu0 %2256
    %2274 = vst.msk [vmem:[#allocation5 + $0x18] sm:$0xff] %vm1311, %v2227
    %2275 = vst.msk [vmem:[#allocation5 + $0x50] sm:$0xff] %vm1311, %v2229
    %2276 = vst.msk [vmem:[#allocation5 + $0x88] sm:$0xff] %vm1311, %v2231
    %2277 = vst.msk [vmem:[#allocation5 + $0xc0] sm:$0xff] %vm1311, %v2233
    %2278 = vst.msk [vmem:[#allocation5 + $0xf8] sm:$0xff] %vm1311, %v2235
    %2279 = vst.msk [vmem:[#allocation5 + $0x130] sm:$0xff] %vm1311, %v2237
    %2280 = vst.msk [vmem:[#allocation5 + $0x168] sm:$0xff] %vm1311, %v2239
    %2281 = vst.msk [vmem:[#allocation5 + $0x1a0] sm:$0xff] %vm1311, %v2241
    %2282 = vst.msk [vmem:[#allocation5 + $0x1d8] sm:$0xff] %vm1311, %v2243
    %2283 = vst.msk [vmem:[#allocation5 + $0x210] sm:$0xff] %vm1311, %v2245
    %2284 = vst.msk [vmem:[#allocation5 + $0x248] sm:$0xff] %vm1311, %v2247
    %2285 = vst.msk [vmem:[#allocation5 + $0x280] sm:$0xff] %vm1311, %v2249
    %2286 = vst.msk [vmem:[#allocation5 + $0x2b8] sm:$0xff] %vm1311, %v2251
    %2287 = vst.msk [vmem:[#allocation5 + $0x2f0] sm:$0xff] %vm1311, %v2253
    %2288 = vst.msk [vmem:[#allocation5 + $0x328] sm:$0xff] %vm1311, %v2255
    %2289 = vst.msk [vmem:[#allocation5 + $0x360] sm:$0xff] %vm1311, %v2257
    %v2290 = vld [vmem:[%s2193 + $0x1] sm:$0xff]
    %v2291 = vld [vmem:[%s2193 + $0x11] sm:$0xff]
    %v2292 = vld [vmem:[%s2193 + $0x21] sm:$0xff]
    %v2293 = vld [vmem:[%s2193 + $0x31] sm:$0xff]
    %v2294 = vld [vmem:[%s2193 + $0x41] sm:$0xff]
    %v2295 = vld [vmem:[%s2193 + $0x51] sm:$0xff]
    %v2296 = vld [vmem:[%s2193 + $0x61] sm:$0xff]
    %v2297 = vld [vmem:[%s2193 + $0x71] sm:$0xff]
    %v2298 = vld [vmem:[%s2193 + $0xc1] sm:$0xff]
    %v2299 = vld [vmem:[%s2193 + $0xd1] sm:$0xff]
    %v2300 = vld [vmem:[%s2193 + $0xe1] sm:$0xff]
    %v2301 = vld [vmem:[%s2193 + $0xf1] sm:$0xff]
    %v2302 = vld [vmem:[%s2193 + $0x101] sm:$0xff]
    %v2303 = vld [vmem:[%s2193 + $0x111] sm:$0xff]
    %v2304 = vld [vmem:[%s2193 + $0x121] sm:$0xff]
    %v2305 = vld [vmem:[%s2193 + $0x131] sm:$0xff]
    %2306 = vst.msk [vmem:[#allocation5 + $0x20] sm:$0xff] %vm1020, %v2290
    %2307 = vst.msk [vmem:[#allocation5 + $0x58] sm:$0xff] %vm1020, %v2291
    %2308 = vst.msk [vmem:[#allocation5 + $0x90] sm:$0xff] %vm1020, %v2292
    %2309 = vst.msk [vmem:[#allocation5 + $0xc8] sm:$0xff] %vm1020, %v2293
    %2310 = vst.msk [vmem:[#allocation5 + $0x100] sm:$0xff] %vm1020, %v2294
    %2311 = vst.msk [vmem:[#allocation5 + $0x138] sm:$0xff] %vm1020, %v2295
    %2312 = vst.msk [vmem:[#allocation5 + $0x170] sm:$0xff] %vm1020, %v2296
    %2313 = vst.msk [vmem:[#allocation5 + $0x1a8] sm:$0xff] %vm1020, %v2297
    %2314 = vst.msk [vmem:[#allocation5 + $0x1e0] sm:$0xff] %vm1020, %v2298
    %2315 = vst.msk [vmem:[#allocation5 + $0x218] sm:$0xff] %vm1020, %v2299
    %2316 = vst.msk [vmem:[#allocation5 + $0x250] sm:$0xff] %vm1020, %v2300
    %2317 = vst.msk [vmem:[#allocation5 + $0x288] sm:$0xff] %vm1020, %v2301
    %2318 = vst.msk [vmem:[#allocation5 + $0x2c0] sm:$0xff] %vm1020, %v2302
    %2319 = vst.msk [vmem:[#allocation5 + $0x2f8] sm:$0xff] %vm1020, %v2303
    %2320 = vst.msk [vmem:[#allocation5 + $0x330] sm:$0xff] %vm1020, %v2304
    %2321 = vst.msk [vmem:[#allocation5 + $0x368] sm:$0xff] %vm1020, %v2305
    %v2322 = vld [vmem:[%s2193 + $0x2] sm:$0xff]
    %v2323 = vld [vmem:[%s2193 + $0x12] sm:$0xff]
    %v2324 = vld [vmem:[%s2193 + $0x22] sm:$0xff]
    %v2325 = vld [vmem:[%s2193 + $0x32] sm:$0xff]
    %v2326 = vld [vmem:[%s2193 + $0x42] sm:$0xff]
    %v2327 = vld [vmem:[%s2193 + $0x52] sm:$0xff]
    %v2328 = vld [vmem:[%s2193 + $0x62] sm:$0xff]
    %v2329 = vld [vmem:[%s2193 + $0x72] sm:$0xff]
    %v2330 = vld [vmem:[%s2193 + $0xc2] sm:$0xff]
    %v2331 = vld [vmem:[%s2193 + $0xd2] sm:$0xff]
    %v2332 = vld [vmem:[%s2193 + $0xe2] sm:$0xff]
    %v2333 = vld [vmem:[%s2193 + $0xf2] sm:$0xff]
    %v2334 = vld [vmem:[%s2193 + $0x102] sm:$0xff]
    %v2335 = vld [vmem:[%s2193 + $0x112] sm:$0xff]
    %v2336 = vld [vmem:[%s2193 + $0x122] sm:$0xff]
    %v2337 = vld [vmem:[%s2193 + $0x132] sm:$0xff]
    %2354 = vrot.lane.b32.xlu0 %v2322, 32
    %v2355 = vpop.permute.xlu0 %2354
    %2356 = vrot.lane.b32.xlu0 %v2323, 32
    %v2357 = vpop.permute.xlu0 %2356
    %2358 = vrot.lane.b32.xlu0 %v2324, 32
    %v2359 = vpop.permute.xlu0 %2358
    %2360 = vrot.lane.b32.xlu0 %v2325, 32
    %v2361 = vpop.permute.xlu0 %2360
    %2362 = vrot.lane.b32.xlu0 %v2326, 32
    %v2363 = vpop.permute.xlu0 %2362
    %2364 = vrot.lane.b32.xlu0 %v2327, 32
    %v2365 = vpop.permute.xlu0 %2364
    %2366 = vrot.lane.b32.xlu0 %v2328, 32
    %v2367 = vpop.permute.xlu0 %2366
    %2368 = vrot.lane.b32.xlu0 %v2329, 32
    %v2369 = vpop.permute.xlu0 %2368
    %2370 = vrot.lane.b32.xlu0 %v2330, 32
    %v2371 = vpop.permute.xlu0 %2370
    %2372 = vrot.lane.b32.xlu0 %v2331, 32
    %v2373 = vpop.permute.xlu0 %2372
    %2374 = vrot.lane.b32.xlu0 %v2332, 32
    %v2375 = vpop.permute.xlu0 %2374
    %2376 = vrot.lane.b32.xlu0 %v2333, 32
    %v2377 = vpop.permute.xlu0 %2376
    %2378 = vrot.lane.b32.xlu0 %v2334, 32
    %v2379 = vpop.permute.xlu0 %2378
    %2380 = vrot.lane.b32.xlu0 %v2335, 32
    %v2381 = vpop.permute.xlu0 %2380
    %2382 = vrot.lane.b32.xlu0 %v2336, 32
    %v2383 = vpop.permute.xlu0 %2382
    %2384 = vrot.lane.b32.xlu0 %v2337, 32
    %v2385 = vpop.permute.xlu0 %2384
    %2402 = vst.msk [vmem:[#allocation5 + $0x20] sm:$0xff] %vm1117, %v2355
    %2403 = vst.msk [vmem:[#allocation5 + $0x58] sm:$0xff] %vm1117, %v2357
    %2404 = vst.msk [vmem:[#allocation5 + $0x90] sm:$0xff] %vm1117, %v2359
    %2405 = vst.msk [vmem:[#allocation5 + $0xc8] sm:$0xff] %vm1117, %v2361
    %2406 = vst.msk [vmem:[#allocation5 + $0x100] sm:$0xff] %vm1117, %v2363
    %2407 = vst.msk [vmem:[#allocation5 + $0x138] sm:$0xff] %vm1117, %v2365
    %2408 = vst.msk [vmem:[#allocation5 + $0x170] sm:$0xff] %vm1117, %v2367
    %2409 = vst.msk [vmem:[#allocation5 + $0x1a8] sm:$0xff] %vm1117, %v2369
    %2410 = vst.msk [vmem:[#allocation5 + $0x1e0] sm:$0xff] %vm1117, %v2371
    %2411 = vst.msk [vmem:[#allocation5 + $0x218] sm:$0xff] %vm1117, %v2373
    %2412 = vst.msk [vmem:[#allocation5 + $0x250] sm:$0xff] %vm1117, %v2375
    %2413 = vst.msk [vmem:[#allocation5 + $0x288] sm:$0xff] %vm1117, %v2377
    %2414 = vst.msk [vmem:[#allocation5 + $0x2c0] sm:$0xff] %vm1117, %v2379
    %2415 = vst.msk [vmem:[#allocation5 + $0x2f8] sm:$0xff] %vm1117, %v2381
    %2416 = vst.msk [vmem:[#allocation5 + $0x330] sm:$0xff] %vm1117, %v2383
    %2417 = vst.msk [vmem:[#allocation5 + $0x368] sm:$0xff] %vm1117, %v2385
    %v2418 = vld [vmem:[%s2193 + $0x3] sm:$0xff]
    %v2419 = vld [vmem:[%s2193 + $0x13] sm:$0xff]
    %v2420 = vld [vmem:[%s2193 + $0x23] sm:$0xff]
    %v2421 = vld [vmem:[%s2193 + $0x33] sm:$0xff]
    %v2422 = vld [vmem:[%s2193 + $0x43] sm:$0xff]
    %v2423 = vld [vmem:[%s2193 + $0x53] sm:$0xff]
    %v2424 = vld [vmem:[%s2193 + $0x63] sm:$0xff]
    %v2425 = vld [vmem:[%s2193 + $0x73] sm:$0xff]
    %v2426 = vld [vmem:[%s2193 + $0xc3] sm:$0xff]
    %v2427 = vld [vmem:[%s2193 + $0xd3] sm:$0xff]
    %v2428 = vld [vmem:[%s2193 + $0xe3] sm:$0xff]
    %v2429 = vld [vmem:[%s2193 + $0xf3] sm:$0xff]
    %v2430 = vld [vmem:[%s2193 + $0x103] sm:$0xff]
    %v2431 = vld [vmem:[%s2193 + $0x113] sm:$0xff]
    %v2432 = vld [vmem:[%s2193 + $0x123] sm:$0xff]
    %v2433 = vld [vmem:[%s2193 + $0x133] sm:$0xff]
    %2450 = vrot.lane.b32.xlu0 %v2418, 64
    %v2451 = vpop.permute.xlu0 %2450
    %2452 = vrot.lane.b32.xlu0 %v2419, 64
    %v2453 = vpop.permute.xlu0 %2452
    %2454 = vrot.lane.b32.xlu0 %v2420, 64
    %v2455 = vpop.permute.xlu0 %2454
    %2456 = vrot.lane.b32.xlu0 %v2421, 64
    %v2457 = vpop.permute.xlu0 %2456
    %2458 = vrot.lane.b32.xlu0 %v2422, 64
    %v2459 = vpop.permute.xlu0 %2458
    %2460 = vrot.lane.b32.xlu0 %v2423, 64
    %v2461 = vpop.permute.xlu0 %2460
    %2462 = vrot.lane.b32.xlu0 %v2424, 64
    %v2463 = vpop.permute.xlu0 %2462
    %2464 = vrot.lane.b32.xlu0 %v2425, 64
    %v2465 = vpop.permute.xlu0 %2464
    %2466 = vrot.lane.b32.xlu0 %v2426, 64
    %v2467 = vpop.permute.xlu0 %2466
    %2468 = vrot.lane.b32.xlu0 %v2427, 64
    %v2469 = vpop.permute.xlu0 %2468
    %2470 = vrot.lane.b32.xlu0 %v2428, 64
    %v2471 = vpop.permute.xlu0 %2470
    %2472 = vrot.lane.b32.xlu0 %v2429, 64
    %v2473 = vpop.permute.xlu0 %2472
    %2474 = vrot.lane.b32.xlu0 %v2430, 64
    %v2475 = vpop.permute.xlu0 %2474
    %2476 = vrot.lane.b32.xlu0 %v2431, 64
    %v2477 = vpop.permute.xlu0 %2476
    %2478 = vrot.lane.b32.xlu0 %v2432, 64
    %v2479 = vpop.permute.xlu0 %2478
    %2480 = vrot.lane.b32.xlu0 %v2433, 64
    %v2481 = vpop.permute.xlu0 %2480
    %2498 = vst.msk [vmem:[#allocation5 + $0x20] sm:$0xff] %vm1214, %v2451
    %2499 = vst.msk [vmem:[#allocation5 + $0x58] sm:$0xff] %vm1214, %v2453
    %2500 = vst.msk [vmem:[#allocation5 + $0x90] sm:$0xff] %vm1214, %v2455
    %2501 = vst.msk [vmem:[#allocation5 + $0xc8] sm:$0xff] %vm1214, %v2457
    %2502 = vst.msk [vmem:[#allocation5 + $0x100] sm:$0xff] %vm1214, %v2459
    %2503 = vst.msk [vmem:[#allocation5 + $0x138] sm:$0xff] %vm1214, %v2461
    %2504 = vst.msk [vmem:[#allocation5 + $0x170] sm:$0xff] %vm1214, %v2463
    %2505 = vst.msk [vmem:[#allocation5 + $0x1a8] sm:$0xff] %vm1214, %v2465
    %2506 = vst.msk [vmem:[#allocation5 + $0x1e0] sm:$0xff] %vm1214, %v2467
    %2507 = vst.msk [vmem:[#allocation5 + $0x218] sm:$0xff] %vm1214, %v2469
    %2508 = vst.msk [vmem:[#allocation5 + $0x250] sm:$0xff] %vm1214, %v2471
    %2509 = vst.msk [vmem:[#allocation5 + $0x288] sm:$0xff] %vm1214, %v2473
    %2510 = vst.msk [vmem:[#allocation5 + $0x2c0] sm:$0xff] %vm1214, %v2475
    %2511 = vst.msk [vmem:[#allocation5 + $0x2f8] sm:$0xff] %vm1214, %v2477
    %2512 = vst.msk [vmem:[#allocation5 + $0x330] sm:$0xff] %vm1214, %v2479
    %2513 = vst.msk [vmem:[#allocation5 + $0x368] sm:$0xff] %vm1214, %v2481
    %v2514 = vld [vmem:[%s2193 + $0x4] sm:$0xff]
    %v2515 = vld [vmem:[%s2193 + $0x14] sm:$0xff]
    %v2516 = vld [vmem:[%s2193 + $0x24] sm:$0xff]
    %v2517 = vld [vmem:[%s2193 + $0x34] sm:$0xff]
    %v2518 = vld [vmem:[%s2193 + $0x44] sm:$0xff]
    %v2519 = vld [vmem:[%s2193 + $0x54] sm:$0xff]
    %v2520 = vld [vmem:[%s2193 + $0x64] sm:$0xff]
    %v2521 = vld [vmem:[%s2193 + $0x74] sm:$0xff]
    %v2522 = vld [vmem:[%s2193 + $0xc4] sm:$0xff]
    %v2523 = vld [vmem:[%s2193 + $0xd4] sm:$0xff]
    %v2524 = vld [vmem:[%s2193 + $0xe4] sm:$0xff]
    %v2525 = vld [vmem:[%s2193 + $0xf4] sm:$0xff]
    %v2526 = vld [vmem:[%s2193 + $0x104] sm:$0xff]
    %v2527 = vld [vmem:[%s2193 + $0x114] sm:$0xff]
    %v2528 = vld [vmem:[%s2193 + $0x124] sm:$0xff]
    %v2529 = vld [vmem:[%s2193 + $0x134] sm:$0xff]
    %2546 = vrot.lane.b32.xlu0 %v2514, 96
    %v2547 = vpop.permute.xlu0 %2546
    %2548 = vrot.lane.b32.xlu0 %v2515, 96
    %v2549 = vpop.permute.xlu0 %2548
    %2550 = vrot.lane.b32.xlu0 %v2516, 96
    %v2551 = vpop.permute.xlu0 %2550
    %2552 = vrot.lane.b32.xlu0 %v2517, 96
    %v2553 = vpop.permute.xlu0 %2552
    %2554 = vrot.lane.b32.xlu0 %v2518, 96
    %v2555 = vpop.permute.xlu0 %2554
    %2556 = vrot.lane.b32.xlu0 %v2519, 96
    %v2557 = vpop.permute.xlu0 %2556
    %2558 = vrot.lane.b32.xlu0 %v2520, 96
    %v2559 = vpop.permute.xlu0 %2558
    %2560 = vrot.lane.b32.xlu0 %v2521, 96
    %v2561 = vpop.permute.xlu0 %2560
    %2562 = vrot.lane.b32.xlu0 %v2522, 96
    %v2563 = vpop.permute.xlu0 %2562
    %2564 = vrot.lane.b32.xlu0 %v2523, 96
    %v2565 = vpop.permute.xlu0 %2564
    %2566 = vrot.lane.b32.xlu0 %v2524, 96
    %v2567 = vpop.permute.xlu0 %2566
    %2568 = vrot.lane.b32.xlu0 %v2525, 96
    %v2569 = vpop.permute.xlu0 %2568
    %2570 = vrot.lane.b32.xlu0 %v2526, 96
    %v2571 = vpop.permute.xlu0 %2570
    %2572 = vrot.lane.b32.xlu0 %v2527, 96
    %v2573 = vpop.permute.xlu0 %2572
    %2574 = vrot.lane.b32.xlu0 %v2528, 96
    %v2575 = vpop.permute.xlu0 %2574
    %2576 = vrot.lane.b32.xlu0 %v2529, 96
    %v2577 = vpop.permute.xlu0 %2576
    %2594 = vst.msk [vmem:[#allocation5 + $0x20] sm:$0xff] %vm1311, %v2547
    %2595 = vst.msk [vmem:[#allocation5 + $0x58] sm:$0xff] %vm1311, %v2549
    %2596 = vst.msk [vmem:[#allocation5 + $0x90] sm:$0xff] %vm1311, %v2551
    %2597 = vst.msk [vmem:[#allocation5 + $0xc8] sm:$0xff] %vm1311, %v2553
    %2598 = vst.msk [vmem:[#allocation5 + $0x100] sm:$0xff] %vm1311, %v2555
    %2599 = vst.msk [vmem:[#allocation5 + $0x138] sm:$0xff] %vm1311, %v2557
    %2600 = vst.msk [vmem:[#allocation5 + $0x170] sm:$0xff] %vm1311, %v2559
    %2601 = vst.msk [vmem:[#allocation5 + $0x1a8] sm:$0xff] %vm1311, %v2561
    %2602 = vst.msk [vmem:[#allocation5 + $0x1e0] sm:$0xff] %vm1311, %v2563
    %2603 = vst.msk [vmem:[#allocation5 + $0x218] sm:$0xff] %vm1311, %v2565
    %2604 = vst.msk [vmem:[#allocation5 + $0x250] sm:$0xff] %vm1311, %v2567
    %2605 = vst.msk [vmem:[#allocation5 + $0x288] sm:$0xff] %vm1311, %v2569
    %2606 = vst.msk [vmem:[#allocation5 + $0x2c0] sm:$0xff] %vm1311, %v2571
    %2607 = vst.msk [vmem:[#allocation5 + $0x2f8] sm:$0xff] %vm1311, %v2573
    %2608 = vst.msk [vmem:[#allocation5 + $0x330] sm:$0xff] %vm1311, %v2575
    %2609 = vst.msk [vmem:[#allocation5 + $0x368] sm:$0xff] %vm1311, %v2577
    %s2610 = scalar_lea.vmem [#allocation4], 64
    %v2611 = vld [vmem:[%s2610] sm:$0xff]
    %v2612 = vld [vmem:[%s2610 + $0x10] sm:$0xff]
    %v2613 = vld [vmem:[%s2610 + $0x20] sm:$0xff]
    %v2614 = vld [vmem:[%s2610 + $0x30] sm:$0xff]
    %v2615 = vld [vmem:[%s2610 + $0x40] sm:$0xff]
    %v2616 = vld [vmem:[%s2610 + $0x50] sm:$0xff]
    %v2617 = vld [vmem:[%s2610 + $0x60] sm:$0xff]
    %v2618 = vld [vmem:[%s2610 + $0x70] sm:$0xff]
    %v2619 = vld [vmem:[%s2610 + $0xc0] sm:$0xff]
    %v2620 = vld [vmem:[%s2610 + $0xd0] sm:$0xff]
    %v2621 = vld [vmem:[%s2610 + $0xe0] sm:$0xff]
    %v2622 = vld [vmem:[%s2610 + $0xf0] sm:$0xff]
    %v2623 = vld [vmem:[%s2610 + $0x100] sm:$0xff]
    %v2624 = vld [vmem:[%s2610 + $0x110] sm:$0xff]
    %v2625 = vld [vmem:[%s2610 + $0x120] sm:$0xff]
    %v2626 = vld [vmem:[%s2610 + $0x130] sm:$0xff]
    %2627 = vst.msk [vmem:[#allocation5 + $0x28] sm:$0xff] %vm1020, %v2611
    %2628 = vst.msk [vmem:[#allocation5 + $0x60] sm:$0xff] %vm1020, %v2612
    %2629 = vst.msk [vmem:[#allocation5 + $0x98] sm:$0xff] %vm1020, %v2613
    %2630 = vst.msk [vmem:[#allocation5 + $0xd0] sm:$0xff] %vm1020, %v2614
    %2631 = vst.msk [vmem:[#allocation5 + $0x108] sm:$0xff] %vm1020, %v2615
    %2632 = vst.msk [vmem:[#allocation5 + $0x140] sm:$0xff] %vm1020, %v2616
    %2633 = vst.msk [vmem:[#allocation5 + $0x178] sm:$0xff] %vm1020, %v2617
    %2634 = vst.msk [vmem:[#allocation5 + $0x1b0] sm:$0xff] %vm1020, %v2618
    %2635 = vst.msk [vmem:[#allocation5 + $0x1e8] sm:$0xff] %vm1020, %v2619
    %2636 = vst.msk [vmem:[#allocation5 + $0x220] sm:$0xff] %vm1020, %v2620
    %2637 = vst.msk [vmem:[#allocation5 + $0x258] sm:$0xff] %vm1020, %v2621
    %2638 = vst.msk [vmem:[#allocation5 + $0x290] sm:$0xff] %vm1020, %v2622
    %2639 = vst.msk [vmem:[#allocation5 + $0x2c8] sm:$0xff] %vm1020, %v2623
    %2640 = vst.msk [vmem:[#allocation5 + $0x300] sm:$0xff] %vm1020, %v2624
    %2641 = vst.msk [vmem:[#allocation5 + $0x338] sm:$0xff] %vm1020, %v2625
    %2642 = vst.msk [vmem:[#allocation5 + $0x370] sm:$0xff] %vm1020, %v2626
    %v2643 = vld [vmem:[%s2610 + $0x1] sm:$0xff]
    %v2644 = vld [vmem:[%s2610 + $0x11] sm:$0xff]
    %v2645 = vld [vmem:[%s2610 + $0x21] sm:$0xff]
    %v2646 = vld [vmem:[%s2610 + $0x31] sm:$0xff]
    %v2647 = vld [vmem:[%s2610 + $0x41] sm:$0xff]
    %v2648 = vld [vmem:[%s2610 + $0x51] sm:$0xff]
    %v2649 = vld [vmem:[%s2610 + $0x61] sm:$0xff]
    %v2650 = vld [vmem:[%s2610 + $0x71] sm:$0xff]
    %v2651 = vld [vmem:[%s2610 + $0xc1] sm:$0xff]
    %v2652 = vld [vmem:[%s2610 + $0xd1] sm:$0xff]
    %v2653 = vld [vmem:[%s2610 + $0xe1] sm:$0xff]
    %v2654 = vld [vmem:[%s2610 + $0xf1] sm:$0xff]
    %v2655 = vld [vmem:[%s2610 + $0x101] sm:$0xff]
    %v2656 = vld [vmem:[%s2610 + $0x111] sm:$0xff]
    %v2657 = vld [vmem:[%s2610 + $0x121] sm:$0xff]
    %v2658 = vld [vmem:[%s2610 + $0x131] sm:$0xff]
    %2675 = vrot.lane.b32.xlu0 %v2643, 32
    %v2676 = vpop.permute.xlu0 %2675
    %2677 = vrot.lane.b32.xlu0 %v2644, 32
    %v2678 = vpop.permute.xlu0 %2677
    %2679 = vrot.lane.b32.xlu0 %v2645, 32
    %v2680 = vpop.permute.xlu0 %2679
    %2681 = vrot.lane.b32.xlu0 %v2646, 32
    %v2682 = vpop.permute.xlu0 %2681
    %2683 = vrot.lane.b32.xlu0 %v2647, 32
    %v2684 = vpop.permute.xlu0 %2683
    %2685 = vrot.lane.b32.xlu0 %v2648, 32
    %v2686 = vpop.permute.xlu0 %2685
    %2687 = vrot.lane.b32.xlu0 %v2649, 32
    %v2688 = vpop.permute.xlu0 %2687
    %2689 = vrot.lane.b32.xlu0 %v2650, 32
    %v2690 = vpop.permute.xlu0 %2689
    %2691 = vrot.lane.b32.xlu0 %v2651, 32
    %v2692 = vpop.permute.xlu0 %2691
    %2693 = vrot.lane.b32.xlu0 %v2652, 32
    %v2694 = vpop.permute.xlu0 %2693
    %2695 = vrot.lane.b32.xlu0 %v2653, 32
    %v2696 = vpop.permute.xlu0 %2695
    %2697 = vrot.lane.b32.xlu0 %v2654, 32
    %v2698 = vpop.permute.xlu0 %2697
    %2699 = vrot.lane.b32.xlu0 %v2655, 32
    %v2700 = vpop.permute.xlu0 %2699
    %2701 = vrot.lane.b32.xlu0 %v2656, 32
    %v2702 = vpop.permute.xlu0 %2701
    %2703 = vrot.lane.b32.xlu0 %v2657, 32
    %v2704 = vpop.permute.xlu0 %2703
    %2705 = vrot.lane.b32.xlu0 %v2658, 32
    %v2706 = vpop.permute.xlu0 %2705
    %2723 = vst.msk [vmem:[#allocation5 + $0x28] sm:$0xff] %vm1117, %v2676
    %2724 = vst.msk [vmem:[#allocation5 + $0x60] sm:$0xff] %vm1117, %v2678
    %2725 = vst.msk [vmem:[#allocation5 + $0x98] sm:$0xff] %vm1117, %v2680
    %2726 = vst.msk [vmem:[#allocation5 + $0xd0] sm:$0xff] %vm1117, %v2682
    %2727 = vst.msk [vmem:[#allocation5 + $0x108] sm:$0xff] %vm1117, %v2684
    %2728 = vst.msk [vmem:[#allocation5 + $0x140] sm:$0xff] %vm1117, %v2686
    %2729 = vst.msk [vmem:[#allocation5 + $0x178] sm:$0xff] %vm1117, %v2688
    %2730 = vst.msk [vmem:[#allocation5 + $0x1b0] sm:$0xff] %vm1117, %v2690
    %2731 = vst.msk [vmem:[#allocation5 + $0x1e8] sm:$0xff] %vm1117, %v2692
    %2732 = vst.msk [vmem:[#allocation5 + $0x220] sm:$0xff] %vm1117, %v2694
    %2733 = vst.msk [vmem:[#allocation5 + $0x258] sm:$0xff] %vm1117, %v2696
    %2734 = vst.msk [vmem:[#allocation5 + $0x290] sm:$0xff] %vm1117, %v2698
    %2735 = vst.msk [vmem:[#allocation5 + $0x2c8] sm:$0xff] %vm1117, %v2700
    %2736 = vst.msk [vmem:[#allocation5 + $0x300] sm:$0xff] %vm1117, %v2702
    %2737 = vst.msk [vmem:[#allocation5 + $0x338] sm:$0xff] %vm1117, %v2704
    %2738 = vst.msk [vmem:[#allocation5 + $0x370] sm:$0xff] %vm1117, %v2706
    %v2739 = vld [vmem:[%s2610 + $0x2] sm:$0xff]
    %v2740 = vld [vmem:[%s2610 + $0x12] sm:$0xff]
    %v2741 = vld [vmem:[%s2610 + $0x22] sm:$0xff]
    %v2742 = vld [vmem:[%s2610 + $0x32] sm:$0xff]
    %v2743 = vld [vmem:[%s2610 + $0x42] sm:$0xff]
    %v2744 = vld [vmem:[%s2610 + $0x52] sm:$0xff]
    %v2745 = vld [vmem:[%s2610 + $0x62] sm:$0xff]
    %v2746 = vld [vmem:[%s2610 + $0x72] sm:$0xff]
    %v2747 = vld [vmem:[%s2610 + $0xc2] sm:$0xff]
    %v2748 = vld [vmem:[%s2610 + $0xd2] sm:$0xff]
    %v2749 = vld [vmem:[%s2610 + $0xe2] sm:$0xff]
    %v2750 = vld [vmem:[%s2610 + $0xf2] sm:$0xff]
    %v2751 = vld [vmem:[%s2610 + $0x102] sm:$0xff]
    %v2752 = vld [vmem:[%s2610 + $0x112] sm:$0xff]
    %v2753 = vld [vmem:[%s2610 + $0x122] sm:$0xff]
    %v2754 = vld [vmem:[%s2610 + $0x132] sm:$0xff]
    %2771 = vrot.lane.b32.xlu0 %v2739, 64
    %v2772 = vpop.permute.xlu0 %2771
    %2773 = vrot.lane.b32.xlu0 %v2740, 64
    %v2774 = vpop.permute.xlu0 %2773
    %2775 = vrot.lane.b32.xlu0 %v2741, 64
    %v2776 = vpop.permute.xlu0 %2775
    %2777 = vrot.lane.b32.xlu0 %v2742, 64
    %v2778 = vpop.permute.xlu0 %2777
    %2779 = vrot.lane.b32.xlu0 %v2743, 64
    %v2780 = vpop.permute.xlu0 %2779
    %2781 = vrot.lane.b32.xlu0 %v2744, 64
    %v2782 = vpop.permute.xlu0 %2781
    %2783 = vrot.lane.b32.xlu0 %v2745, 64
    %v2784 = vpop.permute.xlu0 %2783
    %2785 = vrot.lane.b32.xlu0 %v2746, 64
    %v2786 = vpop.permute.xlu0 %2785
    %2787 = vrot.lane.b32.xlu0 %v2747, 64
    %v2788 = vpop.permute.xlu0 %2787
    %2789 = vrot.lane.b32.xlu0 %v2748, 64
    %v2790 = vpop.permute.xlu0 %2789
    %2791 = vrot.lane.b32.xlu0 %v2749, 64
    %v2792 = vpop.permute.xlu0 %2791
    %2793 = vrot.lane.b32.xlu0 %v2750, 64
    %v2794 = vpop.permute.xlu0 %2793
    %2795 = vrot.lane.b32.xlu0 %v2751, 64
    %v2796 = vpop.permute.xlu0 %2795
    %2797 = vrot.lane.b32.xlu0 %v2752, 64
    %v2798 = vpop.permute.xlu0 %2797
    %2799 = vrot.lane.b32.xlu0 %v2753, 64
    %v2800 = vpop.permute.xlu0 %2799
    %2801 = vrot.lane.b32.xlu0 %v2754, 64
    %v2802 = vpop.permute.xlu0 %2801
    %2819 = vst.msk [vmem:[#allocation5 + $0x28] sm:$0xff] %vm1214, %v2772
    %2820 = vst.msk [vmem:[#allocation5 + $0x60] sm:$0xff] %vm1214, %v2774
    %2821 = vst.msk [vmem:[#allocation5 + $0x98] sm:$0xff] %vm1214, %v2776
    %2822 = vst.msk [vmem:[#allocation5 + $0xd0] sm:$0xff] %vm1214, %v2778
    %2823 = vst.msk [vmem:[#allocation5 + $0x108] sm:$0xff] %vm1214, %v2780
    %2824 = vst.msk [vmem:[#allocation5 + $0x140] sm:$0xff] %vm1214, %v2782
    %2825 = vst.msk [vmem:[#allocation5 + $0x178] sm:$0xff] %vm1214, %v2784
    %2826 = vst.msk [vmem:[#allocation5 + $0x1b0] sm:$0xff] %vm1214, %v2786
    %2827 = vst.msk [vmem:[#allocation5 + $0x1e8] sm:$0xff] %vm1214, %v2788
    %2828 = vst.msk [vmem:[#allocation5 + $0x220] sm:$0xff] %vm1214, %v2790
    %2829 = vst.msk [vmem:[#allocation5 + $0x258] sm:$0xff] %vm1214, %v2792
    %2830 = vst.msk [vmem:[#allocation5 + $0x290] sm:$0xff] %vm1214, %v2794
    %2831 = vst.msk [vmem:[#allocation5 + $0x2c8] sm:$0xff] %vm1214, %v2796
    %2832 = vst.msk [vmem:[#allocation5 + $0x300] sm:$0xff] %vm1214, %v2798
    %2833 = vst.msk [vmem:[#allocation5 + $0x338] sm:$0xff] %vm1214, %v2800
    %2834 = vst.msk [vmem:[#allocation5 + $0x370] sm:$0xff] %vm1214, %v2802
    %v2835 = vld [vmem:[%s2610 + $0x3] sm:$0xff]
    %v2836 = vld [vmem:[%s2610 + $0x13] sm:$0xff]
    %v2837 = vld [vmem:[%s2610 + $0x23] sm:$0xff]
    %v2838 = vld [vmem:[%s2610 + $0x33] sm:$0xff]
    %v2839 = vld [vmem:[%s2610 + $0x43] sm:$0xff]
    %v2840 = vld [vmem:[%s2610 + $0x53] sm:$0xff]
    %v2841 = vld [vmem:[%s2610 + $0x63] sm:$0xff]
    %v2842 = vld [vmem:[%s2610 + $0x73] sm:$0xff]
    %v2843 = vld [vmem:[%s2610 + $0xc3] sm:$0xff]
    %v2844 = vld [vmem:[%s2610 + $0xd3] sm:$0xff]
    %v2845 = vld [vmem:[%s2610 + $0xe3] sm:$0xff]
    %v2846 = vld [vmem:[%s2610 + $0xf3] sm:$0xff]
    %v2847 = vld [vmem:[%s2610 + $0x103] sm:$0xff]
    %v2848 = vld [vmem:[%s2610 + $0x113] sm:$0xff]
    %v2849 = vld [vmem:[%s2610 + $0x123] sm:$0xff]
    %v2850 = vld [vmem:[%s2610 + $0x133] sm:$0xff]
    %2867 = vrot.lane.b32.xlu0 %v2835, 96
    %v2868 = vpop.permute.xlu0 %2867
    %2869 = vrot.lane.b32.xlu0 %v2836, 96
    %v2870 = vpop.permute.xlu0 %2869
    %2871 = vrot.lane.b32.xlu0 %v2837, 96
    %v2872 = vpop.permute.xlu0 %2871
    %2873 = vrot.lane.b32.xlu0 %v2838, 96
    %v2874 = vpop.permute.xlu0 %2873
    %2875 = vrot.lane.b32.xlu0 %v2839, 96
    %v2876 = vpop.permute.xlu0 %2875
    %2877 = vrot.lane.b32.xlu0 %v2840, 96
    %v2878 = vpop.permute.xlu0 %2877
    %2879 = vrot.lane.b32.xlu0 %v2841, 96
    %v2880 = vpop.permute.xlu0 %2879
    %2881 = vrot.lane.b32.xlu0 %v2842, 96
    %v2882 = vpop.permute.xlu0 %2881
    %2883 = vrot.lane.b32.xlu0 %v2843, 96
    %v2884 = vpop.permute.xlu0 %2883
    %2885 = vrot.lane.b32.xlu0 %v2844, 96
    %v2886 = vpop.permute.xlu0 %2885
    %2887 = vrot.lane.b32.xlu0 %v2845, 96
    %v2888 = vpop.permute.xlu0 %2887
    %2889 = vrot.lane.b32.xlu0 %v2846, 96
    %v2890 = vpop.permute.xlu0 %2889
    %2891 = vrot.lane.b32.xlu0 %v2847, 96
    %v2892 = vpop.permute.xlu0 %2891
    %2893 = vrot.lane.b32.xlu0 %v2848, 96
    %v2894 = vpop.permute.xlu0 %2893
    %2895 = vrot.lane.b32.xlu0 %v2849, 96
    %v2896 = vpop.permute.xlu0 %2895
    %2897 = vrot.lane.b32.xlu0 %v2850, 96
    %v2898 = vpop.permute.xlu0 %2897
    %2915 = vst.msk [vmem:[#allocation5 + $0x28] sm:$0xff] %vm1311, %v2868
    %2916 = vst.msk [vmem:[#allocation5 + $0x60] sm:$0xff] %vm1311, %v2870
    %2917 = vst.msk [vmem:[#allocation5 + $0x98] sm:$0xff] %vm1311, %v2872
    %2918 = vst.msk [vmem:[#allocation5 + $0xd0] sm:$0xff] %vm1311, %v2874
    %2919 = vst.msk [vmem:[#allocation5 + $0x108] sm:$0xff] %vm1311, %v2876
    %2920 = vst.msk [vmem:[#allocation5 + $0x140] sm:$0xff] %vm1311, %v2878
    %2921 = vst.msk [vmem:[#allocation5 + $0x178] sm:$0xff] %vm1311, %v2880
    %2922 = vst.msk [vmem:[#allocation5 + $0x1b0] sm:$0xff] %vm1311, %v2882
    %2923 = vst.msk [vmem:[#allocation5 + $0x1e8] sm:$0xff] %vm1311, %v2884
    %2924 = vst.msk [vmem:[#allocation5 + $0x220] sm:$0xff] %vm1311, %v2886
    %2925 = vst.msk [vmem:[#allocation5 + $0x258] sm:$0xff] %vm1311, %v2888
    %2926 = vst.msk [vmem:[#allocation5 + $0x290] sm:$0xff] %vm1311, %v2890
    %2927 = vst.msk [vmem:[#allocation5 + $0x2c8] sm:$0xff] %vm1311, %v2892
    %2928 = vst.msk [vmem:[#allocation5 + $0x300] sm:$0xff] %vm1311, %v2894
    %2929 = vst.msk [vmem:[#allocation5 + $0x338] sm:$0xff] %vm1311, %v2896
    %2930 = vst.msk [vmem:[#allocation5 + $0x370] sm:$0xff] %vm1311, %v2898
    %v2931 = vld [vmem:[%s2610 + $0x4] sm:$0xff]
    %v2932 = vld [vmem:[%s2610 + $0x14] sm:$0xff]
    %v2933 = vld [vmem:[%s2610 + $0x24] sm:$0xff]
    %v2934 = vld [vmem:[%s2610 + $0x34] sm:$0xff]
    %v2935 = vld [vmem:[%s2610 + $0x44] sm:$0xff]
    %v2936 = vld [vmem:[%s2610 + $0x54] sm:$0xff]
    %v2937 = vld [vmem:[%s2610 + $0x64] sm:$0xff]
    %v2938 = vld [vmem:[%s2610 + $0x74] sm:$0xff]
    %v2939 = vld [vmem:[%s2610 + $0xc4] sm:$0xff]
    %v2940 = vld [vmem:[%s2610 + $0xd4] sm:$0xff]
    %v2941 = vld [vmem:[%s2610 + $0xe4] sm:$0xff]
    %v2942 = vld [vmem:[%s2610 + $0xf4] sm:$0xff]
    %v2943 = vld [vmem:[%s2610 + $0x104] sm:$0xff]
    %v2944 = vld [vmem:[%s2610 + $0x114] sm:$0xff]
    %v2945 = vld [vmem:[%s2610 + $0x124] sm:$0xff]
    %v2946 = vld [vmem:[%s2610 + $0x134] sm:$0xff]
    %2947 = vst.msk [vmem:[#allocation5 + $0x30] sm:$0xff] %vm1020, %v2931
    %2948 = vst.msk [vmem:[#allocation5 + $0x68] sm:$0xff] %vm1020, %v2932
    %2949 = vst.msk [vmem:[#allocation5 + $0xa0] sm:$0xff] %vm1020, %v2933
    %2950 = vst.msk [vmem:[#allocation5 + $0xd8] sm:$0xff] %vm1020, %v2934
    %2951 = vst.msk [vmem:[#allocation5 + $0x110] sm:$0xff] %vm1020, %v2935
    %2952 = vst.msk [vmem:[#allocation5 + $0x148] sm:$0xff] %vm1020, %v2936
    %2953 = vst.msk [vmem:[#allocation5 + $0x180] sm:$0xff] %vm1020, %v2937
    %2954 = vst.msk [vmem:[#allocation5 + $0x1b8] sm:$0xff] %vm1020, %v2938
    %2955 = vst.msk [vmem:[#allocation5 + $0x1f0] sm:$0xff] %vm1020, %v2939
    %2956 = vst.msk [vmem:[#allocation5 + $0x228] sm:$0xff] %vm1020, %v2940
    %2957 = vst.msk [vmem:[#allocation5 + $0x260] sm:$0xff] %vm1020, %v2941
    %2958 = vst.msk [vmem:[#allocation5 + $0x298] sm:$0xff] %vm1020, %v2942
    %2959 = vst.msk [vmem:[#allocation5 + $0x2d0] sm:$0xff] %vm1020, %v2943
    %2960 = vst.msk [vmem:[#allocation5 + $0x308] sm:$0xff] %vm1020, %v2944
    %2961 = vst.msk [vmem:[#allocation5 + $0x340] sm:$0xff] %vm1020, %v2945
    %2962 = vst.msk [vmem:[#allocation5 + $0x378] sm:$0xff] %vm1020, %v2946
    %v2963 = vld [vmem:[#allocation5] sm:$0xff]
    %v2964 = vld [vmem:[#allocation5 + $0x8] sm:$0xff]
    %v2965 = vld [vmem:[#allocation5 + $0x10] sm:$0xff]
    %v2966 = vld [vmem:[#allocation5 + $0x18] sm:$0xff]
    %v2967 = vld [vmem:[#allocation5 + $0x20] sm:$0xff]
    %v2968 = vld [vmem:[#allocation5 + $0x28] sm:$0xff]
    %v2969 = vld [vmem:[#allocation5 + $0x30] sm:$0xff]
    %v2970 = vld [vmem:[#allocation5 + $0x38] sm:$0xff]
    %v2971 = vld [vmem:[#allocation5 + $0x40] sm:$0xff]
    %v2972 = vld [vmem:[#allocation5 + $0x48] sm:$0xff]
    %v2973 = vld [vmem:[#allocation5 + $0x50] sm:$0xff]
    %v2974 = vld [vmem:[#allocation5 + $0x58] sm:$0xff]
    %v2975 = vld [vmem:[#allocation5 + $0x60] sm:$0xff]
    %v2976 = vld [vmem:[#allocation5 + $0x68] sm:$0xff]
    %v2977 = vld [vmem:[#allocation5 + $0x70] sm:$0xff]
    %v2978 = vld [vmem:[#allocation5 + $0x78] sm:$0xff]
    %v2979 = vld [vmem:[#allocation5 + $0x80] sm:$0xff]
    %v2980 = vld [vmem:[#allocation5 + $0x88] sm:$0xff]
    %v2981 = vld [vmem:[#allocation5 + $0x90] sm:$0xff]
    %v2982 = vld [vmem:[#allocation5 + $0x98] sm:$0xff]
    %v2983 = vld [vmem:[#allocation5 + $0xa0] sm:$0xff]
    %v2984 = vld [vmem:[#allocation5 + $0xa8] sm:$0xff]
    %v2985 = vld [vmem:[#allocation5 + $0xb0] sm:$0xff]
    %v2986 = vld [vmem:[#allocation5 + $0xb8] sm:$0xff]
    %v2987 = vld [vmem:[#allocation5 + $0xc0] sm:$0xff]
    %v2988 = vld [vmem:[#allocation5 + $0xc8] sm:$0xff]
    %v2989 = vld [vmem:[#allocation5 + $0xd0] sm:$0xff]
    %v2990 = vld [vmem:[#allocation5 + $0xd8] sm:$0xff]
    %v2991 = vld [vmem:[#allocation5 + $0xe0] sm:$0xff]
    %v2992 = vld [vmem:[#allocation5 + $0xe8] sm:$0xff]
    %v2993 = vld [vmem:[#allocation5 + $0xf0] sm:$0xff]
    %v2994 = vld [vmem:[#allocation5 + $0xf8] sm:$0xff]
    %v2995 = vld [vmem:[#allocation5 + $0x100] sm:$0xff]
    %v2996 = vld [vmem:[#allocation5 + $0x108] sm:$0xff]
    %v2997 = vld [vmem:[#allocation5 + $0x110] sm:$0xff]
    %v2998 = vld [vmem:[#allocation5 + $0x118] sm:$0xff]
    %v2999 = vld [vmem:[#allocation5 + $0x120] sm:$0xff]
    %v3000 = vld [vmem:[#allocation5 + $0x128] sm:$0xff]
    %v3001 = vld [vmem:[#allocation5 + $0x130] sm:$0xff]
    %v3002 = vld [vmem:[#allocation5 + $0x138] sm:$0xff]
    %v3003 = vld [vmem:[#allocation5 + $0x140] sm:$0xff]
    %v3004 = vld [vmem:[#allocation5 + $0x148] sm:$0xff]
    %v3005 = vld [vmem:[#allocation5 + $0x150] sm:$0xff]
    %v3006 = vld [vmem:[#allocation5 + $0x158] sm:$0xff]
    %v3007 = vld [vmem:[#allocation5 + $0x160] sm:$0xff]
    %v3008 = vld [vmem:[#allocation5 + $0x168] sm:$0xff]
    %v3009 = vld [vmem:[#allocation5 + $0x170] sm:$0xff]
    %v3010 = vld [vmem:[#allocation5 + $0x178] sm:$0xff]
    %v3011 = vld [vmem:[#allocation5 + $0x180] sm:$0xff]
    %v3012 = vld [vmem:[#allocation5 + $0x188] sm:$0xff]
    %v3013 = vld [vmem:[#allocation5 + $0x190] sm:$0xff]
    %v3014 = vld [vmem:[#allocation5 + $0x198] sm:$0xff]
    %v3015 = vld [vmem:[#allocation5 + $0x1a0] sm:$0xff]
    %v3016 = vld [vmem:[#allocation5 + $0x1a8] sm:$0xff]
    %v3017 = vld [vmem:[#allocation5 + $0x1b0] sm:$0xff]
    %v3018 = vld [vmem:[#allocation5 + $0x1b8] sm:$0xff]
    %v3019 = vld [vmem:[#allocation5 + $0x1c0] sm:$0xff]
    %v3020 = vld [vmem:[#allocation5 + $0x1c8] sm:$0xff]
    %v3021 = vld [vmem:[#allocation5 + $0x1d0] sm:$0xff]
    %v3022 = vld [vmem:[#allocation5 + $0x1d8] sm:$0xff]
    %v3023 = vld [vmem:[#allocation5 + $0x1e0] sm:$0xff]
    %v3024 = vld [vmem:[#allocation5 + $0x1e8] sm:$0xff]
    %v3025 = vld [vmem:[#allocation5 + $0x1f0] sm:$0xff]
    %v3026 = vld [vmem:[#allocation5 + $0x1f8] sm:$0xff]
    %v3027 = vld [vmem:[#allocation5 + $0x200] sm:$0xff]
    %v3028 = vld [vmem:[#allocation5 + $0x208] sm:$0xff]
    %v3029 = vld [vmem:[#allocation5 + $0x210] sm:$0xff]
    %v3030 = vld [vmem:[#allocation5 + $0x218] sm:$0xff]
    %v3031 = vld [vmem:[#allocation5 + $0x220] sm:$0xff]
    %v3032 = vld [vmem:[#allocation5 + $0x228] sm:$0xff]
    %v3033 = vld [vmem:[#allocation5 + $0x230] sm:$0xff]
    %v3034 = vld [vmem:[#allocation5 + $0x238] sm:$0xff]
    %v3035 = vld [vmem:[#allocation5 + $0x240] sm:$0xff]
    %v3036 = vld [vmem:[#allocation5 + $0x248] sm:$0xff]
    %v3037 = vld [vmem:[#allocation5 + $0x250] sm:$0xff]
    %v3038 = vld [vmem:[#allocation5 + $0x258] sm:$0xff]
    %v3039 = vld [vmem:[#allocation5 + $0x260] sm:$0xff]
    %v3040 = vld [vmem:[#allocation5 + $0x268] sm:$0xff]
    %v3041 = vld [vmem:[#allocation5 + $0x270] sm:$0xff]
    %v3042 = vld [vmem:[#allocation5 + $0x278] sm:$0xff]
    %v3043 = vld [vmem:[#allocation5 + $0x280] sm:$0xff]
    %v3044 = vld [vmem:[#allocation5 + $0x288] sm:$0xff]
    %v3045 = vld [vmem:[#allocation5 + $0x290] sm:$0xff]
    %v3046 = vld [vmem:[#allocation5 + $0x298] sm:$0xff]
    %v3047 = vld [vmem:[#allocation5 + $0x2a0] sm:$0xff]
    %v3048 = vld [vmem:[#allocation5 + $0x2a8] sm:$0xff]
    %v3049 = vld [vmem:[#allocation5 + $0x2b0] sm:$0xff]
    %v3050 = vld [vmem:[#allocation5 + $0x2b8] sm:$0xff]
    %v3051 = vld [vmem:[#allocation5 + $0x2c0] sm:$0xff]
    %v3052 = vld [vmem:[#allocation5 + $0x2c8] sm:$0xff]
    %v3053 = vld [vmem:[#allocation5 + $0x2d0] sm:$0xff]
    %v3054 = vld [vmem:[#allocation5 + $0x2d8] sm:$0xff]
    %v3055 = vld [vmem:[#allocation5 + $0x2e0] sm:$0xff]
    %v3056 = vld [vmem:[#allocation5 + $0x2e8] sm:$0xff]
    %v3057 = vld [vmem:[#allocation5 + $0x2f0] sm:$0xff]
    %v3058 = vld [vmem:[#allocation5 + $0x2f8] sm:$0xff]
    %v3059 = vld [vmem:[#allocation5 + $0x300] sm:$0xff]
    %v3060 = vld [vmem:[#allocation5 + $0x308] sm:$0xff]
    %v3061 = vld [vmem:[#allocation5 + $0x310] sm:$0xff]
    %v3062 = vld [vmem:[#allocation5 + $0x318] sm:$0xff]
    %v3063 = vld [vmem:[#allocation5 + $0x320] sm:$0xff]
    %v3064 = vld [vmem:[#allocation5 + $0x328] sm:$0xff]
    %v3065 = vld [vmem:[#allocation5 + $0x330] sm:$0xff]
    %v3066 = vld [vmem:[#allocation5 + $0x338] sm:$0xff]
    %v3067 = vld [vmem:[#allocation5 + $0x340] sm:$0xff]
    %v3068 = vld [vmem:[#allocation5 + $0x348] sm:$0xff]
    %v3069 = vld [vmem:[#allocation5 + $0x350] sm:$0xff]
    %v3070 = vld [vmem:[#allocation5 + $0x358] sm:$0xff]
    %v3071 = vld [vmem:[#allocation5 + $0x360] sm:$0xff]
    %v3072 = vld [vmem:[#allocation5 + $0x368] sm:$0xff]
    %v3073 = vld [vmem:[#allocation5 + $0x370] sm:$0xff]
    %v3074 = vld [vmem:[#allocation5 + $0x378] sm:$0xff]
    %v3075 = vld [vmem:[%s3] sm:$0xff]
    %v3076 = vld [vmem:[%s3 + $0x8] sm:$0xff]
    %v3077 = vld [vmem:[%s3 + $0x10] sm:$0xff]
    %v3078 = vld [vmem:[%s3 + $0x18] sm:$0xff]
    %v3079 = vld [vmem:[%s3 + $0x20] sm:$0xff]
    %v3080 = vld [vmem:[%s3 + $0x28] sm:$0xff]
    %v3081 = vld [vmem:[%s3 + $0x30] sm:$0xff]
    %v3082 = vld [vmem:[%s3 + $0x38] sm:$0xff]
    %v3083 = vld [vmem:[%s3 + $0x40] sm:$0xff]
    %v3084 = vld [vmem:[%s3 + $0x48] sm:$0xff]
    %v3085 = vld [vmem:[%s3 + $0x50] sm:$0xff]
    %v3086 = vld [vmem:[%s3 + $0x58] sm:$0xff]
    %v3087 = vld [vmem:[%s3 + $0x60] sm:$0xff]
    %v3088 = vld [vmem:[%s3 + $0x68] sm:$0xff]
    %v3089 = vld [vmem:[%s3 + $0x70] sm:$0xff]
    %v3090 = vld [vmem:[%s3 + $0x78] sm:$0xff]
    %v3091 = vld [vmem:[%s3 + $0x80] sm:$0xff]
    %v3092 = vld [vmem:[%s3 + $0x88] sm:$0xff]
    %v3093 = vld [vmem:[%s3 + $0x90] sm:$0xff]
    %v3094 = vld [vmem:[%s3 + $0x98] sm:$0xff]
    %v3095 = vld [vmem:[%s3 + $0xa0] sm:$0xff]
    %v3096 = vld [vmem:[%s3 + $0xa8] sm:$0xff]
    %v3097 = vld [vmem:[%s3 + $0xb0] sm:$0xff]
    %v3098 = vld [vmem:[%s3 + $0xb8] sm:$0xff]
    %v3099 = vld [vmem:[%s3 + $0xc0] sm:$0xff]
    %v3100 = vld [vmem:[%s3 + $0xc8] sm:$0xff]
    %v3101 = vld [vmem:[%s3 + $0xd0] sm:$0xff]
    %v3102 = vld [vmem:[%s3 + $0xd8] sm:$0xff]
    %v3103 = vld [vmem:[%s3 + $0xe0] sm:$0xff]
    %v3104 = vld [vmem:[%s3 + $0xe8] sm:$0xff]
    %v3105 = vld [vmem:[%s3 + $0xf0] sm:$0xff]
    %v3106 = vld [vmem:[%s3 + $0xf8] sm:$0xff]
    %v3107 = vld [vmem:[%s3 + $0x100] sm:$0xff]
    %v3108 = vld [vmem:[%s3 + $0x108] sm:$0xff]
    %v3109 = vld [vmem:[%s3 + $0x110] sm:$0xff]
    %v3110 = vld [vmem:[%s3 + $0x118] sm:$0xff]
    %v3111 = vld [vmem:[%s3 + $0x120] sm:$0xff]
    %v3112 = vld [vmem:[%s3 + $0x128] sm:$0xff]
    %v3113 = vld [vmem:[%s3 + $0x130] sm:$0xff]
    %v3114 = vld [vmem:[%s3 + $0x138] sm:$0xff]
    %v3115 = vld [vmem:[%s3 + $0x140] sm:$0xff]
    %v3116 = vld [vmem:[%s3 + $0x148] sm:$0xff]
    %v3117 = vld [vmem:[%s3 + $0x150] sm:$0xff]
    %v3118 = vld [vmem:[%s3 + $0x158] sm:$0xff]
    %v3119 = vld [vmem:[%s3 + $0x160] sm:$0xff]
    %v3120 = vld [vmem:[%s3 + $0x168] sm:$0xff]
    %v3121 = vld [vmem:[%s3 + $0x170] sm:$0xff]
    %v3122 = vld [vmem:[%s3 + $0x178] sm:$0xff]
    %v3123 = vld [vmem:[%s3 + $0x180] sm:$0xff]
    %v3124 = vld [vmem:[%s3 + $0x188] sm:$0xff]
    %v3125 = vld [vmem:[%s3 + $0x190] sm:$0xff]
    %v3126 = vld [vmem:[%s3 + $0x198] sm:$0xff]
    %v3127 = vld [vmem:[%s3 + $0x1a0] sm:$0xff]
    %v3128 = vld [vmem:[%s3 + $0x1a8] sm:$0xff]
    %v3129 = vld [vmem:[%s3 + $0x1b0] sm:$0xff]
    %v3130 = vld [vmem:[%s3 + $0x1b8] sm:$0xff]
    %v3131 = vld [vmem:[%s3 + $0x1c0] sm:$0xff]
    %v3132 = vld [vmem:[%s3 + $0x1c8] sm:$0xff]
    %v3133 = vld [vmem:[%s3 + $0x1d0] sm:$0xff]
    %v3134 = vld [vmem:[%s3 + $0x1d8] sm:$0xff]
    %v3135 = vld [vmem:[%s3 + $0x1e0] sm:$0xff]
    %v3136 = vld [vmem:[%s3 + $0x1e8] sm:$0xff]
    %v3137 = vld [vmem:[%s3 + $0x1f0] sm:$0xff]
    %v3138 = vld [vmem:[%s3 + $0x1f8] sm:$0xff]
    %v3139 = vld [vmem:[%s3 + $0x200] sm:$0xff]
    %v3140 = vld [vmem:[%s3 + $0x208] sm:$0xff]
    %v3141 = vld [vmem:[%s3 + $0x210] sm:$0xff]
    %v3142 = vld [vmem:[%s3 + $0x218] sm:$0xff]
    %v3143 = vld [vmem:[%s3 + $0x220] sm:$0xff]
    %v3144 = vld [vmem:[%s3 + $0x228] sm:$0xff]
    %v3145 = vld [vmem:[%s3 + $0x230] sm:$0xff]
    %v3146 = vld [vmem:[%s3 + $0x238] sm:$0xff]
    %v3147 = vld [vmem:[%s3 + $0x240] sm:$0xff]
    %v3148 = vld [vmem:[%s3 + $0x248] sm:$0xff]
    %v3149 = vld [vmem:[%s3 + $0x250] sm:$0xff]
    %v3150 = vld [vmem:[%s3 + $0x258] sm:$0xff]
    %v3151 = vld [vmem:[%s3 + $0x260] sm:$0xff]
    %v3152 = vld [vmem:[%s3 + $0x268] sm:$0xff]
    %v3153 = vld [vmem:[%s3 + $0x270] sm:$0xff]
    %v3154 = vld [vmem:[%s3 + $0x278] sm:$0xff]
    %v3155 = vld [vmem:[%s3 + $0x280] sm:$0xff]
    %v3156 = vld [vmem:[%s3 + $0x288] sm:$0xff]
    %v3157 = vld [vmem:[%s3 + $0x290] sm:$0xff]
    %v3158 = vld [vmem:[%s3 + $0x298] sm:$0xff]
    %v3159 = vld [vmem:[%s3 + $0x2a0] sm:$0xff]
    %v3160 = vld [vmem:[%s3 + $0x2a8] sm:$0xff]
    %v3161 = vld [vmem:[%s3 + $0x2b0] sm:$0xff]
    %v3162 = vld [vmem:[%s3 + $0x2b8] sm:$0xff]
    %v3163 = vld [vmem:[%s3 + $0x2c0] sm:$0xff]
    %v3164 = vld [vmem:[%s3 + $0x2c8] sm:$0xff]
    %v3165 = vld [vmem:[%s3 + $0x2d0] sm:$0xff]
    %v3166 = vld [vmem:[%s3 + $0x2d8] sm:$0xff]
    %v3167 = vld [vmem:[%s3 + $0x2e0] sm:$0xff]
    %v3168 = vld [vmem:[%s3 + $0x2e8] sm:$0xff]
    %v3169 = vld [vmem:[%s3 + $0x2f0] sm:$0xff]
    %v3170 = vld [vmem:[%s3 + $0x2f8] sm:$0xff]
    %v3171 = vld [vmem:[%s3 + $0x300] sm:$0xff]
    %v3172 = vld [vmem:[%s3 + $0x308] sm:$0xff]
    %v3173 = vld [vmem:[%s3 + $0x310] sm:$0xff]
    %v3174 = vld [vmem:[%s3 + $0x318] sm:$0xff]
    %v3175 = vld [vmem:[%s3 + $0x320] sm:$0xff]
    %v3176 = vld [vmem:[%s3 + $0x328] sm:$0xff]
    %v3177 = vld [vmem:[%s3 + $0x330] sm:$0xff]
    %v3178 = vld [vmem:[%s3 + $0x338] sm:$0xff]
    %v3179 = vld [vmem:[%s3 + $0x340] sm:$0xff]
    %v3180 = vld [vmem:[%s3 + $0x348] sm:$0xff]
    %v3181 = vld [vmem:[%s3 + $0x350] sm:$0xff]
    %v3182 = vld [vmem:[%s3 + $0x358] sm:$0xff]
    %v3183 = vld [vmem:[%s3 + $0x360] sm:$0xff]
    %v3184 = vld [vmem:[%s3 + $0x368] sm:$0xff]
    %v3185 = vld [vmem:[%s3 + $0x370] sm:$0xff]
    %v3186 = vld [vmem:[%s3 + $0x378] sm:$0xff]
    %3187 = vmatprep.subr.mxu0 0.0
    %3188 = vmatpush1.msra.mxu0 %v3075
    %3189 = vmatprep.subr.mxu0 0.0
    %3190 = vmatpush1.msra.mxu0 %v3076
    %3191 = vmatprep.subr.mxu0 0.0
    %3192 = vmatpush1.msra.mxu0 %v3077
    %3193 = vmatprep.subr.mxu0 0.0
    %3194 = vmatpush1.msra.mxu0 %v3078
    %3195 = vmatprep.subr.mxu0 0.0
    %3196 = vmatpush1.msra.mxu0 %v3079
    %3197 = vmatprep.subr.mxu0 0.0
    %3198 = vmatpush1.msra.mxu0 %v3080
    %3199 = vmatprep.subr.mxu0 0.0
    %3200 = vmatpush1.msra.mxu0 %v3081
    %3201 = vmatprep.subr.mxu0 0.0
    %3202 = vmatpush1.msra.mxu0 %v3082
    %3203 = vmatprep.subr.mxu0 0.0
    %3204 = vmatpush1.msra.mxu0 %v3083
    %3205 = vmatprep.subr.mxu0 0.0
    %3206 = vmatpush1.msra.mxu0 %v3084
    %3207 = vmatprep.subr.mxu0 0.0
    %3208 = vmatpush1.msra.mxu0 %v3085
    %3209 = vmatprep.subr.mxu0 0.0
    %3210 = vmatpush1.msra.mxu0 %v3086
    %3211 = vmatprep.subr.mxu0 0.0
    %3212 = vmatpush1.msra.mxu0 %v3087
    %3213 = vmatprep.subr.mxu0 0.0
    %3214 = vmatpush1.msra.mxu0 %v3088
    %3215 = vmatprep.subr.mxu0 0.0
    %3216 = vmatpush1.msra.mxu0 %v3089
    %3217 = vmatprep.subr.mxu0 0.0
    %3218 = vmatpush1.msra.mxu0 %v3090
    %3219 = vmatprep.subr.mxu0 0.0
    %3220 = vmatpush1.msra.mxu0 %v3091
    %3221 = vmatprep.subr.mxu0 0.0
    %3222 = vmatpush1.msra.mxu0 %v3092
    %3223 = vmatprep.subr.mxu0 0.0
    %3224 = vmatpush1.msra.mxu0 %v3093
    %3225 = vmatprep.subr.mxu0 0.0
    %3226 = vmatpush1.msra.mxu0 %v3094
    %3227 = vmatprep.subr.mxu0 0.0
    %3228 = vmatpush1.msra.mxu0 %v3095
    %3229 = vmatprep.subr.mxu0 0.0
    %3230 = vmatpush1.msra.mxu0 %v3096
    %3231 = vmatprep.subr.mxu0 0.0
    %3232 = vmatpush1.msra.mxu0 %v3097
    %3233 = vmatprep.subr.mxu0 0.0
    %3234 = vmatpush1.msra.mxu0 %v3098
    %3235 = vmatprep.subr.mxu0 0.0
    %3236 = vmatpush1.msra.mxu0 %v3099
    %3237 = vmatprep.subr.mxu0 0.0
    %3238 = vmatpush1.msra.mxu0 %v3100
    %3239 = vmatprep.subr.mxu0 0.0
    %3240 = vmatpush1.msra.mxu0 %v3101
    %3241 = vmatprep.subr.mxu0 0.0
    %3242 = vmatpush1.msra.mxu0 %v3102
    %3243 = vmatprep.subr.mxu0 0.0
    %3244 = vmatpush1.msra.mxu0 %v3103
    %3245 = vmatprep.subr.mxu0 0.0
    %3246 = vmatpush1.msra.mxu0 %v3104
    %3247 = vmatprep.subr.mxu0 0.0
    %3248 = vmatpush1.msra.mxu0 %v3105
    %3249 = vmatprep.subr.mxu0 0.0
    %3250 = vmatpush1.msra.mxu0 %v3106
    %3251 = vmatprep.mubr.f32.mxu0 %v2964
    %3252 = vmatmul.mubr.f32.gmra.mrb[0].mxu0 %v2963
    %v3253 = vpop.f32.mrb[0].mxu0
    %v3254 = vadd.f32 0.0, %v3253
    %v3255 = vpop.f32.mrb[0].mxu0
    %3256 = vmatprep.mubr.f32.mxu0 %v2971
    %3257 = vmatmul.mubr.f32.gmra.mrb[0].mxu0 %v2970
    %v3258 = vpop.f32.mrb[0].mxu0
    %v3259 = vadd.f32 0.0, %v3258
    %v3260 = vpop.f32.mrb[0].mxu0
    %3261 = vmatprep.mubr.f32.mxu0 %v2978
    %3262 = vmatmul.mubr.f32.gmra.mrb[0].mxu0 %v2977
    %v3263 = vpop.f32.mrb[0].mxu0
    %v3264 = vadd.f32 0.0, %v3263
    %v3265 = vpop.f32.mrb[0].mxu0
    %3266 = vmatprep.mubr.f32.mxu0 %v2985
    %3267 = vmatmul.mubr.f32.gmra.mrb[0].mxu0 %v2984
    %v3268 = vpop.f32.mrb[0].mxu0
    %v3269 = vadd.f32 0.0, %v3268
    %v3270 = vpop.f32.mrb[0].mxu0
    %3271 = vmatprep.mubr.f32.mxu0 %v2992
    %3272 = vmatmul.mubr.f32.gmra.mrb[0].mxu0 %v2991
    %v3273 = vpop.f32.mrb[0].mxu0
    %v3274 = vadd.f32 0.0, %v3273
    %v3275 = vpop.f32.mrb[0].mxu0
    %3276 = vmatprep.mubr.f32.mxu0 %v2999
    %3277 = vmatmul.mubr.f32.gmra.mrb[0].mxu0 %v2998
    %v3278 = vpop.f32.mrb[0].mxu0
    %v3279 = vadd.f32 0.0, %v3278
    %v3280 = vpop.f32.mrb[0].mxu0
    %3281 = vmatprep.mubr.f32.mxu0 %v3006
    %3282 = vmatmul.mubr.f32.gmra.mrb[0].mxu0 %v3005
    %v3283 = vpop.f32.mrb[0].mxu0
    %v3284 = vadd.f32 0.0, %v3283
    %v3285 = vpop.f32.mrb[0].mxu0
    %3286 = vmatprep.mubr.f32.mxu0 %v3013
    %3287 = vmatmul.mubr.f32.gmra.mrb[0].mxu0 %v3012
    %v3288 = vpop.f32.mrb[0].mxu0
    %v3289 = vadd.f32 0.0, %v3288
    %v3290 = vpop.f32.mrb[0].mxu0
    %3291 = vmatprep.mubr.f32.mxu0 %v3020
    %3292 = vmatmul.mubr.f32.gmra.mrb[0].mxu0 %v3019
    %v3293 = vpop.f32.mrb[0].mxu0
    %v3294 = vadd.f32 0.0, %v3293
    %v3295 = vpop.f32.mrb[0].mxu0
    %3296 = vmatprep.mubr.f32.mxu0 %v3027
    %3297 = vmatmul.mubr.f32.gmra.mrb[0].mxu0 %v3026
    %v3298 = vpop.f32.mrb[0].mxu0
    %v3299 = vadd.f32 0.0, %v3298
    %v3300 = vpop.f32.mrb[0].mxu0
    %3301 = vmatprep.mubr.f32.mxu0 %v3034
    %3302 = vmatmul.mubr.f32.gmra.mrb[0].mxu0 %v3033
    %v3303 = vpop.f32.mrb[0].mxu0
    %v3304 = vadd.f32 0.0, %v3303
    %v3305 = vpop.f32.mrb[0].mxu0
    %3306 = vmatprep.mubr.f32.mxu0 %v3041
    %3307 = vmatmul.mubr.f32.gmra.mrb[0].mxu0 %v3040
    %v3308 = vpop.f32.mrb[0].mxu0
    %v3309 = vadd.f32 0.0, %v3308
    %v3310 = vpop.f32.mrb[0].mxu0
    %3311 = vmatprep.mubr.f32.mxu0 %v3048
    %3312 = vmatmul.mubr.f32.gmra.mrb[0].mxu0 %v3047
    %v3313 = vpop.f32.mrb[0].mxu0
    %v3314 = vadd.f32 0.0, %v3313
    %v3315 = vpop.f32.mrb[0].mxu0
    %3316 = vmatprep.mubr.f32.mxu0 %v3055
    %3317 = vmatmul.mubr.f32.gmra.mrb[0].mxu0 %v3054
    %v3318 = vpop.f32.mrb[0].mxu0
    %v3319 = vadd.f32 0.0, %v3318
    %v3320 = vpop.f32.mrb[0].mxu0
    %3321 = vmatprep.mubr.f32.mxu0 %v3062
    %3322 = vmatmul.mubr.f32.gmra.mrb[0].mxu0 %v3061
    %v3323 = vpop.f32.mrb[0].mxu0
    %v3324 = vadd.f32 0.0, %v3323
    %v3325 = vpop.f32.mrb[0].mxu0
    %3326 = vmatprep.mubr.f32.mxu0 %v3069
    %3327 = vmatmul.mubr.f32.gmra.mrb[0].mxu0 %v3068
    %v3328 = vpop.f32.mrb[0].mxu0
    %v3329 = vadd.f32 0.0, %v3328
    %v3330 = vpop.f32.mrb[0].mxu0
    %3331 = vdwg.mxu0
    %3332 = vmatprep.subr.mxu0 0.0
    %3333 = vmatpush1.msra.mxu0 %v3107
    %3334 = vmatprep.subr.mxu0 0.0
    %3335 = vmatpush1.msra.mxu0 %v3108
    %3336 = vmatprep.subr.mxu0 0.0
    %3337 = vmatpush1.msra.mxu0 %v3109
    %3338 = vmatprep.subr.mxu0 0.0
    %3339 = vmatpush1.msra.mxu0 %v3110
    %3340 = vmatprep.subr.mxu0 0.0
    %3341 = vmatpush1.msra.mxu0 %v3111
    %3342 = vmatprep.subr.mxu0 0.0
    %3343 = vmatpush1.msra.mxu0 %v3112
    %3344 = vmatprep.subr.mxu0 0.0
    %3345 = vmatpush1.msra.mxu0 %v3113
    %3346 = vmatprep.subr.mxu0 0.0
    %3347 = vmatpush1.msra.mxu0 %v3114
    %3348 = vmatprep.subr.mxu0 0.0
    %3349 = vmatpush1.msra.mxu0 %v3115
    %3350 = vmatprep.subr.mxu0 0.0
    %3351 = vmatpush1.msra.mxu0 %v3116
    %3352 = vmatprep.subr.mxu0 0.0
    %3353 = vmatpush1.msra.mxu0 %v3117
    %3354 = vmatprep.subr.mxu0 0.0
    %3355 = vmatpush1.msra.mxu0 %v3118
    %3356 = vmatprep.subr.mxu0 0.0
    %3357 = vmatpush1.msra.mxu0 %v3119
    %3358 = vmatprep.subr.mxu0 0.0
    %3359 = vmatpush1.msra.mxu0 %v3120
    %3360 = vmatprep.subr.mxu0 0.0
    %3361 = vmatpush1.msra.mxu0 %v3121
    %3362 = vmatprep.subr.mxu0 0.0
    %3363 = vmatpush1.msra.mxu0 %v3122
    %3364 = vmatprep.subr.mxu0 0.0
    %3365 = vmatpush1.msra.mxu0 %v3123
    %3366 = vmatprep.subr.mxu0 0.0
    %3367 = vmatpush1.msra.mxu0 %v3124
    %3368 = vmatprep.subr.mxu0 0.0
    %3369 = vmatpush1.msra.mxu0 %v3125
    %3370 = vmatprep.subr.mxu0 0.0
    %3371 = vmatpush1.msra.mxu0 %v3126
    %3372 = vmatprep.subr.mxu0 0.0
    %3373 = vmatpush1.msra.mxu0 %v3127
    %3374 = vmatprep.subr.mxu0 0.0
    %3375 = vmatpush1.msra.mxu0 %v3128
    %3376 = vmatprep.subr.mxu0 0.0
    %3377 = vmatpush1.msra.mxu0 %v3129
    %3378 = vmatprep.subr.mxu0 0.0
    %3379 = vmatpush1.msra.mxu0 %v3130
    %3380 = vmatprep.subr.mxu0 0.0
    %3381 = vmatpush1.msra.mxu0 %v3131
    %3382 = vmatprep.subr.mxu0 0.0
    %3383 = vmatpush1.msra.mxu0 %v3132
    %3384 = vmatprep.subr.mxu0 0.0
    %3385 = vmatpush1.msra.mxu0 %v3133
    %3386 = vmatprep.subr.mxu0 0.0
    %3387 = vmatpush1.msra.mxu0 %v3134
    %3388 = vmatprep.subr.mxu0 0.0
    %3389 = vmatpush1.msra.mxu0 %v3135
    %3390 = vmatprep.subr.mxu0 0.0
    %3391 = vmatpush1.msra.mxu0 %v3136
    %3392 = vmatprep.subr.mxu0 0.0
    %3393 = vmatpush1.msra.mxu0 %v3137
    %3394 = vmatprep.subr.mxu0 0.0
    %3395 = vmatpush1.msra.mxu0 %v3138
    %3396 = vmatprep.mubr.f32.mxu0 %v2966
    %3397 = vmatmul.mubr.f32.gmra.mrb[0].mxu0 %v2965
    %v3398 = vpop.f32.mrb[0].mxu0
    %v3399 = vadd.f32 %v3254, %v3398
    %v3400 = vpop.f32.mrb[0].mxu0
    %3401 = vmatprep.mubr.f32.mxu0 %v2973
    %3402 = vmatmul.mubr.f32.gmra.mrb[0].mxu0 %v2972
    %v3403 = vpop.f32.mrb[0].mxu0
    %v3404 = vadd.f32 %v3259, %v3403
    %v3405 = vpop.f32.mrb[0].mxu0
    %3406 = vmatprep.mubr.f32.mxu0 %v2980
    %3407 = vmatmul.mubr.f32.gmra.mrb[0].mxu0 %v2979
    %v3408 = vpop.f32.mrb[0].mxu0
    %v3409 = vadd.f32 %v3264, %v3408
    %v3410 = vpop.f32.mrb[0].mxu0
    %3411 = vmatprep.mubr.f32.mxu0 %v2987
    %3412 = vmatmul.mubr.f32.gmra.mrb[0].mxu0 %v2986
    %v3413 = vpop.f32.mrb[0].mxu0
    %v3414 = vadd.f32 %v3269, %v3413
    %v3415 = vpop.f32.mrb[0].mxu0
    %3416 = vmatprep.mubr.f32.mxu0 %v2994
    %3417 = vmatmul.mubr.f32.gmra.mrb[0].mxu0 %v2993
    %v3418 = vpop.f32.mrb[0].mxu0
    %v3419 = vadd.f32 %v3274, %v3418
    %v3420 = vpop.f32.mrb[0].mxu0
    %3421 = vmatprep.mubr.f32.mxu0 %v3001
    %3422 = vmatmul.mubr.f32.gmra.mrb[0].mxu0 %v3000
    %v3423 = vpop.f32.mrb[0].mxu0
    %v3424 = vadd.f32 %v3279, %v3423
    %v3425 = vpop.f32.mrb[0].mxu0
    %3426 = vmatprep.mubr.f32.mxu0 %v3008
    %3427 = vmatmul.mubr.f32.gmra.mrb[0].mxu0 %v3007
    %v3428 = vpop.f32.mrb[0].mxu0
    %v3429 = vadd.f32 %v3284, %v3428
    %v3430 = vpop.f32.mrb[0].mxu0
    %3431 = vmatprep.mubr.f32.mxu0 %v3015
    %3432 = vmatmul.mubr.f32.gmra.mrb[0].mxu0 %v3014
    %v3433 = vpop.f32.mrb[0].mxu0
    %v3434 = vadd.f32 %v3289, %v3433
    %v3435 = vpop.f32.mrb[0].mxu0
    %3436 = vmatprep.mubr.f32.mxu0 %v3022
    %3437 = vmatmul.mubr.f32.gmra.mrb[0].mxu0 %v3021
    %v3438 = vpop.f32.mrb[0].mxu0
    %v3439 = vadd.f32 %v3294, %v3438
    %v3440 = vpop.f32.mrb[0].mxu0
    %3441 = vmatprep.mubr.f32.mxu0 %v3029
    %3442 = vmatmul.mubr.f32.gmra.mrb[0].mxu0 %v3028
    %v3443 = vpop.f32.mrb[0].mxu0
    %v3444 = vadd.f32 %v3299, %v3443
    %v3445 = vpop.f32.mrb[0].mxu0
    %3446 = vmatprep.mubr.f32.mxu0 %v3036
    %3447 = vmatmul.mubr.f32.gmra.mrb[0].mxu0 %v3035
    %v3448 = vpop.f32.mrb[0].mxu0
    %v3449 = vadd.f32 %v3304, %v3448
    %v3450 = vpop.f32.mrb[0].mxu0
    %3451 = vmatprep.mubr.f32.mxu0 %v3043
    %3452 = vmatmul.mubr.f32.gmra.mrb[0].mxu0 %v3042
    %v3453 = vpop.f32.mrb[0].mxu0
    %v3454 = vadd.f32 %v3309, %v3453
    %v3455 = vpop.f32.mrb[0].mxu0
    %3456 = vmatprep.mubr.f32.mxu0 %v3050
    %3457 = vmatmul.mubr.f32.gmra.mrb[0].mxu0 %v3049
    %v3458 = vpop.f32.mrb[0].mxu0
    %v3459 = vadd.f32 %v3314, %v3458
    %v3460 = vpop.f32.mrb[0].mxu0
    %3461 = vmatprep.mubr.f32.mxu0 %v3057
    %3462 = vmatmul.mubr.f32.gmra.mrb[0].mxu0 %v3056
    %v3463 = vpop.f32.mrb[0].mxu0
    %v3464 = vadd.f32 %v3319, %v3463
    %v3465 = vpop.f32.mrb[0].mxu0
    %3466 = vmatprep.mubr.f32.mxu0 %v3064
    %3467 = vmatmul.mubr.f32.gmra.mrb[0].mxu0 %v3063
    %v3468 = vpop.f32.mrb[0].mxu0
    %v3469 = vadd.f32 %v3324, %v3468
    %v3470 = vpop.f32.mrb[0].mxu0
    %3471 = vmatprep.mubr.f32.mxu0 %v3071
    %3472 = vmatmul.mubr.f32.gmra.mrb[0].mxu0 %v3070
    %v3473 = vpop.f32.mrb[0].mxu0
    %v3474 = vadd.f32 %v3329, %v3473
    %v3475 = vpop.f32.mrb[0].mxu0
    %3476 = vdwg.mxu0
    %3477 = vmatprep.subr.mxu0 0.0
    %3478 = vmatpush1.msra.mxu0 %v3139
    %3479 = vmatprep.subr.mxu0 0.0
    %3480 = vmatpush1.msra.mxu0 %v3140
    %3481 = vmatprep.subr.mxu0 0.0
    %3482 = vmatpush1.msra.mxu0 %v3141
    %3483 = vmatprep.subr.mxu0 0.0
    %3484 = vmatpush1.msra.mxu0 %v3142
    %3485 = vmatprep.subr.mxu0 0.0
    %3486 = vmatpush1.msra.mxu0 %v3143
    %3487 = vmatprep.subr.mxu0 0.0
    %3488 = vmatpush1.msra.mxu0 %v3144
    %3489 = vmatprep.subr.mxu0 0.0
    %3490 = vmatpush1.msra.mxu0 %v3145
    %3491 = vmatprep.subr.mxu0 0.0
    %3492 = vmatpush1.msra.mxu0 %v3146
    %3493 = vmatprep.subr.mxu0 0.0
    %3494 = vmatpush1.msra.mxu0 %v3147
    %3495 = vmatprep.subr.mxu0 0.0
    %3496 = vmatpush1.msra.mxu0 %v3148
    %3497 = vmatprep.subr.mxu0 0.0
    %3498 = vmatpush1.msra.mxu0 %v3149
    %3499 = vmatprep.subr.mxu0 0.0
    %3500 = vmatpush1.msra.mxu0 %v3150
    %3501 = vmatprep.subr.mxu0 0.0
    %3502 = vmatpush1.msra.mxu0 %v3151
    %3503 = vmatprep.subr.mxu0 0.0
    %3504 = vmatpush1.msra.mxu0 %v3152
    %3505 = vmatprep.subr.mxu0 0.0
    %3506 = vmatpush1.msra.mxu0 %v3153
    %3507 = vmatprep.subr.mxu0 0.0
    %3508 = vmatpush1.msra.mxu0 %v3154
    %3509 = vmatprep.subr.mxu0 0.0
    %3510 = vmatpush1.msra.mxu0 %v3155
    %3511 = vmatprep.subr.mxu0 0.0
    %3512 = vmatpush1.msra.mxu0 %v3156
    %3513 = vmatprep.subr.mxu0 0.0
    %3514 = vmatpush1.msra.mxu0 %v3157
    %3515 = vmatprep.subr.mxu0 0.0
    %3516 = vmatpush1.msra.mxu0 %v3158
    %3517 = vmatprep.subr.mxu0 0.0
    %3518 = vmatpush1.msra.mxu0 %v3159
    %3519 = vmatprep.subr.mxu0 0.0
    %3520 = vmatpush1.msra.mxu0 %v3160
    %3521 = vmatprep.subr.mxu0 0.0
    %3522 = vmatpush1.msra.mxu0 %v3161
    %3523 = vmatprep.subr.mxu0 0.0
    %3524 = vmatpush1.msra.mxu0 %v3162
    %3525 = vmatprep.subr.mxu0 0.0
    %3526 = vmatpush1.msra.mxu0 %v3163
    %3527 = vmatprep.subr.mxu0 0.0
    %3528 = vmatpush1.msra.mxu0 %v3164
    %3529 = vmatprep.subr.mxu0 0.0
    %3530 = vmatpush1.msra.mxu0 %v3165
    %3531 = vmatprep.subr.mxu0 0.0
    %3532 = vmatpush1.msra.mxu0 %v3166
    %3533 = vmatprep.subr.mxu0 0.0
    %3534 = vmatpush1.msra.mxu0 %v3167
    %3535 = vmatprep.subr.mxu0 0.0
    %3536 = vmatpush1.msra.mxu0 %v3168
    %3537 = vmatprep.subr.mxu0 0.0
    %3538 = vmatpush1.msra.mxu0 %v3169
    %3539 = vmatprep.subr.mxu0 0.0
    %3540 = vmatpush1.msra.mxu0 %v3170
    %3541 = vmatprep.mubr.f32.mxu0 %v2968
    %3542 = vmatmul.mubr.f32.gmra.mrb[0].mxu0 %v2967
    %v3543 = vpop.f32.mrb[0].mxu0
    %v3544 = vadd.f32 %v3399, %v3543
    %v3545 = vpop.f32.mrb[0].mxu0
    %3546 = vmatprep.mubr.f32.mxu0 %v2975
    %3547 = vmatmul.mubr.f32.gmra.mrb[0].mxu0 %v2974
    %v3548 = vpop.f32.mrb[0].mxu0
    %v3549 = vadd.f32 %v3404, %v3548
    %v3550 = vpop.f32.mrb[0].mxu0
    %3551 = vmatprep.mubr.f32.mxu0 %v2982
    %3552 = vmatmul.mubr.f32.gmra.mrb[0].mxu0 %v2981
    %v3553 = vpop.f32.mrb[0].mxu0
    %v3554 = vadd.f32 %v3409, %v3553
    %v3555 = vpop.f32.mrb[0].mxu0
    %3556 = vmatprep.mubr.f32.mxu0 %v2989
    %3557 = vmatmul.mubr.f32.gmra.mrb[0].mxu0 %v2988
    %v3558 = vpop.f32.mrb[0].mxu0
    %v3559 = vadd.f32 %v3414, %v3558
    %v3560 = vpop.f32.mrb[0].mxu0
    %3561 = vmatprep.mubr.f32.mxu0 %v2996
    %3562 = vmatmul.mubr.f32.gmra.mrb[0].mxu0 %v2995
    %v3563 = vpop.f32.mrb[0].mxu0
    %v3564 = vadd.f32 %v3419, %v3563
    %v3565 = vpop.f32.mrb[0].mxu0
    %3566 = vmatprep.mubr.f32.mxu0 %v3003
    %3567 = vmatmul.mubr.f32.gmra.mrb[0].mxu0 %v3002
    %v3568 = vpop.f32.mrb[0].mxu0
    %v3569 = vadd.f32 %v3424, %v3568
    %v3570 = vpop.f32.mrb[0].mxu0
    %3571 = vmatprep.mubr.f32.mxu0 %v3010
    %3572 = vmatmul.mubr.f32.gmra.mrb[0].mxu0 %v3009
    %v3573 = vpop.f32.mrb[0].mxu0
    %v3574 = vadd.f32 %v3429, %v3573
    %v3575 = vpop.f32.mrb[0].mxu0
    %3576 = vmatprep.mubr.f32.mxu0 %v3017
    %3577 = vmatmul.mubr.f32.gmra.mrb[0].mxu0 %v3016
    %v3578 = vpop.f32.mrb[0].mxu0
    %v3579 = vadd.f32 %v3434, %v3578
    %v3580 = vpop.f32.mrb[0].mxu0
    %3581 = vmatprep.mubr.f32.mxu0 %v3024
    %3582 = vmatmul.mubr.f32.gmra.mrb[0].mxu0 %v3023
    %v3583 = vpop.f32.mrb[0].mxu0
    %v3584 = vadd.f32 %v3439, %v3583
    %v3585 = vpop.f32.mrb[0].mxu0
    %3586 = vmatprep.mubr.f32.mxu0 %v3031
    %3587 = vmatmul.mubr.f32.gmra.mrb[0].mxu0 %v3030
    %v3588 = vpop.f32.mrb[0].mxu0
    %v3589 = vadd.f32 %v3444, %v3588
    %v3590 = vpop.f32.mrb[0].mxu0
    %3591 = vmatprep.mubr.f32.mxu0 %v3038
    %3592 = vmatmul.mubr.f32.gmra.mrb[0].mxu0 %v3037
    %v3593 = vpop.f32.mrb[0].mxu0
    %v3594 = vadd.f32 %v3449, %v3593
    %v3595 = vpop.f32.mrb[0].mxu0
    %3596 = vmatprep.mubr.f32.mxu0 %v3045
    %3597 = vmatmul.mubr.f32.gmra.mrb[0].mxu0 %v3044
    %v3598 = vpop.f32.mrb[0].mxu0
    %v3599 = vadd.f32 %v3454, %v3598
    %v3600 = vpop.f32.mrb[0].mxu0
    %3601 = vmatprep.mubr.f32.mxu0 %v3052
    %3602 = vmatmul.mubr.f32.gmra.mrb[0].mxu0 %v3051
    %v3603 = vpop.f32.mrb[0].mxu0
    %v3604 = vadd.f32 %v3459, %v3603
    %v3605 = vpop.f32.mrb[0].mxu0
    %3606 = vmatprep.mubr.f32.mxu0 %v3059
    %3607 = vmatmul.mubr.f32.gmra.mrb[0].mxu0 %v3058
    %v3608 = vpop.f32.mrb[0].mxu0
    %v3609 = vadd.f32 %v3464, %v3608
    %v3610 = vpop.f32.mrb[0].mxu0
    %3611 = vmatprep.mubr.f32.mxu0 %v3066
    %3612 = vmatmul.mubr.f32.gmra.mrb[0].mxu0 %v3065
    %v3613 = vpop.f32.mrb[0].mxu0
    %v3614 = vadd.f32 %v3469, %v3613
    %v3615 = vpop.f32.mrb[0].mxu0
    %3616 = vmatprep.mubr.f32.mxu0 %v3073
    %3617 = vmatmul.mubr.f32.gmra.mrb[0].mxu0 %v3072
    %v3618 = vpop.f32.mrb[0].mxu0
    %v3619 = vadd.f32 %v3474, %v3618
    %v3620 = vpop.f32.mrb[0].mxu0
    %3621 = vdwg.mxu0
    %3622 = vmatprep.subr.mxu0 0.0
    %3623 = vmatpush1.msra.mxu0 %v3171
    %3624 = vmatprep.subr.mxu0 0.0
    %3625 = vmatpush1.msra.mxu0 %v3172
    %3626 = vmatprep.subr.mxu0 0.0
    %3627 = vmatpush1.msra.mxu0 %v3173
    %3628 = vmatprep.subr.mxu0 0.0
    %3629 = vmatpush1.msra.mxu0 %v3174
    %3630 = vmatprep.subr.mxu0 0.0
    %3631 = vmatpush1.msra.mxu0 %v3175
    %3632 = vmatprep.subr.mxu0 0.0
    %3633 = vmatpush1.msra.mxu0 %v3176
    %3634 = vmatprep.subr.mxu0 0.0
    %3635 = vmatpush1.msra.mxu0 %v3177
    %3636 = vmatprep.subr.mxu0 0.0
    %3637 = vmatpush1.msra.mxu0 %v3178
    %3638 = vmatprep.subr.mxu0 0.0
    %3639 = vmatpush1.msra.mxu0 %v3179
    %3640 = vmatprep.subr.mxu0 0.0
    %3641 = vmatpush1.msra.mxu0 %v3180
    %3642 = vmatprep.subr.mxu0 0.0
    %3643 = vmatpush1.msra.mxu0 %v3181
    %3644 = vmatprep.subr.mxu0 0.0
    %3645 = vmatpush1.msra.mxu0 %v3182
    %3646 = vmatprep.subr.mxu0 0.0
    %3647 = vmatpush1.msra.mxu0 %v3183
    %3648 = vmatprep.subr.mxu0 0.0
    %3649 = vmatpush1.msra.mxu0 %v3184
    %3650 = vmatprep.subr.mxu0 0.0
    %3651 = vmatpush1.msra.mxu0 %v3185
    %3652 = vmatprep.subr.mxu0 0.0
    %3653 = vmatpush1.msra.mxu0 %v3186
    %3654 = vmatprep.subr.mxu0 0.0
    %3655 = vmatpush1.msra.mxu0 0.0
    %3656 = vmatprep.subr.mxu0 0.0
    %3657 = vmatpush1.msra.mxu0 0.0
    %3658 = vmatprep.subr.mxu0 0.0
    %3659 = vmatpush1.msra.mxu0 0.0
    %3660 = vmatprep.subr.mxu0 0.0
    %3661 = vmatpush1.msra.mxu0 0.0
    %3662 = vmatprep.subr.mxu0 0.0
    %3663 = vmatpush1.msra.mxu0 0.0
    %3664 = vmatprep.subr.mxu0 0.0
    %3665 = vmatpush1.msra.mxu0 0.0
    %3666 = vmatprep.subr.mxu0 0.0
    %3667 = vmatpush1.msra.mxu0 0.0
    %3668 = vmatprep.subr.mxu0 0.0
    %3669 = vmatpush1.msra.mxu0 0.0
    %3670 = vmatprep.subr.mxu0 0.0
    %3671 = vmatpush1.msra.mxu0 0.0
    %3672 = vmatprep.subr.mxu0 0.0
    %3673 = vmatpush1.msra.mxu0 0.0
    %3674 = vmatprep.subr.mxu0 0.0
    %3675 = vmatpush1.msra.mxu0 0.0
    %3676 = vmatprep.subr.mxu0 0.0
    %3677 = vmatpush1.msra.mxu0 0.0
    %3678 = vmatprep.subr.mxu0 0.0
    %3679 = vmatpush1.msra.mxu0 0.0
    %3680 = vmatprep.subr.mxu0 0.0
    %3681 = vmatpush1.msra.mxu0 0.0
    %3682 = vmatprep.subr.mxu0 0.0
    %3683 = vmatpush1.msra.mxu0 0.0
    %3684 = vmatprep.subr.mxu0 0.0
    %3685 = vmatpush1.msra.mxu0 0.0
    %3686 = vmatprep.mubr.f32.mxu0 0.0
    %3687 = vmatmul.mubr.f32.gmra.mrb[0].mxu0 %v2969
    %v3688 = vpop.f32.mrb[0].mxu0
    %v3689 = vadd.f32 %v3544, %v3688
    %v3690 = vpop.f32.mrb[0].mxu0
    %3691 = vmatprep.mubr.f32.mxu0 0.0
    %3692 = vmatmul.mubr.f32.gmra.mrb[0].mxu0 %v2976
    %v3693 = vpop.f32.mrb[0].mxu0
    %v3694 = vadd.f32 %v3549, %v3693
    %v3695 = vpop.f32.mrb[0].mxu0
    %3696 = vmatprep.mubr.f32.mxu0 0.0
    %3697 = vmatmul.mubr.f32.gmra.mrb[0].mxu0 %v2983
    %v3698 = vpop.f32.mrb[0].mxu0
    %v3699 = vadd.f32 %v3554, %v3698
    %v3700 = vpop.f32.mrb[0].mxu0
    %3701 = vmatprep.mubr.f32.mxu0 0.0
    %3702 = vmatmul.mubr.f32.gmra.mrb[0].mxu0 %v2990
    %v3703 = vpop.f32.mrb[0].mxu0
    %v3704 = vadd.f32 %v3559, %v3703
    %v3705 = vpop.f32.mrb[0].mxu0
    %3706 = vmatprep.mubr.f32.mxu0 0.0
    %3707 = vmatmul.mubr.f32.gmra.mrb[0].mxu0 %v2997
    %v3708 = vpop.f32.mrb[0].mxu0
    %v3709 = vadd.f32 %v3564, %v3708
    %v3710 = vpop.f32.mrb[0].mxu0
    %3711 = vmatprep.mubr.f32.mxu0 0.0
    %3712 = vmatmul.mubr.f32.gmra.mrb[0].mxu0 %v3004
    %v3713 = vpop.f32.mrb[0].mxu0
    %v3714 = vadd.f32 %v3569, %v3713
    %v3715 = vpop.f32.mrb[0].mxu0
    %3716 = vmatprep.mubr.f32.mxu0 0.0
    %3717 = vmatmul.mubr.f32.gmra.mrb[0].mxu0 %v3011
    %v3718 = vpop.f32.mrb[0].mxu0
    %v3719 = vadd.f32 %v3574, %v3718
    %v3720 = vpop.f32.mrb[0].mxu0
    %3721 = vmatprep.mubr.f32.mxu0 0.0
    %3722 = vmatmul.mubr.f32.gmra.mrb[0].mxu0 %v3018
    %v3723 = vpop.f32.mrb[0].mxu0
    %v3724 = vadd.f32 %v3579, %v3723
    %v3725 = vpop.f32.mrb[0].mxu0
    %3726 = vmatprep.mubr.f32.mxu0 0.0
    %3727 = vmatmul.mubr.f32.gmra.mrb[0].mxu0 %v3025
    %v3728 = vpop.f32.mrb[0].mxu0
    %v3729 = vadd.f32 %v3584, %v3728
    %v3730 = vpop.f32.mrb[0].mxu0
    %3731 = vmatprep.mubr.f32.mxu0 0.0
    %3732 = vmatmul.mubr.f32.gmra.mrb[0].mxu0 %v3032
    %v3733 = vpop.f32.mrb[0].mxu0
    %v3734 = vadd.f32 %v3589, %v3733
    %v3735 = vpop.f32.mrb[0].mxu0
    %3736 = vmatprep.mubr.f32.mxu0 0.0
    %3737 = vmatmul.mubr.f32.gmra.mrb[0].mxu0 %v3039
    %v3738 = vpop.f32.mrb[0].mxu0
    %v3739 = vadd.f32 %v3594, %v3738
    %v3740 = vpop.f32.mrb[0].mxu0
    %3741 = vmatprep.mubr.f32.mxu0 0.0
    %3742 = vmatmul.mubr.f32.gmra.mrb[0].mxu0 %v3046
    %v3743 = vpop.f32.mrb[0].mxu0
    %v3744 = vadd.f32 %v3599, %v3743
    %v3745 = vpop.f32.mrb[0].mxu0
    %3746 = vmatprep.mubr.f32.mxu0 0.0
    %3747 = vmatmul.mubr.f32.gmra.mrb[0].mxu0 %v3053
    %v3748 = vpop.f32.mrb[0].mxu0
    %v3749 = vadd.f32 %v3604, %v3748
    %v3750 = vpop.f32.mrb[0].mxu0
    %3751 = vmatprep.mubr.f32.mxu0 0.0
    %3752 = vmatmul.mubr.f32.gmra.mrb[0].mxu0 %v3060
    %v3753 = vpop.f32.mrb[0].mxu0
    %v3754 = vadd.f32 %v3609, %v3753
    %v3755 = vpop.f32.mrb[0].mxu0
    %3756 = vmatprep.mubr.f32.mxu0 0.0
    %3757 = vmatmul.mubr.f32.gmra.mrb[0].mxu0 %v3067
    %v3758 = vpop.f32.mrb[0].mxu0
    %v3759 = vadd.f32 %v3614, %v3758
    %v3760 = vpop.f32.mrb[0].mxu0
    %3761 = vmatprep.mubr.f32.mxu0 0.0
    %3762 = vmatmul.mubr.f32.gmra.mrb[0].mxu0 %v3074
    %v3763 = vpop.f32.mrb[0].mxu0
    %v3764 = vadd.f32 %v3619, %v3763
    %v3765 = vpop.f32.mrb[0].mxu0
    %3766 = vdwg.mxu0
    %vm3767 = vcmask 523264
    %3768 = vst.msk [vmem:[#allocation6] sm:$0xff] %vm3767, %v3689
    %3769 = vst.msk [vmem:[#allocation6 + $0x8] sm:$0xff] %vm3767, %v3694
    %3770 = vst.msk [vmem:[#allocation6 + $0x10] sm:$0xff] %vm3767, %v3699
    %3771 = vst.msk [vmem:[#allocation6 + $0x18] sm:$0xff] %vm3767, %v3704
    %3772 = vst.msk [vmem:[#allocation6 + $0x20] sm:$0xff] %vm3767, %v3709
    %3773 = vst.msk [vmem:[#allocation6 + $0x28] sm:$0xff] %vm3767, %v3714
    %3774 = vst.msk [vmem:[#allocation6 + $0x30] sm:$0xff] %vm3767, %v3719
    %3775 = vst.msk [vmem:[#allocation6 + $0x38] sm:$0xff] %vm3767, %v3724
    %3776 = vst.msk [vmem:[#allocation6 + $0x40] sm:$0xff] %vm3767, %v3729
    %3777 = vst.msk [vmem:[#allocation6 + $0x48] sm:$0xff] %vm3767, %v3734
    %3778 = vst.msk [vmem:[#allocation6 + $0x50] sm:$0xff] %vm3767, %v3739
    %3779 = vst.msk [vmem:[#allocation6 + $0x58] sm:$0xff] %vm3767, %v3744
    %3780 = vst.msk [vmem:[#allocation6 + $0x60] sm:$0xff] %vm3767, %v3749
    %3781 = vst.msk [vmem:[#allocation6 + $0x68] sm:$0xff] %vm3767, %v3754
    %3782 = vst.msk [vmem:[#allocation6 + $0x70] sm:$0xff] %vm3767, %v3759
    %3783 = vst.msk [vmem:[#allocation6 + $0x78] sm:$0xff] %vm3767, %v3764
    %v3784 = vld [vmem:[%s4] sm:$0x1]
    %v3785 = vld [vmem:[#allocation6] sm:$0xff]
    %v3786 = vld [vmem:[#allocation6 + $0x10] sm:$0xff]
    %v3787 = vld [vmem:[#allocation6 + $0x20] sm:$0xff]
    %v3788 = vld [vmem:[#allocation6 + $0x30] sm:$0xff]
    %v3789 = vld [vmem:[#allocation6 + $0x40] sm:$0xff]
    %v3790 = vld [vmem:[#allocation6 + $0x50] sm:$0xff]
    %v3791 = vld [vmem:[#allocation6 + $0x60] sm:$0xff]
    %v3792 = vld [vmem:[#allocation6 + $0x70] sm:$0xff]
    %v3794 = vlaneseq
    %v3795 = vshrl.u32 %v3794, 7
    %v3796 = vsub.s32 0, %v3795
    %v3797 = vrot.slane %v3784, %v3796
    %v3799 = vadd.f32 %v3785, %v3797
    %v3800 = vadd.f32 %v3786, %v3797
    %v3801 = vadd.f32 %v3787, %v3797
    %v3802 = vadd.f32 %v3788, %v3797
    %v3803 = vadd.f32 %v3789, %v3797
    %v3804 = vadd.f32 %v3790, %v3797
    %v3805 = vadd.f32 %v3791, %v3797
    %v3806 = vadd.f32 %v3792, %v3797
    %v3807 = vmax.f32 %v3799, 0.0
    %v3808 = vmax.f32 %v3800, 0.0
    %v3809 = vmax.f32 %v3801, 0.0
    %v3810 = vmax.f32 %v3802, 0.0
    %v3811 = vmax.f32 %v3803, 0.0
    %v3812 = vmax.f32 %v3804, 0.0
    %v3813 = vmax.f32 %v3805, 0.0
    %v3814 = vmax.f32 %v3806, 0.0
    %s3815 = scalar_lea.vmem [#allocation6], 8
    %v3816 = vld [vmem:[%s3815] sm:$0xff]
    %v3817 = vld [vmem:[%s3815 + $0x10] sm:$0xff]
    %v3818 = vld [vmem:[%s3815 + $0x20] sm:$0xff]
    %v3819 = vld [vmem:[%s3815 + $0x30] sm:$0xff]
    %v3820 = vld [vmem:[%s3815 + $0x40] sm:$0xff]
    %v3821 = vld [vmem:[%s3815 + $0x50] sm:$0xff]
    %v3822 = vld [vmem:[%s3815 + $0x60] sm:$0xff]
    %v3823 = vld [vmem:[%s3815 + $0x70] sm:$0xff]
    %v3824 = vadd.f32 %v3816, %v3797
    %v3825 = vadd.f32 %v3817, %v3797
    %v3826 = vadd.f32 %v3818, %v3797
    %v3827 = vadd.f32 %v3819, %v3797
    %v3828 = vadd.f32 %v3820, %v3797
    %v3829 = vadd.f32 %v3821, %v3797
    %v3830 = vadd.f32 %v3822, %v3797
    %v3831 = vadd.f32 %v3823, %v3797
    %v3832 = vmax.f32 %v3824, 0.0
    %v3833 = vmax.f32 %v3825, 0.0
    %v3834 = vmax.f32 %v3826, 0.0
    %v3835 = vmax.f32 %v3827, 0.0
    %v3836 = vmax.f32 %v3828, 0.0
    %v3837 = vmax.f32 %v3829, 0.0
    %v3838 = vmax.f32 %v3830, 0.0
    %v3839 = vmax.f32 %v3831, 0.0
    %v3840 = vadd.f32 %v3807, %v3832
    %v3841 = vadd.f32 %v3808, %v3833
    %v3842 = vadd.f32 %v3809, %v3834
    %v3843 = vadd.f32 %v3810, %v3835
    %v3844 = vadd.f32 %v3811, %v3836
    %v3845 = vadd.f32 %v3812, %v3837
    %v3846 = vadd.f32 %v3813, %v3838
    %v3847 = vadd.f32 %v3814, %v3839
    %3848 = vst.msk [vmem:[#allocation7] sm:$0xff] %vm3767, %v3840
    %3849 = vst.msk [vmem:[#allocation7 + $0x8] sm:$0xff] %vm3767, %v3841
    %3850 = vst.msk [vmem:[#allocation7 + $0x10] sm:$0xff] %vm3767, %v3842
    %3851 = vst.msk [vmem:[#allocation7 + $0x18] sm:$0xff] %vm3767, %v3843
    %3852 = vst.msk [vmem:[#allocation7 + $0x20] sm:$0xff] %vm3767, %v3844
    %3853 = vst.msk [vmem:[#allocation7 + $0x28] sm:$0xff] %vm3767, %v3845
    %3854 = vst.msk [vmem:[#allocation7 + $0x30] sm:$0xff] %vm3767, %v3846
    %3855 = vst.msk [vmem:[#allocation7 + $0x38] sm:$0xff] %vm3767, %v3847
    %v3856 = vld [vmem:[#allocation7] ss:$2 sm:$0xff]
    %s3857 = scalar_lea.vmem [#allocation7], 16
    %v3858 = vld [vmem:[%s3857] ss:$2 sm:$0xff]
    %s3859 = scalar_lea.vmem [#allocation7], 32
    %v3860 = vld [vmem:[%s3859] ss:$2 sm:$0xff]
    %s3861 = scalar_lea.vmem [#allocation7], 48
    %v3862 = vld [vmem:[%s3861] ss:$2 sm:$0xff]
    %s3863 = scalar_lea.vmem [#allocation7], 1
    %v3864 = vld [vmem:[%s3863] ss:$2 sm:$0xff]
    %s3865 = scalar_lea.vmem [#allocation7], 17
    %v3866 = vld [vmem:[%s3865] ss:$2 sm:$0xff]
    %s3867 = scalar_lea.vmem [#allocation7], 33
    %v3868 = vld [vmem:[%s3867] ss:$2 sm:$0xff]
    %s3869 = scalar_lea.vmem [#allocation7], 49
    %v3870 = vld [vmem:[%s3869] ss:$2 sm:$0xff]
    %v3871 = vadd.f32 %v3856, %v3864
    %v3872 = vadd.f32 %v3858, %v3866
    %v3873 = vadd.f32 %v3860, %v3868
    %v3874 = vadd.f32 %v3862, %v3870
    %v3875 = vmul.f32 %v3871, 0.25
    %v3876 = vmul.f32 %v3872, 0.25
    %v3877 = vmul.f32 %v3873, 0.25
    %v3878 = vmul.f32 %v3874, 0.25
    %v3882 = vunpack.c.l.s4 1983009808
    %v3883 = vunpack.c.0.s8 %v3882
    %v3884 = vlaneseq
    %v3885 = vshrl.u32 %v3884, 7
    %v3886 = vsub.s32 %v3883, %v3885
    %v3887 = vrot.slane %v3875, %v3886
    %v3889 = vunpack.c.l.s4 1983009808
    %v3890 = vunpack.c.0.s8 %v3889
    %v3891 = vlaneseq
    %v3892 = vshrl.u32 %v3891, 7
    %v3893 = vsub.s32 %v3890, %v3892
    %v3894 = vrot.slane %v3877, %v3893
    %vm3895 = vcmask 1044484
    %v3896 = vsel %vm3895, %v3887, %v3887
    %vm3897 = vcmask 1046534
    %v3898 = vsel %vm3897, %v3887, %v3896
    %v3899 = vrot.slane %v3894, 7
    %vm3900 = vcmask 1041409
    %v3901 = vsel %vm3900, %v3899, %v3898
    %vm3902 = vcmask 1043459
    %v3903 = vsel %vm3902, %v3899, %v3901
    %vm3904 = vcmask 1045509
    %v3905 = vsel %vm3904, %v3899, %v3903
    %vm3906 = vcmask 1047559
    %v3907 = vsel %vm3906, %v3899, %v3905
    %vm3909 = vcmask 517120
    %3910 = vst.msk [vmem:[#allocation8] sm:$0x3] %vm3909, %v3907
    %v3911 = vrot.slane %v3887, 1
    %v3912 = vsel %vm3895, %v3911, %v3911
    %v3913 = vsel %vm3897, %v3911, %v3912
    %v3914 = vsel %vm3900, %v3894, %v3913
    %v3915 = vsel %vm3902, %v3894, %v3914
    %v3916 = vsel %vm3904, %v3894, %v3915
    %v3917 = vsel %vm3906, %v3894, %v3916
    %3918 = vrot.lane.b32.xlu0 %v3917, 64
    %v3919 = vpop.permute.xlu0 %3918
    %vm3921 = vcmask 1041920
    %3922 = vst.msk [vmem:[#allocation8] sm:$0x3] %vm3921, %v3919
    %v3923 = vcombine.high %v3887, %v3887
    %v3924 = vcombine.high %v3894, %v3894
    %v3925 = vsel %vm3895, %v3923, %v3923
    %v3926 = vsel %vm3897, %v3923, %v3925
    %v3927 = vrot.slane %v3924, 7
    %v3928 = vsel %vm3900, %v3927, %v3926
    %v3929 = vsel %vm3902, %v3927, %v3928
    %v3930 = vsel %vm3904, %v3927, %v3929
    %v3931 = vsel %vm3906, %v3927, %v3930
    %3933 = vst.msk [vmem:[#allocation8 + $0x2] sm:$0x3] %vm3909, %v3931
    %v3934 = vrot.slane %v3923, 1
    %v3935 = vsel %vm3895, %v3934, %v3934
    %v3936 = vsel %vm3897, %v3934, %v3935
    %v3937 = vsel %vm3900, %v3924, %v3936
    %v3938 = vsel %vm3902, %v3924, %v3937
    %v3939 = vsel %vm3904, %v3924, %v3938
    %v3940 = vsel %vm3906, %v3924, %v3939
    %3941 = vrot.lane.b32.xlu0 %v3940, 64
    %v3942 = vpop.permute.xlu0 %3941
    %3944 = vst.msk [vmem:[#allocation8 + $0x2] sm:$0x3] %vm3921, %v3942
    %v3945 = vcombine.high %v3875, %v3875
    %v3947 = vunpack.c.l.s4 1983009808
    %v3948 = vunpack.c.0.s8 %v3947
    %v3949 = vlaneseq
    %v3950 = vshrl.u32 %v3949, 7
    %v3951 = vsub.s32 %v3948, %v3950
    %v3952 = vrot.slane %v3945, %v3951
    %v3953 = vcombine.high %v3877, %v3877
    %v3955 = vunpack.c.l.s4 1983009808
    %v3956 = vunpack.c.0.s8 %v3955
    %v3957 = vlaneseq
    %v3958 = vshrl.u32 %v3957, 7
    %v3959 = vsub.s32 %v3956, %v3958
    %v3960 = vrot.slane %v3953, %v3959
    %v3961 = vsel %vm3895, %v3952, %v3952
    %v3962 = vsel %vm3897, %v3952, %v3961
    %v3963 = vrot.slane %v3960, 7
    %v3964 = vsel %vm3900, %v3963, %v3962
    %v3965 = vsel %vm3902, %v3963, %v3964
    %v3966 = vsel %vm3904, %v3963, %v3965
    %v3967 = vsel %vm3906, %v3963, %v3966
    %3969 = vst.msk [vmem:[#allocation8 + $0x4] sm:$0x3] %vm3909, %v3967
    %v3970 = vrot.slane %v3952, 1
    %v3971 = vsel %vm3895, %v3970, %v3970
    %v3972 = vsel %vm3897, %v3970, %v3971
    %v3973 = vsel %vm3900, %v3960, %v3972
    %v3974 = vsel %vm3902, %v3960, %v3973
    %v3975 = vsel %vm3904, %v3960, %v3974
    %v3976 = vsel %vm3906, %v3960, %v3975
    %3977 = vrot.lane.b32.xlu0 %v3976, 64
    %v3978 = vpop.permute.xlu0 %3977
    %3980 = vst.msk [vmem:[#allocation8 + $0x4] sm:$0x3] %vm3921, %v3978
    %v3981 = vcombine.high %v3952, %v3952
    %v3982 = vcombine.high %v3960, %v3960
    %v3983 = vsel %vm3895, %v3981, %v3981
    %v3984 = vsel %vm3897, %v3981, %v3983
    %v3985 = vrot.slane %v3982, 7
    %v3986 = vsel %vm3900, %v3985, %v3984
    %v3987 = vsel %vm3902, %v3985, %v3986
    %v3988 = vsel %vm3904, %v3985, %v3987
    %v3989 = vsel %vm3906, %v3985, %v3988
    %3991 = vst.msk [vmem:[#allocation8 + $0x6] sm:$0x3] %vm3909, %v3989
    %v3992 = vrot.slane %v3981, 1
    %v3993 = vsel %vm3895, %v3992, %v3992
    %v3994 = vsel %vm3897, %v3992, %v3993
    %v3995 = vsel %vm3900, %v3982, %v3994
    %v3996 = vsel %vm3902, %v3982, %v3995
    %v3997 = vsel %vm3904, %v3982, %v3996
    %v3998 = vsel %vm3906, %v3982, %v3997
    %3999 = vrot.lane.b32.xlu0 %v3998, 64
    %v4000 = vpop.permute.xlu0 %3999
    %4002 = vst.msk [vmem:[#allocation8 + $0x6] sm:$0x3] %vm3921, %v4000
    %v4006 = vunpack.c.l.s4 1983009808
    %v4007 = vunpack.c.0.s8 %v4006
    %v4008 = vlaneseq
    %v4009 = vshrl.u32 %v4008, 7
    %v4010 = vsub.s32 %v4007, %v4009
    %v4011 = vrot.slane %v3876, %v4010
    %v4013 = vunpack.c.l.s4 1983009808
    %v4014 = vunpack.c.0.s8 %v4013
    %v4015 = vlaneseq
    %v4016 = vshrl.u32 %v4015, 7
    %v4017 = vsub.s32 %v4014, %v4016
    %v4018 = vrot.slane %v3878, %v4017
    %v4019 = vsel %vm3895, %v4011, %v4011
    %v4020 = vsel %vm3897, %v4011, %v4019
    %v4021 = vrot.slane %v4018, 7
    %v4022 = vsel %vm3900, %v4021, %v4020
    %v4023 = vsel %vm3902, %v4021, %v4022
    %v4024 = vsel %vm3904, %v4021, %v4023
    %v4025 = vsel %vm3906, %v4021, %v4024
    %4027 = vst.msk [vmem:[#allocation8 + $0x8] sm:$0x3] %vm3909, %v4025
    %v4028 = vrot.slane %v4011, 1
    %v4029 = vsel %vm3895, %v4028, %v4028
    %v4030 = vsel %vm3897, %v4028, %v4029
    %v4031 = vsel %vm3900, %v4018, %v4030
    %v4032 = vsel %vm3902, %v4018, %v4031
    %v4033 = vsel %vm3904, %v4018, %v4032
    %v4034 = vsel %vm3906, %v4018, %v4033
    %4035 = vrot.lane.b32.xlu0 %v4034, 64
    %v4036 = vpop.permute.xlu0 %4035
    %4038 = vst.msk [vmem:[#allocation8 + $0x8] sm:$0x3] %vm3921, %v4036
    %v4039 = vcombine.high %v4011, %v4011
    %v4040 = vcombine.high %v4018, %v4018
    %v4041 = vsel %vm3895, %v4039, %v4039
    %v4042 = vsel %vm3897, %v4039, %v4041
    %v4043 = vrot.slane %v4040, 7
    %v4044 = vsel %vm3900, %v4043, %v4042
    %v4045 = vsel %vm3902, %v4043, %v4044
    %v4046 = vsel %vm3904, %v4043, %v4045
    %v4047 = vsel %vm3906, %v4043, %v4046
    %4049 = vst.msk [vmem:[#allocation8 + $0xa] sm:$0x3] %vm3909, %v4047
    %v4050 = vrot.slane %v4039, 1
    %v4051 = vsel %vm3895, %v4050, %v4050
    %v4052 = vsel %vm3897, %v4050, %v4051
    %v4053 = vsel %vm3900, %v4040, %v4052
    %v4054 = vsel %vm3902, %v4040, %v4053
    %v4055 = vsel %vm3904, %v4040, %v4054
    %v4056 = vsel %vm3906, %v4040, %v4055
    %4057 = vrot.lane.b32.xlu0 %v4056, 64
    %v4058 = vpop.permute.xlu0 %4057
    %4060 = vst.msk [vmem:[#allocation8 + $0xa] sm:$0x3] %vm3921, %v4058
    %v4061 = vcombine.high %v3876, %v3876
    %v4063 = vunpack.c.l.s4 1983009808
    %v4064 = vunpack.c.0.s8 %v4063
    %v4065 = vlaneseq
    %v4066 = vshrl.u32 %v4065, 7
    %v4067 = vsub.s32 %v4064, %v4066
    %v4068 = vrot.slane %v4061, %v4067
    %v4069 = vcombine.high %v3878, %v3878
    %v4071 = vunpack.c.l.s4 1983009808
    %v4072 = vunpack.c.0.s8 %v4071
    %v4073 = vlaneseq
    %v4074 = vshrl.u32 %v4073, 7
    %v4075 = vsub.s32 %v4072, %v4074
    %v4076 = vrot.slane %v4069, %v4075
    %v4077 = vsel %vm3895, %v4068, %v4068
    %v4078 = vsel %vm3897, %v4068, %v4077
    %v4079 = vrot.slane %v4076, 7
    %v4080 = vsel %vm3900, %v4079, %v4078
    %v4081 = vsel %vm3902, %v4079, %v4080
    %v4082 = vsel %vm3904, %v4079, %v4081
    %v4083 = vsel %vm3906, %v4079, %v4082
    %4085 = vst.msk [vmem:[#allocation8 + $0xc] sm:$0x3] %vm3909, %v4083
    %v4086 = vrot.slane %v4068, 1
    %v4087 = vsel %vm3895, %v4086, %v4086
    %v4088 = vsel %vm3897, %v4086, %v4087
    %v4089 = vsel %vm3900, %v4076, %v4088
    %v4090 = vsel %vm3902, %v4076, %v4089
    %v4091 = vsel %vm3904, %v4076, %v4090
    %v4092 = vsel %vm3906, %v4076, %v4091
    %4093 = vrot.lane.b32.xlu0 %v4092, 64
    %v4094 = vpop.permute.xlu0 %4093
    %4096 = vst.msk [vmem:[#allocation8 + $0xc] sm:$0x3] %vm3921, %v4094
    %v4097 = vcombine.high %v4068, %v4068
    %v4098 = vcombine.high %v4076, %v4076
    %v4099 = vsel %vm3895, %v4097, %v4097
    %v4100 = vsel %vm3897, %v4097, %v4099
    %v4101 = vrot.slane %v4098, 7
    %v4102 = vsel %vm3900, %v4101, %v4100
    %v4103 = vsel %vm3902, %v4101, %v4102
    %v4104 = vsel %vm3904, %v4101, %v4103
    %v4105 = vsel %vm3906, %v4101, %v4104
    %4107 = vst.msk [vmem:[#allocation8 + $0xe] sm:$0x3] %vm3909, %v4105
    %v4108 = vrot.slane %v4097, 1
    %v4109 = vsel %vm3895, %v4108, %v4108
    %v4110 = vsel %vm3897, %v4108, %v4109
    %v4111 = vsel %vm3900, %v4098, %v4110
    %v4112 = vsel %vm3902, %v4098, %v4111
    %v4113 = vsel %vm3904, %v4098, %v4112
    %v4114 = vsel %vm3906, %v4098, %v4113
    %4115 = vrot.lane.b32.xlu0 %v4114, 64
    %v4116 = vpop.permute.xlu0 %4115
    %4118 = vst.msk [vmem:[#allocation8 + $0xe] sm:$0x3] %vm3921, %v4116
    %v4119 = vld [vmem:[#allocation8] sm:$0xff]
    %v4120 = vld [vmem:[#allocation8 + $0x8] sm:$0xff]
    %v4121 = vld [vmem:[%s5] sm:$0xff]
    %v4122 = vld [vmem:[%s5 + $0x8] sm:$0xff]
    %v4123 = vld [vmem:[%s5 + $0x10] sm:$0xff]
    %v4124 = vld [vmem:[%s5 + $0x18] sm:$0xff]
    %v4125 = vld [vmem:[%s5 + $0x20] sm:$0xff]
    %v4126 = vld [vmem:[%s5 + $0x28] sm:$0xff]
    %v4127 = vld [vmem:[%s5 + $0x30] sm:$0xff]
    %v4128 = vld [vmem:[%s5 + $0x38] sm:$0xff]
    %v4129 = vld [vmem:[%s5 + $0x40] sm:$0xff]
    %v4130 = vld [vmem:[%s5 + $0x48] sm:$0xff]
    %v4131 = vld [vmem:[%s5 + $0x50] sm:$0xff]
    %v4132 = vld [vmem:[%s5 + $0x58] sm:$0xff]
    %v4133 = vld [vmem:[%s5 + $0x60] sm:$0xff]
    %v4134 = vld [vmem:[%s5 + $0x68] sm:$0xff]
    %v4135 = vld [vmem:[%s5 + $0x70] sm:$0xff]
    %v4136 = vld [vmem:[%s5 + $0x78] sm:$0xff]
    %v4137 = vld [vmem:[%s5 + $0x80] sm:$0xff]
    %v4138 = vld [vmem:[%s5 + $0x88] sm:$0xff]
    %v4139 = vld [vmem:[%s5 + $0x90] sm:$0xff]
    %v4140 = vld [vmem:[%s5 + $0x98] sm:$0xff]
    %v4141 = vld [vmem:[%s5 + $0xa0] sm:$0xff]
    %v4142 = vld [vmem:[%s5 + $0xa8] sm:$0xff]
    %v4143 = vld [vmem:[%s5 + $0xb0] sm:$0xff]
    %v4144 = vld [vmem:[%s5 + $0xb8] sm:$0xff]
    %v4145 = vld [vmem:[%s5 + $0xc0] sm:$0xff]
    %v4146 = vld [vmem:[%s5 + $0xc8] sm:$0xff]
    %v4147 = vld [vmem:[%s5 + $0xd0] sm:$0xff]
    %v4148 = vld [vmem:[%s5 + $0xd8] sm:$0xff]
    %v4149 = vld [vmem:[%s5 + $0xe0] sm:$0xff]
    %v4150 = vld [vmem:[%s5 + $0xe8] sm:$0xff]
    %v4151 = vld [vmem:[%s5 + $0xf0] sm:$0xff]
    %v4152 = vld [vmem:[%s5 + $0xf8] sm:$0xff]
    %v4153 = vld [vmem:[%s5 + $0x100] sm:$0xff]
    %v4154 = vld [vmem:[%s5 + $0x108] sm:$0xff]
    %v4155 = vld [vmem:[%s5 + $0x110] sm:$0xff]
    %v4156 = vld [vmem:[%s5 + $0x118] sm:$0xff]
    %v4157 = vld [vmem:[%s5 + $0x120] sm:$0xff]
    %v4158 = vld [vmem:[%s5 + $0x128] sm:$0xff]
    %v4159 = vld [vmem:[%s5 + $0x130] sm:$0xff]
    %v4160 = vld [vmem:[%s5 + $0x138] sm:$0xff]
    %v4161 = vld [vmem:[%s5 + $0x140] sm:$0xff]
    %v4162 = vld [vmem:[%s5 + $0x148] sm:$0xff]
    %v4163 = vld [vmem:[%s5 + $0x150] sm:$0xff]
    %v4164 = vld [vmem:[%s5 + $0x158] sm:$0xff]
    %v4165 = vld [vmem:[%s5 + $0x160] sm:$0xff]
    %v4166 = vld [vmem:[%s5 + $0x168] sm:$0xff]
    %v4167 = vld [vmem:[%s5 + $0x170] sm:$0xff]
    %v4168 = vld [vmem:[%s5 + $0x178] sm:$0xff]
    %v4169 = vld [vmem:[%s5 + $0x180] sm:$0xff]
    %v4170 = vld [vmem:[%s5 + $0x188] sm:$0xff]
    %v4171 = vld [vmem:[%s5 + $0x190] sm:$0xff]
    %v4172 = vld [vmem:[%s5 + $0x198] sm:$0xff]
    %v4173 = vld [vmem:[%s5 + $0x1a0] sm:$0xff]
    %v4174 = vld [vmem:[%s5 + $0x1a8] sm:$0xff]
    %v4175 = vld [vmem:[%s5 + $0x1b0] sm:$0xff]
    %v4176 = vld [vmem:[%s5 + $0x1b8] sm:$0xff]
    %v4177 = vld [vmem:[%s5 + $0x1c0] sm:$0xff]
    %v4178 = vld [vmem:[%s5 + $0x1c8] sm:$0xff]
    %v4179 = vld [vmem:[%s5 + $0x1d0] sm:$0xff]
    %v4180 = vld [vmem:[%s5 + $0x1d8] sm:$0xff]
    %v4181 = vld [vmem:[%s5 + $0x1e0] sm:$0xff]
    %v4182 = vld [vmem:[%s5 + $0x1e8] sm:$0xff]
    %v4183 = vld [vmem:[%s5 + $0x1f0] sm:$0xff]
    %v4184 = vld [vmem:[%s5 + $0x1f8] sm:$0xff]
    %v4185 = vld [vmem:[%s5 + $0x200] sm:$0xff]
    %v4186 = vld [vmem:[%s5 + $0x208] sm:$0xff]
    %v4187 = vld [vmem:[%s5 + $0x210] sm:$0xff]
    %v4188 = vld [vmem:[%s5 + $0x218] sm:$0xff]
    %v4189 = vld [vmem:[%s5 + $0x220] sm:$0xff]
    %v4190 = vld [vmem:[%s5 + $0x228] sm:$0xff]
    %v4191 = vld [vmem:[%s5 + $0x230] sm:$0xff]
    %v4192 = vld [vmem:[%s5 + $0x238] sm:$0xff]
    %v4193 = vld [vmem:[%s5 + $0x240] sm:$0xff]
    %v4194 = vld [vmem:[%s5 + $0x248] sm:$0xff]
    %v4195 = vld [vmem:[%s5 + $0x250] sm:$0xff]
    %v4196 = vld [vmem:[%s5 + $0x258] sm:$0xff]
    %v4197 = vld [vmem:[%s5 + $0x260] sm:$0xff]
    %v4198 = vld [vmem:[%s5 + $0x268] sm:$0xff]
    %v4199 = vld [vmem:[%s5 + $0x270] sm:$0xff]
    %v4200 = vld [vmem:[%s5 + $0x278] sm:$0xff]
    %v4201 = vld [vmem:[%s5 + $0x280] sm:$0xff]
    %v4202 = vld [vmem:[%s5 + $0x288] sm:$0xff]
    %v4203 = vld [vmem:[%s5 + $0x290] sm:$0xff]
    %v4204 = vld [vmem:[%s5 + $0x298] sm:$0xff]
    %v4205 = vld [vmem:[%s5 + $0x2a0] sm:$0xff]
    %v4206 = vld [vmem:[%s5 + $0x2a8] sm:$0xff]
    %v4207 = vld [vmem:[%s5 + $0x2b0] sm:$0xff]
    %v4208 = vld [vmem:[%s5 + $0x2b8] sm:$0xff]
    %v4209 = vld [vmem:[%s5 + $0x2c0] sm:$0xff]
    %v4210 = vld [vmem:[%s5 + $0x2c8] sm:$0xff]
    %v4211 = vld [vmem:[%s5 + $0x2d0] sm:$0xff]
    %v4212 = vld [vmem:[%s5 + $0x2d8] sm:$0xff]
    %v4213 = vld [vmem:[%s5 + $0x2e0] sm:$0xff]
    %v4214 = vld [vmem:[%s5 + $0x2e8] sm:$0xff]
    %v4215 = vld [vmem:[%s5 + $0x2f0] sm:$0xff]
    %v4216 = vld [vmem:[%s5 + $0x2f8] sm:$0xff]
    %v4217 = vld [vmem:[%s5 + $0x300] sm:$0xff]
    %v4218 = vld [vmem:[%s5 + $0x308] sm:$0xff]
    %v4219 = vld [vmem:[%s5 + $0x310] sm:$0xff]
    %v4220 = vld [vmem:[%s5 + $0x318] sm:$0xff]
    %v4221 = vld [vmem:[%s5 + $0x320] sm:$0xff]
    %v4222 = vld [vmem:[%s5 + $0x328] sm:$0xff]
    %v4223 = vld [vmem:[%s5 + $0x330] sm:$0xff]
    %v4224 = vld [vmem:[%s5 + $0x338] sm:$0xff]
    %v4225 = vld [vmem:[%s5 + $0x340] sm:$0xff]
    %v4226 = vld [vmem:[%s5 + $0x348] sm:$0xff]
    %v4227 = vld [vmem:[%s5 + $0x350] sm:$0xff]
    %v4228 = vld [vmem:[%s5 + $0x358] sm:$0xff]
    %v4229 = vld [vmem:[%s5 + $0x360] sm:$0xff]
    %v4230 = vld [vmem:[%s5 + $0x368] sm:$0xff]
    %v4231 = vld [vmem:[%s5 + $0x370] sm:$0xff]
    %v4232 = vld [vmem:[%s5 + $0x378] sm:$0xff]
    %v4233 = vld [vmem:[%s5 + $0x380] sm:$0xff]
    %v4234 = vld [vmem:[%s5 + $0x388] sm:$0xff]
    %v4235 = vld [vmem:[%s5 + $0x390] sm:$0xff]
    %v4236 = vld [vmem:[%s5 + $0x398] sm:$0xff]
    %v4237 = vld [vmem:[%s5 + $0x3a0] sm:$0xff]
    %v4238 = vld [vmem:[%s5 + $0x3a8] sm:$0xff]
    %v4239 = vld [vmem:[%s5 + $0x3b0] sm:$0xff]
    %v4240 = vld [vmem:[%s5 + $0x3b8] sm:$0xff]
    %v4241 = vld [vmem:[%s5 + $0x3c0] sm:$0xff]
    %v4242 = vld [vmem:[%s5 + $0x3c8] sm:$0xff]
    %v4243 = vld [vmem:[%s5 + $0x3d0] sm:$0xff]
    %v4244 = vld [vmem:[%s5 + $0x3d8] sm:$0xff]
    %v4245 = vld [vmem:[%s5 + $0x3e0] sm:$0xff]
    %v4246 = vld [vmem:[%s5 + $0x3e8] sm:$0xff]
    %v4247 = vld [vmem:[%s5 + $0x3f0] sm:$0xff]
    %v4248 = vld [vmem:[%s5 + $0x3f8] sm:$0xff]
    %v4249 = vld [vmem:[%s6] sm:$0x1]
    %v4251 = vlaneseq
    %v4252 = vshrl.u32 %v4251, 7
    %v4253 = vsub.s32 0, %v4252
    %v4254 = vrot.slane %v4249, %v4253
    %v4258 = vcombine.high %v4119, %v4119
    %v4260 = vunpack.c.l.s4 1983009808
    %v4261 = vunpack.c.0.s8 %v4260
    %v4262 = vlaneseq
    %v4263 = vshrl.u32 %v4262, 7
    %v4264 = vsub.s32 %v4261, %v4263
    %v4265 = vrot.slane %v4119, %v4264
    %v4267 = vunpack.c.l.s4 1983009808
    %v4268 = vunpack.c.0.s8 %v4267
    %v4269 = vlaneseq
    %v4270 = vshrl.u32 %v4269, 7
    %v4271 = vsub.s32 %v4268, %v4270
    %v4272 = vrot.slane %v4258, %v4271
    %v4273 = vcombine.high %v4265, %v4265
    %v4274 = vcombine.high %v4272, %v4272
    %v4275 = vcombine.high %v4120, %v4120
    %v4277 = vunpack.c.l.s4 1983009808
    %v4278 = vunpack.c.0.s8 %v4277
    %v4279 = vlaneseq
    %v4280 = vshrl.u32 %v4279, 7
    %v4281 = vsub.s32 %v4278, %v4280
    %v4282 = vrot.slane %v4120, %v4281
    %v4284 = vunpack.c.l.s4 1983009808
    %v4285 = vunpack.c.0.s8 %v4284
    %v4286 = vlaneseq
    %v4287 = vshrl.u32 %v4286, 7
    %v4288 = vsub.s32 %v4285, %v4287
    %v4289 = vrot.slane %v4275, %v4288
    %v4290 = vcombine.high %v4282, %v4282
    %v4291 = vcombine.high %v4289, %v4289
    %4300 = vmatprep.subr.mxu0 0.0
    %4301 = vmatpush1.msra.mxu0 %v4121
    %4302 = vmatprep.subr.mxu0 0.0
    %4303 = vmatpush1.msra.mxu0 %v4122
    %4304 = vmatprep.subr.mxu0 0.0
    %4305 = vmatpush1.msra.mxu0 %v4123
    %4306 = vmatprep.subr.mxu0 0.0
    %4307 = vmatpush1.msra.mxu0 %v4124
    %4308 = vmatprep.subr.mxu0 0.0
    %4309 = vmatpush1.msra.mxu0 %v4125
    %4310 = vmatprep.subr.mxu0 0.0
    %4311 = vmatpush1.msra.mxu0 %v4126
    %4312 = vmatprep.subr.mxu0 0.0
    %4313 = vmatpush1.msra.mxu0 %v4127
    %4314 = vmatprep.subr.mxu0 0.0
    %4315 = vmatpush1.msra.mxu0 %v4128
    %4316 = vmatprep.subr.mxu0 0.0
    %4317 = vmatpush1.msra.mxu0 %v4129
    %4318 = vmatprep.subr.mxu0 0.0
    %4319 = vmatpush1.msra.mxu0 %v4130
    %4320 = vmatprep.subr.mxu0 0.0
    %4321 = vmatpush1.msra.mxu0 %v4131
    %4322 = vmatprep.subr.mxu0 0.0
    %4323 = vmatpush1.msra.mxu0 %v4132
    %4324 = vmatprep.subr.mxu0 0.0
    %4325 = vmatpush1.msra.mxu0 %v4133
    %4326 = vmatprep.subr.mxu0 0.0
    %4327 = vmatpush1.msra.mxu0 %v4134
    %4328 = vmatprep.subr.mxu0 0.0
    %4329 = vmatpush1.msra.mxu0 %v4135
    %4330 = vmatprep.subr.mxu0 0.0
    %4331 = vmatpush1.msra.mxu0 %v4136
    %4332 = vmatprep.subr.mxu0 0.0
    %4333 = vmatpush1.msra.mxu0 %v4137
    %4334 = vmatprep.subr.mxu0 0.0
    %4335 = vmatpush1.msra.mxu0 %v4138
    %4336 = vmatprep.subr.mxu0 0.0
    %4337 = vmatpush1.msra.mxu0 %v4139
    %4338 = vmatprep.subr.mxu0 0.0
    %4339 = vmatpush1.msra.mxu0 %v4140
    %4340 = vmatprep.subr.mxu0 0.0
    %4341 = vmatpush1.msra.mxu0 %v4141
    %4342 = vmatprep.subr.mxu0 0.0
    %4343 = vmatpush1.msra.mxu0 %v4142
    %4344 = vmatprep.subr.mxu0 0.0
    %4345 = vmatpush1.msra.mxu0 %v4143
    %4346 = vmatprep.subr.mxu0 0.0
    %4347 = vmatpush1.msra.mxu0 %v4144
    %4348 = vmatprep.subr.mxu0 0.0
    %4349 = vmatpush1.msra.mxu0 %v4145
    %4350 = vmatprep.subr.mxu0 0.0
    %4351 = vmatpush1.msra.mxu0 %v4146
    %4352 = vmatprep.subr.mxu0 0.0
    %4353 = vmatpush1.msra.mxu0 %v4147
    %4354 = vmatprep.subr.mxu0 0.0
    %4355 = vmatpush1.msra.mxu0 %v4148
    %4356 = vmatprep.subr.mxu0 0.0
    %4357 = vmatpush1.msra.mxu0 %v4149
    %4358 = vmatprep.subr.mxu0 0.0
    %4359 = vmatpush1.msra.mxu0 %v4150
    %4360 = vmatprep.subr.mxu0 0.0
    %4361 = vmatpush1.msra.mxu0 %v4151
    %4362 = vmatprep.subr.mxu0 0.0
    %4363 = vmatpush1.msra.mxu0 %v4152
    %4364 = vmatprep.mubr.f32.mxu0 %v4273
    %4365 = vmatmul.mubr.f32.gmra.mrb[0].mxu0 %v4265
    %v4366 = vpop.f32.mrb[0].mxu0
    %v4367 = vadd.f32 %v4254, %v4366
    %v4368 = vpop.f32.mrb[0].mxu0
    %4369 = vdwg.mxu0
    %4370 = vmatprep.subr.mxu0 0.0
    %4371 = vmatpush1.msra.mxu0 %v4153
    %4372 = vmatprep.subr.mxu0 0.0
    %4373 = vmatpush1.msra.mxu0 %v4154
    %4374 = vmatprep.subr.mxu0 0.0
    %4375 = vmatpush1.msra.mxu0 %v4155
    %4376 = vmatprep.subr.mxu0 0.0
    %4377 = vmatpush1.msra.mxu0 %v4156
    %4378 = vmatprep.subr.mxu0 0.0
    %4379 = vmatpush1.msra.mxu0 %v4157
    %4380 = vmatprep.subr.mxu0 0.0
    %4381 = vmatpush1.msra.mxu0 %v4158
    %4382 = vmatprep.subr.mxu0 0.0
    %4383 = vmatpush1.msra.mxu0 %v4159
    %4384 = vmatprep.subr.mxu0 0.0
    %4385 = vmatpush1.msra.mxu0 %v4160
    %4386 = vmatprep.subr.mxu0 0.0
    %4387 = vmatpush1.msra.mxu0 %v4161
    %4388 = vmatprep.subr.mxu0 0.0
    %4389 = vmatpush1.msra.mxu0 %v4162
    %4390 = vmatprep.subr.mxu0 0.0
    %4391 = vmatpush1.msra.mxu0 %v4163
    %4392 = vmatprep.subr.mxu0 0.0
    %4393 = vmatpush1.msra.mxu0 %v4164
    %4394 = vmatprep.subr.mxu0 0.0
    %4395 = vmatpush1.msra.mxu0 %v4165
    %4396 = vmatprep.subr.mxu0 0.0
    %4397 = vmatpush1.msra.mxu0 %v4166
    %4398 = vmatprep.subr.mxu0 0.0
    %4399 = vmatpush1.msra.mxu0 %v4167
    %4400 = vmatprep.subr.mxu0 0.0
    %4401 = vmatpush1.msra.mxu0 %v4168
    %4402 = vmatprep.subr.mxu0 0.0
    %4403 = vmatpush1.msra.mxu0 %v4169
    %4404 = vmatprep.subr.mxu0 0.0
    %4405 = vmatpush1.msra.mxu0 %v4170
    %4406 = vmatprep.subr.mxu0 0.0
    %4407 = vmatpush1.msra.mxu0 %v4171
    %4408 = vmatprep.subr.mxu0 0.0
    %4409 = vmatpush1.msra.mxu0 %v4172
    %4410 = vmatprep.subr.mxu0 0.0
    %4411 = vmatpush1.msra.mxu0 %v4173
    %4412 = vmatprep.subr.mxu0 0.0
    %4413 = vmatpush1.msra.mxu0 %v4174
    %4414 = vmatprep.subr.mxu0 0.0
    %4415 = vmatpush1.msra.mxu0 %v4175
    %4416 = vmatprep.subr.mxu0 0.0
    %4417 = vmatpush1.msra.mxu0 %v4176
    %4418 = vmatprep.subr.mxu0 0.0
    %4419 = vmatpush1.msra.mxu0 %v4177
    %4420 = vmatprep.subr.mxu0 0.0
    %4421 = vmatpush1.msra.mxu0 %v4178
    %4422 = vmatprep.subr.mxu0 0.0
    %4423 = vmatpush1.msra.mxu0 %v4179
    %4424 = vmatprep.subr.mxu0 0.0
    %4425 = vmatpush1.msra.mxu0 %v4180
    %4426 = vmatprep.subr.mxu0 0.0
    %4427 = vmatpush1.msra.mxu0 %v4181
    %4428 = vmatprep.subr.mxu0 0.0
    %4429 = vmatpush1.msra.mxu0 %v4182
    %4430 = vmatprep.subr.mxu0 0.0
    %4431 = vmatpush1.msra.mxu0 %v4183
    %4432 = vmatprep.subr.mxu0 0.0
    %4433 = vmatpush1.msra.mxu0 %v4184
    %4434 = vmatprep.mubr.f32.mxu0 %v4274
    %4435 = vmatmul.mubr.f32.gmra.mrb[0].mxu0 %v4272
    %v4436 = vpop.f32.mrb[0].mxu0
    %v4437 = vadd.f32 %v4367, %v4436
    %v4438 = vpop.f32.mrb[0].mxu0
    %4439 = vdwg.mxu0
    %4440 = vmatprep.subr.mxu0 0.0
    %4441 = vmatpush1.msra.mxu0 %v4185
    %4442 = vmatprep.subr.mxu0 0.0
    %4443 = vmatpush1.msra.mxu0 %v4186
    %4444 = vmatprep.subr.mxu0 0.0
    %4445 = vmatpush1.msra.mxu0 %v4187
    %4446 = vmatprep.subr.mxu0 0.0
    %4447 = vmatpush1.msra.mxu0 %v4188
    %4448 = vmatprep.subr.mxu0 0.0
    %4449 = vmatpush1.msra.mxu0 %v4189
    %4450 = vmatprep.subr.mxu0 0.0
    %4451 = vmatpush1.msra.mxu0 %v4190
    %4452 = vmatprep.subr.mxu0 0.0
    %4453 = vmatpush1.msra.mxu0 %v4191
    %4454 = vmatprep.subr.mxu0 0.0
    %4455 = vmatpush1.msra.mxu0 %v4192
    %4456 = vmatprep.subr.mxu0 0.0
    %4457 = vmatpush1.msra.mxu0 %v4193
    %4458 = vmatprep.subr.mxu0 0.0
    %4459 = vmatpush1.msra.mxu0 %v4194
    %4460 = vmatprep.subr.mxu0 0.0
    %4461 = vmatpush1.msra.mxu0 %v4195
    %4462 = vmatprep.subr.mxu0 0.0
    %4463 = vmatpush1.msra.mxu0 %v4196
    %4464 = vmatprep.subr.mxu0 0.0
    %4465 = vmatpush1.msra.mxu0 %v4197
    %4466 = vmatprep.subr.mxu0 0.0
    %4467 = vmatpush1.msra.mxu0 %v4198
    %4468 = vmatprep.subr.mxu0 0.0
    %4469 = vmatpush1.msra.mxu0 %v4199
    %4470 = vmatprep.subr.mxu0 0.0
    %4471 = vmatpush1.msra.mxu0 %v4200
    %4472 = vmatprep.subr.mxu0 0.0
    %4473 = vmatpush1.msra.mxu0 %v4201
    %4474 = vmatprep.subr.mxu0 0.0
    %4475 = vmatpush1.msra.mxu0 %v4202
    %4476 = vmatprep.subr.mxu0 0.0
    %4477 = vmatpush1.msra.mxu0 %v4203
    %4478 = vmatprep.subr.mxu0 0.0
    %4479 = vmatpush1.msra.mxu0 %v4204
    %4480 = vmatprep.subr.mxu0 0.0
    %4481 = vmatpush1.msra.mxu0 %v4205
    %4482 = vmatprep.subr.mxu0 0.0
    %4483 = vmatpush1.msra.mxu0 %v4206
    %4484 = vmatprep.subr.mxu0 0.0
    %4485 = vmatpush1.msra.mxu0 %v4207
    %4486 = vmatprep.subr.mxu0 0.0
    %4487 = vmatpush1.msra.mxu0 %v4208
    %4488 = vmatprep.subr.mxu0 0.0
    %4489 = vmatpush1.msra.mxu0 %v4209
    %4490 = vmatprep.subr.mxu0 0.0
    %4491 = vmatpush1.msra.mxu0 %v4210
    %4492 = vmatprep.subr.mxu0 0.0
    %4493 = vmatpush1.msra.mxu0 %v4211
    %4494 = vmatprep.subr.mxu0 0.0
    %4495 = vmatpush1.msra.mxu0 %v4212
    %4496 = vmatprep.subr.mxu0 0.0
    %4497 = vmatpush1.msra.mxu0 %v4213
    %4498 = vmatprep.subr.mxu0 0.0
    %4499 = vmatpush1.msra.mxu0 %v4214
    %4500 = vmatprep.subr.mxu0 0.0
    %4501 = vmatpush1.msra.mxu0 %v4215
    %4502 = vmatprep.subr.mxu0 0.0
    %4503 = vmatpush1.msra.mxu0 %v4216
    %4504 = vmatprep.mubr.f32.mxu0 %v4290
    %4505 = vmatmul.mubr.f32.gmra.mrb[0].mxu0 %v4282
    %v4506 = vpop.f32.mrb[0].mxu0
    %v4507 = vadd.f32 %v4437, %v4506
    %v4508 = vpop.f32.mrb[0].mxu0
    %4509 = vdwg.mxu0
    %4510 = vmatprep.subr.mxu0 0.0
    %4511 = vmatpush1.msra.mxu0 %v4217
    %4512 = vmatprep.subr.mxu0 0.0
    %4513 = vmatpush1.msra.mxu0 %v4218
    %4514 = vmatprep.subr.mxu0 0.0
    %4515 = vmatpush1.msra.mxu0 %v4219
    %4516 = vmatprep.subr.mxu0 0.0
    %4517 = vmatpush1.msra.mxu0 %v4220
    %4518 = vmatprep.subr.mxu0 0.0
    %4519 = vmatpush1.msra.mxu0 %v4221
    %4520 = vmatprep.subr.mxu0 0.0
    %4521 = vmatpush1.msra.mxu0 %v4222
    %4522 = vmatprep.subr.mxu0 0.0
    %4523 = vmatpush1.msra.mxu0 %v4223
    %4524 = vmatprep.subr.mxu0 0.0
    %4525 = vmatpush1.msra.mxu0 %v4224
    %4526 = vmatprep.subr.mxu0 0.0
    %4527 = vmatpush1.msra.mxu0 %v4225
    %4528 = vmatprep.subr.mxu0 0.0
    %4529 = vmatpush1.msra.mxu0 %v4226
    %4530 = vmatprep.subr.mxu0 0.0
    %4531 = vmatpush1.msra.mxu0 %v4227
    %4532 = vmatprep.subr.mxu0 0.0
    %4533 = vmatpush1.msra.mxu0 %v4228
    %4534 = vmatprep.subr.mxu0 0.0
    %4535 = vmatpush1.msra.mxu0 %v4229
    %4536 = vmatprep.subr.mxu0 0.0
    %4537 = vmatpush1.msra.mxu0 %v4230
    %4538 = vmatprep.subr.mxu0 0.0
    %4539 = vmatpush1.msra.mxu0 %v4231
    %4540 = vmatprep.subr.mxu0 0.0
    %4541 = vmatpush1.msra.mxu0 %v4232
    %4542 = vmatprep.subr.mxu0 0.0
    %4543 = vmatpush1.msra.mxu0 %v4233
    %4544 = vmatprep.subr.mxu0 0.0
    %4545 = vmatpush1.msra.mxu0 %v4234
    %4546 = vmatprep.subr.mxu0 0.0
    %4547 = vmatpush1.msra.mxu0 %v4235
    %4548 = vmatprep.subr.mxu0 0.0
    %4549 = vmatpush1.msra.mxu0 %v4236
    %4550 = vmatprep.subr.mxu0 0.0
    %4551 = vmatpush1.msra.mxu0 %v4237
    %4552 = vmatprep.subr.mxu0 0.0
    %4553 = vmatpush1.msra.mxu0 %v4238
    %4554 = vmatprep.subr.mxu0 0.0
    %4555 = vmatpush1.msra.mxu0 %v4239
    %4556 = vmatprep.subr.mxu0 0.0
    %4557 = vmatpush1.msra.mxu0 %v4240
    %4558 = vmatprep.subr.mxu0 0.0
    %4559 = vmatpush1.msra.mxu0 %v4241
    %4560 = vmatprep.subr.mxu0 0.0
    %4561 = vmatpush1.msra.mxu0 %v4242
    %4562 = vmatprep.subr.mxu0 0.0
    %4563 = vmatpush1.msra.mxu0 %v4243
    %4564 = vmatprep.subr.mxu0 0.0
    %4565 = vmatpush1.msra.mxu0 %v4244
    %4566 = vmatprep.subr.mxu0 0.0
    %4567 = vmatpush1.msra.mxu0 %v4245
    %4568 = vmatprep.subr.mxu0 0.0
    %4569 = vmatpush1.msra.mxu0 %v4246
    %4570 = vmatprep.subr.mxu0 0.0
    %4571 = vmatpush1.msra.mxu0 %v4247
    %4572 = vmatprep.subr.mxu0 0.0
    %4573 = vmatpush1.msra.mxu0 %v4248
    %4574 = vmatprep.mubr.f32.mxu0 %v4291
    %4575 = vmatmul.mubr.f32.gmra.mrb[0].mxu0 %v4289
    %v4576 = vpop.f32.mrb[0].mxu0
    %v4577 = vadd.f32 %v4507, %v4576
    %v4578 = vpop.f32.mrb[0].mxu0
    %4579 = vdwg.mxu0
    %v4580 = vld [vmem:[%s7] sm:$0xff]
    %v4581 = vld [vmem:[%s7 + $0x8] sm:$0xff]
    %v4582 = vld [vmem:[%s7 + $0x10] sm:$0xff]
    %v4583 = vld [vmem:[%s7 + $0x18] sm:$0xff]
    %v4584 = vld [vmem:[%s7 + $0x20] sm:$0xff]
    %v4585 = vld [vmem:[%s7 + $0x28] sm:$0xff]
    %v4586 = vld [vmem:[%s7 + $0x30] sm:$0xff]
    %v4587 = vld [vmem:[%s7 + $0x38] sm:$0xff]
    %v4588 = vld [vmem:[%s7 + $0x40] sm:$0xff]
    %v4589 = vld [vmem:[%s7 + $0x48] sm:$0xff]
    %v4590 = vld [vmem:[%s7 + $0x50] sm:$0xff]
    %v4591 = vld [vmem:[%s7 + $0x58] sm:$0xff]
    %v4592 = vld [vmem:[%s7 + $0x60] sm:$0xff]
    %v4593 = vld [vmem:[%s7 + $0x68] sm:$0xff]
    %v4594 = vld [vmem:[%s7 + $0x70] sm:$0xff]
    %v4595 = vld [vmem:[%s7 + $0x78] sm:$0xff]
    %v4596 = vld [vmem:[%s8] sm:$0x1]
    %v4598 = vlaneseq
    %v4599 = vshrl.u32 %v4598, 7
    %v4600 = vsub.s32 0, %v4599
    %v4601 = vrot.slane %v4596, %v4600
    %4603 = vmatprep.subr.mxu0 0.0
    %4604 = vmatpush1.msra.mxu0 %v4580
    %4605 = vmatprep.subr.mxu0 0.0
    %4606 = vmatpush1.msra.mxu0 %v4581
    %4607 = vmatprep.subr.mxu0 0.0
    %4608 = vmatpush1.msra.mxu0 %v4582
    %4609 = vmatprep.subr.mxu0 0.0
    %4610 = vmatpush1.msra.mxu0 %v4583
    %4611 = vmatprep.subr.mxu0 0.0
    %4612 = vmatpush1.msra.mxu0 %v4584
    %4613 = vmatprep.subr.mxu0 0.0
    %4614 = vmatpush1.msra.mxu0 %v4585
    %4615 = vmatprep.subr.mxu0 0.0
    %4616 = vmatpush1.msra.mxu0 %v4586
    %4617 = vmatprep.subr.mxu0 0.0
    %4618 = vmatpush1.msra.mxu0 %v4587
    %4619 = vmatprep.subr.mxu0 0.0
    %4620 = vmatpush1.msra.mxu0 %v4588
    %4621 = vmatprep.subr.mxu0 0.0
    %4622 = vmatpush1.msra.mxu0 %v4589
    %4623 = vmatprep.subr.mxu0 0.0
    %4624 = vmatpush1.msra.mxu0 %v4590
    %4625 = vmatprep.subr.mxu0 0.0
    %4626 = vmatpush1.msra.mxu0 %v4591
    %4627 = vmatprep.subr.mxu0 0.0
    %4628 = vmatpush1.msra.mxu0 %v4592
    %4629 = vmatprep.subr.mxu0 0.0
    %4630 = vmatpush1.msra.mxu0 %v4593
    %4631 = vmatprep.subr.mxu0 0.0
    %4632 = vmatpush1.msra.mxu0 %v4594
    %4633 = vmatprep.subr.mxu0 0.0
    %4634 = vmatpush1.msra.mxu0 %v4595
    %4635 = vmatprep.subr.mxu0 0.0
    %4636 = vmatpush1.msra.mxu0 0.0
    %4637 = vmatprep.subr.mxu0 0.0
    %4638 = vmatpush1.msra.mxu0 0.0
    %4639 = vmatprep.subr.mxu0 0.0
    %4640 = vmatpush1.msra.mxu0 0.0
    %4641 = vmatprep.subr.mxu0 0.0
    %4642 = vmatpush1.msra.mxu0 0.0
    %4643 = vmatprep.subr.mxu0 0.0
    %4644 = vmatpush1.msra.mxu0 0.0
    %4645 = vmatprep.subr.mxu0 0.0
    %4646 = vmatpush1.msra.mxu0 0.0
    %4647 = vmatprep.subr.mxu0 0.0
    %4648 = vmatpush1.msra.mxu0 0.0
    %4649 = vmatprep.subr.mxu0 0.0
    %4650 = vmatpush1.msra.mxu0 0.0
    %4651 = vmatprep.subr.mxu0 0.0
    %4652 = vmatpush1.msra.mxu0 0.0
    %4653 = vmatprep.subr.mxu0 0.0
    %4654 = vmatpush1.msra.mxu0 0.0
    %4655 = vmatprep.subr.mxu0 0.0
    %4656 = vmatpush1.msra.mxu0 0.0
    %4657 = vmatprep.subr.mxu0 0.0
    %4658 = vmatpush1.msra.mxu0 0.0
    %4659 = vmatprep.subr.mxu0 0.0
    %4660 = vmatpush1.msra.mxu0 0.0
    %4661 = vmatprep.subr.mxu0 0.0
    %4662 = vmatpush1.msra.mxu0 0.0
    %4663 = vmatprep.subr.mxu0 0.0
    %4664 = vmatpush1.msra.mxu0 0.0
    %4665 = vmatprep.subr.mxu0 0.0
    %4666 = vmatpush1.msra.mxu0 0.0
    %4667 = vmatprep.mubr.f32.mxu0 0.0
    %4668 = vmatmul.mubr.f32.gmra.mrb[0].mxu0 %v4577
    %v4669 = vpop.f32.mrb[0].mxu0
    %v4670 = vadd.f32 %v4601, %v4669
    %v4671 = vpop.f32.mrb[0].mxu0
    %4672 = vdwg.mxu0
    %4673 = vst [vmem:[#allocation9] sm:$0x3] %v4670
    // Predicated region
    $region38: #{simple_cnn_forward.1} parent=1 // pred_check
      _
    $region39: #{simple_cnn_forward.1} parent=1 // pred_check_branch
      %4675 = sbr.rel (0) target = $region41
    $region40: #{simple_cnn_forward.1} parent=1 // pred_region
      %s4677 = ssub.s32 32, 32
      %4678 = vsyncadd [#allocation10], %s4677
      %s4680 = sshll.u32 [#allocation9], 4
      %s4681 = int_to_ptr.vmem [resolvable:$true] %s4680
      %4683 = dma.vmem_to_hbm [thread:$0]  %s4681, 32, %s9, [#allocation10]
    $region41: #{simple_cnn_forward.1} parent=1 // pred_fallthru
      _
    // Predicated region
    $region42: #{simple_cnn_forward.1} parent=1 // pred_check
      _
    $region43: #{simple_cnn_forward.1} parent=1 // pred_check_branch
      %4685 = sbr.rel (0) target = $region45
    $region44: #{simple_cnn_forward.1} parent=1 // pred_region
      %4686 = dma.done [#allocation10], 32
    $region45: #{simple_cnn_forward.1} parent=1 // pred_fallthru
      _
    %4687 = vsyncpa [#allocation10], 1

</llo_original>
